<compile_context>
chip_gen: v5e
topology: v5e:2x2
jax: 0.10.0
libtpu: 0.0.40
codegen_flags: <defaults>
</compile_context>

<pallas_src>
import functools

import jax
import jax.numpy as jnp
from jax.experimental import pallas as pl
from jax.experimental.pallas import tpu as pltpu

NEG_SLOPE = 0.2          # LeakyReLU(0.2)
BN_EPS = 1e-5            # nn.BatchNorm2d default eps


# ---------------------------------------------------------------------------
# helpers
# ---------------------------------------------------------------------------
def _round_up(x, m):
    return (x + m - 1) // m * m


def _vmem_limit_bytes():
    """Generation-aware VMEM limit: ~3/4 of physical VMEM, capped at 100 MiB.
    v5e/v6e (128 MiB) -> 96-100 MiB; v7x (64 MiB) -> 48 MiB."""
    try:
        cap = int(pltpu.get_tpu_info().vmem_capacity_bytes)
    except Exception:
        cap = 64 * 1024 * 1024          # conservative (v7x-sized) fallback
    return min(cap * 3 // 4, 100 * 1024 * 1024)


VMEM_LIMIT = _vmem_limit_bytes()
# Budget for one grid step's resident tiles (double-buffered in/out + acc),
# leaving headroom for compiler scratch under VMEM_LIMIT.
TILE_BUDGET = int(VMEM_LIMIT * 0.55)

# Tile caps.  M is kept a multiple of 16 (bf16 sublane packing); K/N multiples
# of 128 lanes.  tn >= 256 preferred to fill the 256-wide v6e/v7x MXU.
TM_CAP = 1024
TK_CAP = 2048
TN_CAP = 512


def _split(extent, unit, cap):
    """Split round_up(extent, unit) into n equal unit-multiple chunks <= cap.
    Returns (tile, n_tiles, padded_extent).  Choosing the chunk as an (almost)
    exact divisor avoids padding a full extra tile of zeros."""
    total_units = _round_up(max(extent, 1), unit) // unit
    cap_units = max(cap // unit, 1)
    n = -(-total_units // cap_units)
    chunk_units = -(-total_units // n)
    return chunk_units * unit, n, chunk_units * unit * n


def _pick_tiles(m, kk, cout, out_bytes):
    """Tile sizes + padded extents, shrunk to fit the VMEM budget."""
    tm_cap, tk_cap, tn_cap = TM_CAP, TK_CAP, TN_CAP
    while True:
        tm, nm, m_pad = _split(m, 16, tm_cap)
        tk, nk, kk_pad = _split(kk, 128, tk_cap)
        tn, nn, cout_pad = _split(cout, 128, tn_cap)
        footprint = (2 * (tm * tk + tk * tn) * 2        # bf16 cols + w, x2 bufs
                     + 2 * tm * tn * out_bytes          # y tile, x2 bufs
                     + tm * tn * 4                      # f32 accumulator
                     + 6 * 8 * tn * 4 + 2 * tn * 4)     # stats / bias blocks
        if footprint <= TILE_BUDGET:
            break
        # shrink K first, then M, then N (keep tn at MXU width as long as we can)
        if tk_cap > 512:
            tk_cap //= 2
        elif tm_cap > 128:
            tm_cap //= 2
        elif tn_cap > 128:
            tn_cap //= 2
        elif tk_cap > 128:
            tk_cap //= 2
        else:
            break
    # v7x has 2 TensorCores/chip: keep >=2 parallel programs when possible so
    # the ("parallel","parallel",...) grid axes feed both cores.
    if nm * nn == 1 and m_pad // 16 >= 2:
        half_units = -(-(m_pad // 16) // 2)
        tm, nm, m_pad = half_units * 16, 2, half_units * 16 * 2
    return tm, tk, tn, nm, nk, nn, m_pad, kk_pad, cout_pad


def _pad2(a, rows, cols):
    return jnp.pad(a, ((0, rows - a.shape[0]), (0, cols - a.shape[1])))


def _im2col_bf16(x_nhwc, k, stride, pad):
    """x: (N,H,W,C) -> bf16 cols (N*OH*OW, k*k*C), flattened (kh, kw, c).
    Built directly in bf16 so only one HBM materialization per layer."""
    x = jnp.pad(x_nhwc.astype(jnp.bfloat16),
                ((0, 0), (pad, pad), (pad, pad), (0, 0)))
    n, hp, wp, c = x.shape
    oh = (hp - k) // stride + 1
    ow = (wp - k) // stride + 1
    cols = []
    for kh in range(k):
        for kw in range(k):
            patch = jax.lax.slice(
                x,
                (0, kh, kw, 0),
                (n, kh + stride * (oh - 1) + 1, kw + stride * (ow - 1) + 1, c),
                (1, stride, stride, 1),
            )  # (N, OH, OW, C)
            cols.append(patch.reshape(n * oh * ow, c))
    return jnp.concatenate(cols, axis=1), n, oh, ow


# ---------------------------------------------------------------------------
# Pallas kernels
# ---------------------------------------------------------------------------
def _mm_bias_act_kernel(x_ref, w_ref, b_ref, o_ref, acc_ref, *, activation):
    """Tiled  y = cols @ w + b  with optional LeakyReLU / Sigmoid epilogue."""
    k = pl.program_id(2)

    @pl.when(k == 0)
    def _():
        acc_ref[...] = jnp.zeros_like(acc_ref)

    acc_ref[...] += jnp.dot(x_ref[...], w_ref[...],
                            preferred_element_type=jnp.float32)

    @pl.when(k == pl.num_programs(2) - 1)
    def _():
        y = acc_ref[...] + b_ref[...]
        if activation == "lrelu":
            y = jnp.where(y >= 0.0, y, NEG_SLOPE * y)
        elif activation == "sigmoid":
            y = jax.nn.sigmoid(y)
        o_ref[...] = y.astype(o_ref.dtype)


def _mm_stats_kernel(x_ref, w_ref, y_ref, sum_ref, ssq_ref, acc_ref):
    """Tiled  y = cols @ w  plus per-(M-tile, N-tile) partial sum / sumsq.
    Stats are computed from the f32 accumulator before the bf16 store."""
    k = pl.program_id(2)

    @pl.when(k == 0)
    def _():
        acc_ref[...] = jnp.zeros_like(acc_ref)

    acc_ref[...] += jnp.dot(x_ref[...], w_ref[...],
                            preferred_element_type=jnp.float32)

    @pl.when(k == pl.num_programs(2) - 1)
    def _():
        y = acc_ref[...]
        y_ref[...] = y.astype(y_ref.dtype)
        # Replicate (partial_sum / 8) over the 8 sublanes of the stats block so
        # a plain jnp.sum over all rows in the wrapper reconstructs the exact
        # per-column partial sums.  (Coupled to the fixed 8-row stats block.)
        s = jnp.sum(y, axis=0, keepdims=True) * 0.125
        q = jnp.sum(y * y, axis=0, keepdims=True) * 0.125
        sum_ref[...] = jnp.broadcast_to(s, sum_ref.shape)
        ssq_ref[...] = jnp.broadcast_to(q, ssq_ref.shape)


def _bn_lrelu_kernel(y_ref, scale_ref, shift_ref, o_ref):
    """Elementwise  y*scale + shift  followed by LeakyReLU (mem-bound, bf16 IO)."""
    y = y_ref[...].astype(jnp.float32) * scale_ref[...] + shift_ref[...]
    o_ref[...] = jnp.where(y >= 0.0, y, NEG_SLOPE * y).astype(o_ref.dtype)


# ---------------------------------------------------------------------------
# pallas_call wrappers
# ---------------------------------------------------------------------------
def _matmul_bias_act(cols, w2, bias, activation, out_dtype):
    m, kk = cols.shape
    cout = w2.shape[1]
    out_bytes = jnp.dtype(out_dtype).itemsize
    tm, tk, tn, nm, nk, nn, m_pad, kk_pad, cout_pad = _pick_tiles(
        m, kk, cout, out_bytes)

    cols_p = _pad2(cols, m_pad, kk_pad)                       # already bf16
    w_p = _pad2(w2.astype(jnp.bfloat16), kk_pad, cout_pad)
    b_p = _pad2(bias.reshape(1, cout).astype(jnp.float32), 1, cout_pad)

    flops = 2 * m_pad * kk_pad * cout_pad
    trans = m_pad * cout_pad if activation == "sigmoid" else 0
    bytes_acc = ((nn * m_pad * kk_pad + nm * kk_pad * cout_pad) * 2
                 + m_pad * cout_pad * out_bytes + cout_pad * 4)

    y = pl.pallas_call(
        functools.partial(_mm_bias_act_kernel, activation=activation),
        out_shape=jax.ShapeDtypeStruct((m_pad, cout_pad), out_dtype),
        grid=(nm, nn, nk),
        in_specs=[
            pl.BlockSpec((tm, tk), lambda i, j, k: (i, k)),
            pl.BlockSpec((tk, tn), lambda i, j, k: (k, j)),
            pl.BlockSpec((1, tn), lambda i, j, k: (0, j)),
        ],
        out_specs=pl.BlockSpec((tm, tn), lambda i, j, k: (i, j)),
        scratch_shapes=[pltpu.VMEM((tm, tn), jnp.float32)],
        compiler_params=pltpu.CompilerParams(
            dimension_semantics=("parallel", "parallel", "arbitrary"),
            vmem_limit_bytes=VMEM_LIMIT),
        cost_estimate=pl.CostEstimate(flops=flops, transcendentals=trans,
                                      bytes_accessed=bytes_acc),
    )(cols_p, w_p, b_p)
    return y[:m, :cout]


def _matmul_bn_lrelu(cols, w2, gamma, beta):
    m, kk = cols.shape
    cout = w2.shape[1]
    tm, tk, tn, nm, nk, nn, m_pad, kk_pad, cout_pad = _pick_tiles(m, kk, cout, 2)

    cols_p = _pad2(cols, m_pad, kk_pad)                       # already bf16
    w_p = _pad2(w2.astype(jnp.bfloat16), kk_pad, cout_pad)

    flops = 2 * m_pad * kk_pad * cout_pad
    bytes_acc = ((nn * m_pad * kk_pad + nm * kk_pad * cout_pad) * 2
                 + m_pad * cout_pad * 2 + 2 * nm * 8 * cout_pad * 4)

    # pass 1: tiled matmul (bf16 y out) + f32 partial batch statistics
    y_pad, psum, pssq = pl.pallas_call(
        _mm_stats_kernel,
        out_shape=(jax.ShapeDtypeStruct((m_pad, cout_pad), jnp.bfloat16),
                   jax.ShapeDtypeStruct((nm * 8, cout_pad), jnp.float32),
                   jax.ShapeDtypeStruct((nm * 8, cout_pad), jnp.float32)),
        grid=(nm, nn, nk),
        in_specs=[
            pl.BlockSpec((tm, tk), lambda i, j, k: (i, k)),
            pl.BlockSpec((tk, tn), lambda i, j, k: (k, j)),
        ],
        out_specs=(
            pl.BlockSpec((tm, tn), lambda i, j, k: (i, j)),
            pl.BlockSpec((8, tn), lambda i, j, k: (i, j)),
            pl.BlockSpec((8, tn), lambda i, j, k: (i, j)),
        ),
        scratch_shapes=[pltpu.VMEM((tm, tn), jnp.float32)],
        compiler_params=pltpu.CompilerParams(
            dimension_semantics=("parallel", "parallel", "arbitrary"),
            vmem_limit_bytes=VMEM_LIMIT),
        cost_estimate=pl.CostEstimate(flops=flops, transcendentals=0,
                                      bytes_accessed=bytes_acc),
    )(cols_p, w_p)

    # global (all m rows) batch statistics; zero-padded rows contribute 0.
    total_sum = jnp.sum(psum, axis=0, keepdims=True)      # (1, cout_pad)
    total_ssq = jnp.sum(pssq, axis=0, keepdims=True)
    mean = total_sum / m
    var = jnp.maximum(total_ssq / m - mean * mean, 0.0)   # biased variance
    inv_std = jax.lax.rsqrt(var + BN_EPS)
    g_p = _pad2(gamma.reshape(1, cout).astype(jnp.float32), 1, cout_pad)
    b_p = _pad2(beta.reshape(1, cout).astype(jnp.float32), 1, cout_pad)
    scale = g_p * inv_std
    shift = b_p - mean * scale

    # pass 2: tiled elementwise normalize + LeakyReLU (bf16 in / bf16 out)
    y = pl.pallas_call(
        _bn_lrelu_kernel,
        out_shape=jax.ShapeDtypeStruct((m_pad, cout_pad), jnp.bfloat16),
        grid=(nm, nn),
        in_specs=[
            pl.BlockSpec((tm, tn), lambda i, j: (i, j)),
            pl.BlockSpec((1, tn), lambda i, j: (0, j)),
            pl.BlockSpec((1, tn), lambda i, j: (0, j)),
        ],
        out_specs=pl.BlockSpec((tm, tn), lambda i, j: (i, j)),
        compiler_params=pltpu.CompilerParams(
            dimension_semantics=("parallel", "parallel"),
            vmem_limit_bytes=VMEM_LIMIT),
        cost_estimate=pl.CostEstimate(
            flops=3 * m_pad * cout_pad, transcendentals=0,
            bytes_accessed=4 * m_pad * cout_pad + 2 * cout_pad * 4),
    )(y_pad, scale, shift)
    return y[:m, :cout]


def _conv_bias(x, w_hwio, b, *, stride, activation, out_dtype):
    k_sz, _, _, cout = w_hwio.shape
    cols, n, oh, ow = _im2col_bf16(x, k_sz, stride, pad=1)
    w2 = w_hwio.reshape(-1, cout)
    y = _matmul_bias_act(cols, w2, b, activation, out_dtype)
    return y.reshape(n, oh, ow, cout)


def _conv_bn_lrelu(x, w_hwio, gamma, beta, *, stride):
    k_sz, _, _, cout = w_hwio.shape
    cols, n, oh, ow = _im2col_bf16(x, k_sz, stride, pad=1)
    w2 = w_hwio.reshape(-1, cout)
    y = _matmul_bn_lrelu(cols, w2, gamma, beta)
    return y.reshape(n, oh, ow, cout)


# ---------------------------------------------------------------------------
# Parameter init (deterministic, mirrors initialize_weights())
# ---------------------------------------------------------------------------
def init_params(key, in_channels, features_d=64, n_layers=3):
    params = {}
    n_keys = 2 * n_layers + 2
    keys = list(jax.random.split(key, n_keys))
    ki = 0

    def normal_w(shape):
        nonlocal ki
        w = 0.02 * jax.random.normal(keys[ki], shape, jnp.float32)
        ki += 1
        return w

    # layer 1: conv(in_channels -> features_d, s=2) + bias
    params["w0"] = normal_w((4, 4, in_channels, features_d))
    params["b0"] = jnp.zeros((features_d,), jnp.float32)

    # middle stride-2 conv + BN + lrelu blocks
    mid_s2 = []
    nf_mult = 1
    for n in range(1, n_layers):
        nf_prev, nf_mult = nf_mult, min(2 ** n, 8)
        cin, cout = features_d * nf_prev, features_d * nf_mult
        w = normal_w((4, 4, cin, cout))
        gamma = 1.0 + 0.02 * jax.random.normal(keys[ki], (cout,), jnp.float32)
        ki += 1
        beta = jnp.zeros((cout,), jnp.float32)
        mid_s2.append((w, gamma, beta))
    params["mid_s2"] = mid_s2

    # stride-1 conv + BN + lrelu
    nf_prev, nf_mult = nf_mult, min(2 ** n_layers, 8)
    cin, cout = features_d * nf_prev, features_d * nf_mult
    w = normal_w((4, 4, cin, cout))
    gamma = 1.0 + 0.02 * jax.random.normal(keys[ki], (cout,), jnp.float32)
    ki += 1
    beta = jnp.zeros((cout,), jnp.float32)
    params["mid_s1"] = (w, gamma, beta)

    # final conv(cout -> 1, s=1) + bias
    params["wf"] = normal_w((4, 4, cout, 1))
    params["bf"] = jnp.zeros((1,), jnp.float32)
    return params


# ---------------------------------------------------------------------------
# Forward pass (PatchGANDiscriminator.forward, training-mode BatchNorm)
# ---------------------------------------------------------------------------
def patchgan_forward(params, input_rgb_nchw, target_ms_nchw, use_sigmoid=False):
    x = jnp.concatenate([input_rgb_nchw, target_ms_nchw], axis=1)   # NCHW cat
    x = jnp.transpose(x, (0, 2, 3, 1)).astype(jnp.float32)          # -> NHWC

    # conv(s=2) + bias + LeakyReLU  (intermediate activations in bf16)
    x = _conv_bias(x, params["w0"], params["b0"], stride=2,
                   activation="lrelu", out_dtype=jnp.bfloat16)
    # [conv(s=2, no bias) + BatchNorm + LeakyReLU] * (n_layers-1)
    for (w, g, b) in params["mid_s2"]:
        x = _conv_bn_lrelu(x, w, g, b, stride=2)
    # conv(s=1, no bias) + BatchNorm + LeakyReLU
    w, g, b = params["mid_s1"]
    x = _conv_bn_lrelu(x, w, g, b, stride=1)
    # final conv(s=1) + bias (+ optional Sigmoid); f32 output, lane-padded
    # Cout is sliced off in the wrapper so stores stay lane-dense.
    x = _conv_bias(x, params["wf"], params["bf"], stride=1,
                   activation="sigmoid" if use_sigmoid else None,
                   out_dtype=jnp.float32)

    return jnp.transpose(x, (0, 3, 1, 2))                           # -> NCHW


if __name__ == "__main__":
    B, H, W = 2, 32, 32
    in_channels, features_d, n_layers = 7, 8, 3   # rgb(3) + multispectral(4)

    key = jax.random.PRNGKey(0)
    k_rgb, k_ms, k_params = jax.random.split(key, 3)
    input_rgb = jax.random.normal(k_rgb, (B, 3, H, W), jnp.float32)
    target_ms = jax.random.normal(k_ms, (B, 4, H, W), jnp.float32)

    params = init_params(k_params, in_channels, features_d, n_layers)

    fwd = jax.jit(functools.partial(patchgan_forward, use_sigmoid=False))
    out = fwd(params, input_rgb, target_ms)
    out = jax.block_until_ready(out)

    # 32 -> 16 -> 8 -> 4 -> 3 -> 2 spatial; single-channel patch logits.
    assert out.shape == (B, 1, 2, 2), out.shape
    assert out.dtype == jnp.float32
    assert bool(jnp.all(jnp.isfinite(out)))
    print("KERNEL_OK")
</pallas_src>

<mosaic_0001>
module attributes {stable_mosaic.version = 11 : i64} {
  func.func @_mm_bias_act_kernel(%arg0: i32, %arg1: i32, %arg2: i32, %arg3: memref<256x128xbf16, #tpu.memory_space<vmem>>, %arg4: memref<128x128xbf16, #tpu.memory_space<vmem>>, %arg5: memref<1x128xf32, #tpu.memory_space<vmem>>, %arg6: memref<256x128xbf16, #tpu.memory_space<vmem>>, %arg7: memref<256x128xf32, #tpu.memory_space<vmem>>) attributes {dimension_semantics = [#tpu.dimension_semantics<parallel>, #tpu.dimension_semantics<parallel>, #tpu.dimension_semantics<arbitrary>], iteration_bounds = array<i64: 2, 1, 1>, scalar_prefetch = 0 : i64, scratch_operands = 1 : i64, tpu.core_type = #tpu.core_type<tc>, window_params = [{transform_indices = @transform_0, window_bounds = array<i64: 256, 128>}, {transform_indices = @transform_1, window_bounds = array<i64: 128, 128>}, {transform_indices = @transform_2, window_bounds = array<i64: 1, 128>}, {transform_indices = @transform_3, window_bounds = array<i64: 256, 128>}]} {
    %c0_i32 = arith.constant 0 : i32
    %0 = arith.cmpi eq, %arg2, %c0_i32 : i32
    %1 = arith.extui %0 : i1 to i32
    %c0_i32_0 = arith.constant 0 : i32
    %2 = arith.cmpi ne, %1, %c0_i32_0 : i32
    scf.if %2 {
      %cst_10 = arith.constant 0.000000e+00 : f32
      %12 = vector.broadcast %cst_10 : f32 to vector<256x128xf32>
      %c0_11 = arith.constant 0 : index
      %c0_12 = arith.constant 0 : index
      %13 = vector.load %arg7[%c0_11, %c0_12] : memref<256x128xf32, #tpu.memory_space<vmem>>, vector<256x128xf32>
      tpu.vector_store %arg7[%c0_11, %c0_12], %12 {strides = array<i32>} : memref<256x128xf32, #tpu.memory_space<vmem>>, vector<256x128xf32>,
    } else {
    }
    %c0 = arith.constant 0 : index
    %c0_1 = arith.constant 0 : index
    %3 = vector.load %arg7[%c0, %c0_1] : memref<256x128xf32, #tpu.memory_space<vmem>>, vector<256x128xf32>
    %c0_2 = arith.constant 0 : index
    %c0_3 = arith.constant 0 : index
    %4 = vector.load %arg3[%c0_2, %c0_3] : memref<256x128xbf16, #tpu.memory_space<vmem>>, vector<256x128xbf16>
    %c0_4 = arith.constant 0 : index
    %c0_5 = arith.constant 0 : index
    %5 = vector.load %arg4[%c0_4, %c0_5] : memref<128x128xbf16, #tpu.memory_space<vmem>>, vector<128x128xbf16>
    %cst = arith.constant dense<0.000000e+00> : vector<256x128xf32>
    %6 = tpu.matmul %4, %5, %cst {dimension_numbers = #tpu.dot_dimension_numbers<[1], [0], [0], [1], [0, 0, 1, 1], [], []>} : vector<256x128xbf16>, vector<128x128xbf16>, vector<256x128xf32> -> vector<256x128xf32>
    %7 = arith.addf %3, %6 : vector<256x128xf32>
    %c0_6 = arith.constant 0 : index
    %c0_7 = arith.constant 0 : index
    %8 = vector.load %arg7[%c0_6, %c0_7] : memref<256x128xf32, #tpu.memory_space<vmem>>, vector<256x128xf32>
    tpu.vector_store %arg7[%c0_6, %c0_7], %7 {strides = array<i32>} : memref<256x128xf32, #tpu.memory_space<vmem>>, vector<256x128xf32>,
    %c0_i32_8 = arith.constant 0 : i32
    %9 = arith.cmpi eq, %arg2, %c0_i32_8 : i32
    %10 = arith.extui %9 : i1 to i32
    %c0_i32_9 = arith.constant 0 : i32
    %11 = arith.cmpi ne, %10, %c0_i32_9 : i32
    scf.if %11 {
      %c0_10 = arith.constant 0 : index
      %c0_11 = arith.constant 0 : index
      %12 = vector.load %arg7[%c0_10, %c0_11] : memref<256x128xf32, #tpu.memory_space<vmem>>, vector<256x128xf32>
      %c0_12 = arith.constant 0 : index
      %c0_13 = arith.constant 0 : index
      %13 = vector.load %arg5[%c0_12, %c0_13] : memref<1x128xf32, #tpu.memory_space<vmem>>, vector<1x128xf32>
      %14 = vector.broadcast %13 : vector<1x128xf32> to vector<256x128xf32>
      %15 = arith.addf %12, %14 : vector<256x128xf32>
      %cst_14 = arith.constant 0.000000e+00 : f32
      %16 = vector.broadcast %cst_14 : f32 to vector<256x128xf32>
      %17 = arith.cmpf oge, %15, %16 : vector<256x128xf32>
      %cst_15 = arith.constant 2.000000e-01 : f32
      %18 = vector.broadcast %cst_15 : f32 to vector<256x128xf32>
      %19 = arith.mulf %18, %15 : vector<256x128xf32>
      %20 = arith.select %17, %15, %19 : vector<256x128xi1>, vector<256x128xf32>
      %21 = arith.truncf %20 : vector<256x128xf32> to vector<256x128xbf16>
      %c0_16 = arith.constant 0 : index
      %c0_17 = arith.constant 0 : index
      %22 = vector.load %arg6[%c0_16, %c0_17] : memref<256x128xbf16, #tpu.memory_space<vmem>>, vector<256x128xbf16>
      tpu.vector_store %arg6[%c0_16, %c0_17], %21 {strides = array<i32>} : memref<256x128xbf16, #tpu.memory_space<vmem>>, vector<256x128xbf16>,
    } else {
    }
    return
  }
  func.func @transform_0(%arg0: i32, %arg1: i32, %arg2: i32) -> (i32, i32) {
    %c0_i32 = arith.constant 0 : i32
    return %arg0, %arg2 : i32, i32
  }
  func.func @transform_1(%arg0: i32, %arg1: i32, %arg2: i32) -> (i32, i32) {
    %c0_i32 = arith.constant 0 : i32
    return %arg2, %arg1 : i32, i32
  }
  func.func @transform_2(%arg0: i32, %arg1: i32, %arg2: i32) -> (i32, i32) {
    %c0_i32 = arith.constant 0 : i32
    %c0_i32_0 = arith.constant 0 : i32
    return %c0_i32, %arg1 : i32, i32
  }
  func.func @transform_3(%arg0: i32, %arg1: i32, %arg2: i32) -> (i32, i32) {
    %c0_i32 = arith.constant 0 : i32
    return %arg0, %arg1 : i32, i32
  }
}

module attributes {stable_mosaic.version = 11 : i64} {
  func.func @_mm_stats_kernel(%arg0: i32, %arg1: i32, %arg2: i32, %arg3: memref<64x128xbf16, #tpu.memory_space<vmem>>, %arg4: memref<128x128xbf16, #tpu.memory_space<vmem>>, %arg5: memref<64x128xbf16, #tpu.memory_space<vmem>>, %arg6: memref<8x128xf32, #tpu.memory_space<vmem>>, %arg7: memref<8x128xf32, #tpu.memory_space<vmem>>, %arg8: memref<64x128xf32, #tpu.memory_space<vmem>>) attributes {dimension_semantics = [#tpu.dimension_semantics<parallel>, #tpu.dimension_semantics<parallel>, #tpu.dimension_semantics<arbitrary>], iteration_bounds = array<i64: 2, 1, 1>, scalar_prefetch = 0 : i64, scratch_operands = 1 : i64, tpu.core_type = #tpu.core_type<tc>, window_params = [{transform_indices = @transform_0, window_bounds = array<i64: 64, 128>}, {transform_indices = @transform_1, window_bounds = array<i64: 128, 128>}, {transform_indices = @transform_2, window_bounds = array<i64: 64, 128>}, {transform_indices = @transform_3, window_bounds = array<i64: 8, 128>}, {transform_indices = @transform_4, window_bounds = array<i64: 8, 128>}]} {
    %c0_i32 = arith.constant 0 : i32
    %0 = arith.cmpi eq, %arg2, %c0_i32 : i32
    %1 = arith.extui %0 : i1 to i32
    %c0_i32_0 = arith.constant 0 : i32
    %2 = arith.cmpi ne, %1, %c0_i32_0 : i32
    scf.if %2 {
      %cst_10 = arith.constant 0.000000e+00 : f32
      %12 = vector.broadcast %cst_10 : f32 to vector<64x128xf32>
      %c0_11 = arith.constant 0 : index
      %c0_12 = arith.constant 0 : index
      %13 = vector.load %arg8[%c0_11, %c0_12] : memref<64x128xf32, #tpu.memory_space<vmem>>, vector<64x128xf32>
      tpu.vector_store %arg8[%c0_11, %c0_12], %12 {strides = array<i32>} : memref<64x128xf32, #tpu.memory_space<vmem>>, vector<64x128xf32>,
    } else {
    }
    %c0 = arith.constant 0 : index
    %c0_1 = arith.constant 0 : index
    %3 = vector.load %arg8[%c0, %c0_1] : memref<64x128xf32, #tpu.memory_space<vmem>>, vector<64x128xf32>
    %c0_2 = arith.constant 0 : index
    %c0_3 = arith.constant 0 : index
    %4 = vector.load %arg3[%c0_2, %c0_3] : memref<64x128xbf16, #tpu.memory_space<vmem>>, vector<64x128xbf16>
    %c0_4 = arith.constant 0 : index
    %c0_5 = arith.constant 0 : index
    %5 = vector.load %arg4[%c0_4, %c0_5] : memref<128x128xbf16, #tpu.memory_space<vmem>>, vector<128x128xbf16>
    %cst = arith.constant dense<0.000000e+00> : vector<64x128xf32>
    %6 = tpu.matmul %4, %5, %cst {dimension_numbers = #tpu.dot_dimension_numbers<[1], [0], [0], [1], [0, 0, 1, 1], [], []>} : vector<64x128xbf16>, vector<128x128xbf16>, vector<64x128xf32> -> vector<64x128xf32>
    %7 = arith.addf %3, %6 : vector<64x128xf32>
    %c0_6 = arith.constant 0 : index
    %c0_7 = arith.constant 0 : index
    %8 = vector.load %arg8[%c0_6, %c0_7] : memref<64x128xf32, #tpu.memory_space<vmem>>, vector<64x128xf32>
    tpu.vector_store %arg8[%c0_6, %c0_7], %7 {strides = array<i32>} : memref<64x128xf32, #tpu.memory_space<vmem>>, vector<64x128xf32>,
    %c0_i32_8 = arith.constant 0 : i32
    %9 = arith.cmpi eq, %arg2, %c0_i32_8 : i32
    %10 = arith.extui %9 : i1 to i32
    %c0_i32_9 = arith.constant 0 : i32
    %11 = arith.cmpi ne, %10, %c0_i32_9 : i32
    scf.if %11 {
      %c0_10 = arith.constant 0 : index
      %c0_11 = arith.constant 0 : index
      %12 = vector.load %arg8[%c0_10, %c0_11] : memref<64x128xf32, #tpu.memory_space<vmem>>, vector<64x128xf32>
      %13 = arith.truncf %12 : vector<64x128xf32> to vector<64x128xbf16>
      %c0_12 = arith.constant 0 : index
      %c0_13 = arith.constant 0 : index
      %14 = vector.load %arg5[%c0_12, %c0_13] : memref<64x128xbf16, #tpu.memory_space<vmem>>, vector<64x128xbf16>
      tpu.vector_store %arg5[%c0_12, %c0_13], %13 {strides = array<i32>} : memref<64x128xbf16, #tpu.memory_space<vmem>>, vector<64x128xbf16>,
      %cst_14 = arith.constant dense<0.000000e+00> : vector<128xf32>
      %15 = vector.multi_reduction <add>, %12, %cst_14 [0] : vector<64x128xf32> to vector<128xf32>
      %16 = vector.shape_cast %15 : vector<128xf32> to vector<1x128xf32>
      %cst_15 = arith.constant 1.250000e-01 : f32
      %17 = vector.broadcast %cst_15 : f32 to vector<1x128xf32>
      %18 = arith.mulf %16, %17 : vector<1x128xf32>
      %19 = arith.mulf %12, %12 : vector<64x128xf32>
      %cst_16 = arith.constant dense<0.000000e+00> : vector<128xf32>
      %20 = vector.multi_reduction <add>, %19, %cst_16 [0] : vector<64x128xf32> to vector<128xf32>
      %21 = vector.shape_cast %20 : vector<128xf32> to vector<1x128xf32>
      %cst_17 = arith.constant 1.250000e-01 : f32
      %22 = vector.broadcast %cst_17 : f32 to vector<1x128xf32>
      %23 = arith.mulf %21, %22 : vector<1x128xf32>
      %24 = vector.shape_cast %18 : vector<1x128xf32> to vector<1x128xf32>
      %25 = vector.broadcast %24 : vector<1x128xf32> to vector<8x128xf32>
      %c0_18 = arith.constant 0 : index
      %c0_19 = arith.constant 0 : index
      %26 = vector.load %arg6[%c0_18, %c0_19] : memref<8x128xf32, #tpu.memory_space<vmem>>, vector<8x128xf32>
      tpu.vector_store %arg6[%c0_18, %c0_19], %25 {strides = array<i32>} : memref<8x128xf32, #tpu.memory_space<vmem>>, vector<8x128xf32>,
      %27 = vector.shape_cast %23 : vector<1x128xf32> to vector<1x128xf32>
      %28 = vector.broadcast %27 : vector<1x128xf32> to vector<8x128xf32>
      %c0_20 = arith.constant 0 : index
      %c0_21 = arith.constant 0 : index
      %29 = vector.load %arg7[%c0_20, %c0_21] : memref<8x128xf32, #tpu.memory_space<vmem>>, vector<8x128xf32>
      tpu.vector_store %arg7[%c0_20, %c0_21], %28 {strides = array<i32>} : memref<8x128xf32, #tpu.memory_space<vmem>>, vector<8x128xf32>,
    } else {
    }
    return
  }
  func.func @transform_0(%arg0: i32, %arg1: i32, %arg2: i32) -> (i32, i32) {
    %c0_i32 = arith.constant 0 : i32
    return %arg0, %arg2 : i32, i32
  }
  func.func @transform_1(%arg0: i32, %arg1: i32, %arg2: i32) -> (i32, i32) {
    %c0_i32 = arith.constant 0 : i32
    return %arg2, %arg1 : i32, i32
  }
  func.func @transform_2(%arg0: i32, %arg1: i32, %arg2: i32) -> (i32, i32) {
    %c0_i32 = arith.constant 0 : i32
    return %arg0, %arg1 : i32, i32
  }
  func.func @transform_3(%arg0: i32, %arg1: i32, %arg2: i32) -> (i32, i32) {
    %c0_i32 = arith.constant 0 : i32
    return %arg0, %arg1 : i32, i32
  }
  func.func @transform_4(%arg0: i32, %arg1: i32, %arg2: i32) -> (i32, i32) {
    %c0_i32 = arith.constant 0 : i32
    return %arg0, %arg1 : i32, i32
  }
}

module attributes {stable_mosaic.version = 11 : i64} {
  func.func @_bn_lrelu_kernel(%arg0: i32, %arg1: i32, %arg2: memref<64x128xbf16, #tpu.memory_space<vmem>>, %arg3: memref<1x128xf32, #tpu.memory_space<vmem>>, %arg4: memref<1x128xf32, #tpu.memory_space<vmem>>, %arg5: memref<64x128xbf16, #tpu.memory_space<vmem>>) attributes {dimension_semantics = [#tpu.dimension_semantics<parallel>, #tpu.dimension_semantics<parallel>], iteration_bounds = array<i64: 2, 1>, scalar_prefetch = 0 : i64, scratch_operands = 0 : i64, tpu.core_type = #tpu.core_type<tc>, window_params = [{transform_indices = @transform_0, window_bounds = array<i64: 64, 128>}, {transform_indices = @transform_1, window_bounds = array<i64: 1, 128>}, {transform_indices = @transform_2, window_bounds = array<i64: 1, 128>}, {transform_indices = @transform_3, window_bounds = array<i64: 64, 128>}]} {
    %c0 = arith.constant 0 : index
    %c0_0 = arith.constant 0 : index
    %0 = vector.load %arg2[%c0, %c0_0] : memref<64x128xbf16, #tpu.memory_space<vmem>>, vector<64x128xbf16>
    %1 = arith.extf %0 : vector<64x128xbf16> to vector<64x128xf32>
    %c0_1 = arith.constant 0 : index
    %c0_2 = arith.constant 0 : index
    %2 = vector.load %arg3[%c0_1, %c0_2] : memref<1x128xf32, #tpu.memory_space<vmem>>, vector<1x128xf32>
    %3 = vector.broadcast %2 : vector<1x128xf32> to vector<64x128xf32>
    %4 = arith.mulf %1, %3 : vector<64x128xf32>
    %c0_3 = arith.constant 0 : index
    %c0_4 = arith.constant 0 : index
    %5 = vector.load %arg4[%c0_3, %c0_4] : memref<1x128xf32, #tpu.memory_space<vmem>>, vector<1x128xf32>
    %6 = vector.broadcast %5 : vector<1x128xf32> to vector<64x128xf32>
    %7 = arith.addf %4, %6 : vector<64x128xf32>
    %cst = arith.constant 0.000000e+00 : f32
    %8 = vector.broadcast %cst : f32 to vector<64x128xf32>
    %9 = arith.cmpf oge, %7, %8 : vector<64x128xf32>
    %cst_5 = arith.constant 2.000000e-01 : f32
    %10 = vector.broadcast %cst_5 : f32 to vector<64x128xf32>
    %11 = arith.mulf %10, %7 : vector<64x128xf32>
    %12 = arith.select %9, %7, %11 : vector<64x128xi1>, vector<64x128xf32>
    %13 = arith.truncf %12 : vector<64x128xf32> to vector<64x128xbf16>
    %c0_6 = arith.constant 0 : index
    %c0_7 = arith.constant 0 : index
    %14 = vector.load %arg5[%c0_6, %c0_7] : memref<64x128xbf16, #tpu.memory_space<vmem>>, vector<64x128xbf16>
    tpu.vector_store %arg5[%c0_6, %c0_7], %13 {strides = array<i32>} : memref<64x128xbf16, #tpu.memory_space<vmem>>, vector<64x128xbf16>,
    return
  }
  func.func @transform_0(%arg0: i32, %arg1: i32) -> (i32, i32) {
    %c0_i32 = arith.constant 0 : i32
    return %arg0, %arg1 : i32, i32
  }
  func.func @transform_1(%arg0: i32, %arg1: i32) -> (i32, i32) {
    %c0_i32 = arith.constant 0 : i32
    %c0_i32_0 = arith.constant 0 : i32
    return %c0_i32, %arg1 : i32, i32
  }
  func.func @transform_2(%arg0: i32, %arg1: i32) -> (i32, i32) {
    %c0_i32 = arith.constant 0 : i32
    %c0_i32_0 = arith.constant 0 : i32
    return %c0_i32, %arg1 : i32, i32
  }
  func.func @transform_3(%arg0: i32, %arg1: i32) -> (i32, i32) {
    %c0_i32 = arith.constant 0 : i32
    return %arg0, %arg1 : i32, i32
  }
}

module attributes {stable_mosaic.version = 11 : i64} {
  func.func @_bn_lrelu_kernel(%arg0: i32, %arg1: i32, %arg2: memref<16x128xbf16, #tpu.memory_space<vmem>>, %arg3: memref<1x128xf32, #tpu.memory_space<vmem>>, %arg4: memref<1x128xf32, #tpu.memory_space<vmem>>, %arg5: memref<16x128xbf16, #tpu.memory_space<vmem>>) attributes {dimension_semantics = [#tpu.dimension_semantics<parallel>, #tpu.dimension_semantics<parallel>], iteration_bounds = array<i64: 2, 1>, scalar_prefetch = 0 : i64, scratch_operands = 0 : i64, tpu.core_type = #tpu.core_type<tc>, window_params = [{transform_indices = @transform_0, window_bounds = array<i64: 16, 128>}, {transform_indices = @transform_1, window_bounds = array<i64: 1, 128>}, {transform_indices = @transform_2, window_bounds = array<i64: 1, 128>}, {transform_indices = @transform_3, window_bounds = array<i64: 16, 128>}]} {
    %c0 = arith.constant 0 : index
    %c0_0 = arith.constant 0 : index
    %0 = vector.load %arg2[%c0, %c0_0] : memref<16x128xbf16, #tpu.memory_space<vmem>>, vector<16x128xbf16>
    %1 = arith.extf %0 : vector<16x128xbf16> to vector<16x128xf32>
    %c0_1 = arith.constant 0 : index
    %c0_2 = arith.constant 0 : index
    %2 = vector.load %arg3[%c0_1, %c0_2] : memref<1x128xf32, #tpu.memory_space<vmem>>, vector<1x128xf32>
    %3 = vector.broadcast %2 : vector<1x128xf32> to vector<16x128xf32>
    %4 = arith.mulf %1, %3 : vector<16x128xf32>
    %c0_3 = arith.constant 0 : index
    %c0_4 = arith.constant 0 : index
    %5 = vector.load %arg4[%c0_3, %c0_4] : memref<1x128xf32, #tpu.memory_space<vmem>>, vector<1x128xf32>
    %6 = vector.broadcast %5 : vector<1x128xf32> to vector<16x128xf32>
    %7 = arith.addf %4, %6 : vector<16x128xf32>
    %cst = arith.constant 0.000000e+00 : f32
    %8 = vector.broadcast %cst : f32 to vector<16x128xf32>
    %9 = arith.cmpf oge, %7, %8 : vector<16x128xf32>
    %cst_5 = arith.constant 2.000000e-01 : f32
    %10 = vector.broadcast %cst_5 : f32 to vector<16x128xf32>
    %11 = arith.mulf %10, %7 : vector<16x128xf32>
    %12 = arith.select %9, %7, %11 : vector<16x128xi1>, vector<16x128xf32>
    %13 = arith.truncf %12 : vector<16x128xf32> to vector<16x128xbf16>
    %c0_6 = arith.constant 0 : index
    %c0_7 = arith.constant 0 : index
    %14 = vector.load %arg5[%c0_6, %c0_7] : memref<16x128xbf16, #tpu.memory_space<vmem>>, vector<16x128xbf16>
    tpu.vector_store %arg5[%c0_6, %c0_7], %13 {strides = array<i32>} : memref<16x128xbf16, #tpu.memory_space<vmem>>, vector<16x128xbf16>,
    return
  }
  func.func @transform_0(%arg0: i32, %arg1: i32) -> (i32, i32) {
    %c0_i32 = arith.constant 0 : i32
    return %arg0, %arg1 : i32, i32
  }
  func.func @transform_1(%arg0: i32, %arg1: i32) -> (i32, i32) {
    %c0_i32 = arith.constant 0 : i32
    %c0_i32_0 = arith.constant 0 : i32
    return %c0_i32, %arg1 : i32, i32
  }
  func.func @transform_2(%arg0: i32, %arg1: i32) -> (i32, i32) {
    %c0_i32 = arith.constant 0 : i32
    %c0_i32_0 = arith.constant 0 : i32
    return %c0_i32, %arg1 : i32, i32
  }
  func.func @transform_3(%arg0: i32, %arg1: i32) -> (i32, i32) {
    %c0_i32 = arith.constant 0 : i32
    return %arg0, %arg1 : i32, i32
  }
}

module attributes {stable_mosaic.version = 11 : i64} {
  func.func @_mm_stats_kernel(%arg0: i32, %arg1: i32, %arg2: i32, %arg3: memref<16x256xbf16, #tpu.memory_space<vmem>>, %arg4: memref<256x128xbf16, #tpu.memory_space<vmem>>, %arg5: memref<16x128xbf16, #tpu.memory_space<vmem>>, %arg6: memref<8x128xf32, #tpu.memory_space<vmem>>, %arg7: memref<8x128xf32, #tpu.memory_space<vmem>>, %arg8: memref<16x128xf32, #tpu.memory_space<vmem>>) attributes {dimension_semantics = [#tpu.dimension_semantics<parallel>, #tpu.dimension_semantics<parallel>, #tpu.dimension_semantics<arbitrary>], iteration_bounds = array<i64: 2, 1, 1>, scalar_prefetch = 0 : i64, scratch_operands = 1 : i64, tpu.core_type = #tpu.core_type<tc>, window_params = [{transform_indices = @transform_0, window_bounds = array<i64: 16, 256>}, {transform_indices = @transform_1, window_bounds = array<i64: 256, 128>}, {transform_indices = @transform_2, window_bounds = array<i64: 16, 128>}, {transform_indices = @transform_3, window_bounds = array<i64: 8, 128>}, {transform_indices = @transform_4, window_bounds = array<i64: 8, 128>}]} {
    %c0_i32 = arith.constant 0 : i32
    %0 = arith.cmpi eq, %arg2, %c0_i32 : i32
    %1 = arith.extui %0 : i1 to i32
    %c0_i32_0 = arith.constant 0 : i32
    %2 = arith.cmpi ne, %1, %c0_i32_0 : i32
    scf.if %2 {
      %cst_10 = arith.constant 0.000000e+00 : f32
      %12 = vector.broadcast %cst_10 : f32 to vector<16x128xf32>
      %c0_11 = arith.constant 0 : index
      %c0_12 = arith.constant 0 : index
      %13 = vector.load %arg8[%c0_11, %c0_12] : memref<16x128xf32, #tpu.memory_space<vmem>>, vector<16x128xf32>
      tpu.vector_store %arg8[%c0_11, %c0_12], %12 {strides = array<i32>} : memref<16x128xf32, #tpu.memory_space<vmem>>, vector<16x128xf32>,
    } else {
    }
    %c0 = arith.constant 0 : index
    %c0_1 = arith.constant 0 : index
    %3 = vector.load %arg8[%c0, %c0_1] : memref<16x128xf32, #tpu.memory_space<vmem>>, vector<16x128xf32>
    %c0_2 = arith.constant 0 : index
    %c0_3 = arith.constant 0 : index
    %4 = vector.load %arg3[%c0_2, %c0_3] : memref<16x256xbf16, #tpu.memory_space<vmem>>, vector<16x256xbf16>
    %c0_4 = arith.constant 0 : index
    %c0_5 = arith.constant 0 : index
    %5 = vector.load %arg4[%c0_4, %c0_5] : memref<256x128xbf16, #tpu.memory_space<vmem>>, vector<256x128xbf16>
    %cst = arith.constant dense<0.000000e+00> : vector<16x128xf32>
    %6 = tpu.matmul %4, %5, %cst {dimension_numbers = #tpu.dot_dimension_numbers<[1], [0], [0], [1], [0, 0, 1, 1], [], []>} : vector<16x256xbf16>, vector<256x128xbf16>, vector<16x128xf32> -> vector<16x128xf32>
    %7 = arith.addf %3, %6 : vector<16x128xf32>
    %c0_6 = arith.constant 0 : index
    %c0_7 = arith.constant 0 : index
    %8 = vector.load %arg8[%c0_6, %c0_7] : memref<16x128xf32, #tpu.memory_space<vmem>>, vector<16x128xf32>
    tpu.vector_store %arg8[%c0_6, %c0_7], %7 {strides = array<i32>} : memref<16x128xf32, #tpu.memory_space<vmem>>, vector<16x128xf32>,
    %c0_i32_8 = arith.constant 0 : i32
    %9 = arith.cmpi eq, %arg2, %c0_i32_8 : i32
    %10 = arith.extui %9 : i1 to i32
    %c0_i32_9 = arith.constant 0 : i32
    %11 = arith.cmpi ne, %10, %c0_i32_9 : i32
    scf.if %11 {
      %c0_10 = arith.constant 0 : index
      %c0_11 = arith.constant 0 : index
      %12 = vector.load %arg8[%c0_10, %c0_11] : memref<16x128xf32, #tpu.memory_space<vmem>>, vector<16x128xf32>
      %13 = arith.truncf %12 : vector<16x128xf32> to vector<16x128xbf16>
      %c0_12 = arith.constant 0 : index
      %c0_13 = arith.constant 0 : index
      %14 = vector.load %arg5[%c0_12, %c0_13] : memref<16x128xbf16, #tpu.memory_space<vmem>>, vector<16x128xbf16>
      tpu.vector_store %arg5[%c0_12, %c0_13], %13 {strides = array<i32>} : memref<16x128xbf16, #tpu.memory_space<vmem>>, vector<16x128xbf16>,
      %cst_14 = arith.constant dense<0.000000e+00> : vector<128xf32>
      %15 = vector.multi_reduction <add>, %12, %cst_14 [0] : vector<16x128xf32> to vector<128xf32>
      %16 = vector.shape_cast %15 : vector<128xf32> to vector<1x128xf32>
      %cst_15 = arith.constant 1.250000e-01 : f32
      %17 = vector.broadcast %cst_15 : f32 to vector<1x128xf32>
      %18 = arith.mulf %16, %17 : vector<1x128xf32>
      %19 = arith.mulf %12, %12 : vector<16x128xf32>
      %cst_16 = arith.constant dense<0.000000e+00> : vector<128xf32>
      %20 = vector.multi_reduction <add>, %19, %cst_16 [0] : vector<16x128xf32> to vector<128xf32>
      %21 = vector.shape_cast %20 : vector<128xf32> to vector<1x128xf32>
      %cst_17 = arith.constant 1.250000e-01 : f32
      %22 = vector.broadcast %cst_17 : f32 to vector<1x128xf32>
      %23 = arith.mulf %21, %22 : vector<1x128xf32>
      %24 = vector.shape_cast %18 : vector<1x128xf32> to vector<1x128xf32>
      %25 = vector.broadcast %24 : vector<1x128xf32> to vector<8x128xf32>
      %c0_18 = arith.constant 0 : index
      %c0_19 = arith.constant 0 : index
      %26 = vector.load %arg6[%c0_18, %c0_19] : memref<8x128xf32, #tpu.memory_space<vmem>>, vector<8x128xf32>
      tpu.vector_store %arg6[%c0_18, %c0_19], %25 {strides = array<i32>} : memref<8x128xf32, #tpu.memory_space<vmem>>, vector<8x128xf32>,
      %27 = vector.shape_cast %23 : vector<1x128xf32> to vector<1x128xf32>
      %28 = vector.broadcast %27 : vector<1x128xf32> to vector<8x128xf32>
      %c0_20 = arith.constant 0 : index
      %c0_21 = arith.constant 0 : index
      %29 = vector.load %arg7[%c0_20, %c0_21] : memref<8x128xf32, #tpu.memory_space<vmem>>, vector<8x128xf32>
      tpu.vector_store %arg7[%c0_20, %c0_21], %28 {strides = array<i32>} : memref<8x128xf32, #tpu.memory_space<vmem>>, vector<8x128xf32>,
    } else {
    }
    return
  }
  func.func @transform_0(%arg0: i32, %arg1: i32, %arg2: i32) -> (i32, i32) {
    %c0_i32 = arith.constant 0 : i32
    return %arg0, %arg2 : i32, i32
  }
  func.func @transform_1(%arg0: i32, %arg1: i32, %arg2: i32) -> (i32, i32) {
    %c0_i32 = arith.constant 0 : i32
    return %arg2, %arg1 : i32, i32
  }
  func.func @transform_2(%arg0: i32, %arg1: i32, %arg2: i32) -> (i32, i32) {
    %c0_i32 = arith.constant 0 : i32
    return %arg0, %arg1 : i32, i32
  }
  func.func @transform_3(%arg0: i32, %arg1: i32, %arg2: i32) -> (i32, i32) {
    %c0_i32 = arith.constant 0 : i32
    return %arg0, %arg1 : i32, i32
  }
  func.func @transform_4(%arg0: i32, %arg1: i32, %arg2: i32) -> (i32, i32) {
    %c0_i32 = arith.constant 0 : i32
    return %arg0, %arg1 : i32, i32
  }
}

module attributes {stable_mosaic.version = 11 : i64} {
  func.func @_mm_stats_kernel(%arg0: i32, %arg1: i32, %arg2: i32, %arg3: memref<16x512xbf16, #tpu.memory_space<vmem>>, %arg4: memref<512x128xbf16, #tpu.memory_space<vmem>>, %arg5: memref<16x128xbf16, #tpu.memory_space<vmem>>, %arg6: memref<8x128xf32, #tpu.memory_space<vmem>>, %arg7: memref<8x128xf32, #tpu.memory_space<vmem>>, %arg8: memref<16x128xf32, #tpu.memory_space<vmem>>) attributes {dimension_semantics = [#tpu.dimension_semantics<parallel>, #tpu.dimension_semantics<parallel>, #tpu.dimension_semantics<arbitrary>], iteration_bounds = array<i64: 2, 1, 1>, scalar_prefetch = 0 : i64, scratch_operands = 1 : i64, tpu.core_type = #tpu.core_type<tc>, window_params = [{transform_indices = @transform_0, window_bounds = array<i64: 16, 512>}, {transform_indices = @transform_1, window_bounds = array<i64: 512, 128>}, {transform_indices = @transform_2, window_bounds = array<i64: 16, 128>}, {transform_indices = @transform_3, window_bounds = array<i64: 8, 128>}, {transform_indices = @transform_4, window_bounds = array<i64: 8, 128>}]} {
    %c0_i32 = arith.constant 0 : i32
    %0 = arith.cmpi eq, %arg2, %c0_i32 : i32
    %1 = arith.extui %0 : i1 to i32
    %c0_i32_0 = arith.constant 0 : i32
    %2 = arith.cmpi ne, %1, %c0_i32_0 : i32
    scf.if %2 {
      %cst_10 = arith.constant 0.000000e+00 : f32
      %12 = vector.broadcast %cst_10 : f32 to vector<16x128xf32>
      %c0_11 = arith.constant 0 : index
      %c0_12 = arith.constant 0 : index
      %13 = vector.load %arg8[%c0_11, %c0_12] : memref<16x128xf32, #tpu.memory_space<vmem>>, vector<16x128xf32>
      tpu.vector_store %arg8[%c0_11, %c0_12], %12 {strides = array<i32>} : memref<16x128xf32, #tpu.memory_space<vmem>>, vector<16x128xf32>,
    } else {
    }
    %c0 = arith.constant 0 : index
    %c0_1 = arith.constant 0 : index
    %3 = vector.load %arg8[%c0, %c0_1] : memref<16x128xf32, #tpu.memory_space<vmem>>, vector<16x128xf32>
    %c0_2 = arith.constant 0 : index
    %c0_3 = arith.constant 0 : index
    %4 = vector.load %arg3[%c0_2, %c0_3] : memref<16x512xbf16, #tpu.memory_space<vmem>>, vector<16x512xbf16>
    %c0_4 = arith.constant 0 : index
    %c0_5 = arith.constant 0 : index
    %5 = vector.load %arg4[%c0_4, %c0_5] : memref<512x128xbf16, #tpu.memory_space<vmem>>, vector<512x128xbf16>
    %cst = arith.constant dense<0.000000e+00> : vector<16x128xf32>
    %6 = tpu.matmul %4, %5, %cst {dimension_numbers = #tpu.dot_dimension_numbers<[1], [0], [0], [1], [0, 0, 1, 1], [], []>} : vector<16x512xbf16>, vector<512x128xbf16>, vector<16x128xf32> -> vector<16x128xf32>
    %7 = arith.addf %3, %6 : vector<16x128xf32>
    %c0_6 = arith.constant 0 : index
    %c0_7 = arith.constant 0 : index
    %8 = vector.load %arg8[%c0_6, %c0_7] : memref<16x128xf32, #tpu.memory_space<vmem>>, vector<16x128xf32>
    tpu.vector_store %arg8[%c0_6, %c0_7], %7 {strides = array<i32>} : memref<16x128xf32, #tpu.memory_space<vmem>>, vector<16x128xf32>,
    %c0_i32_8 = arith.constant 0 : i32
    %9 = arith.cmpi eq, %arg2, %c0_i32_8 : i32
    %10 = arith.extui %9 : i1 to i32
    %c0_i32_9 = arith.constant 0 : i32
    %11 = arith.cmpi ne, %10, %c0_i32_9 : i32
    scf.if %11 {
      %c0_10 = arith.constant 0 : index
      %c0_11 = arith.constant 0 : index
      %12 = vector.load %arg8[%c0_10, %c0_11] : memref<16x128xf32, #tpu.memory_space<vmem>>, vector<16x128xf32>
      %13 = arith.truncf %12 : vector<16x128xf32> to vector<16x128xbf16>
      %c0_12 = arith.constant 0 : index
      %c0_13 = arith.constant 0 : index
      %14 = vector.load %arg5[%c0_12, %c0_13] : memref<16x128xbf16, #tpu.memory_space<vmem>>, vector<16x128xbf16>
      tpu.vector_store %arg5[%c0_12, %c0_13], %13 {strides = array<i32>} : memref<16x128xbf16, #tpu.memory_space<vmem>>, vector<16x128xbf16>,
      %cst_14 = arith.constant dense<0.000000e+00> : vector<128xf32>
      %15 = vector.multi_reduction <add>, %12, %cst_14 [0] : vector<16x128xf32> to vector<128xf32>
      %16 = vector.shape_cast %15 : vector<128xf32> to vector<1x128xf32>
      %cst_15 = arith.constant 1.250000e-01 : f32
      %17 = vector.broadcast %cst_15 : f32 to vector<1x128xf32>
      %18 = arith.mulf %16, %17 : vector<1x128xf32>
      %19 = arith.mulf %12, %12 : vector<16x128xf32>
      %cst_16 = arith.constant dense<0.000000e+00> : vector<128xf32>
      %20 = vector.multi_reduction <add>, %19, %cst_16 [0] : vector<16x128xf32> to vector<128xf32>
      %21 = vector.shape_cast %20 : vector<128xf32> to vector<1x128xf32>
      %cst_17 = arith.constant 1.250000e-01 : f32
      %22 = vector.broadcast %cst_17 : f32 to vector<1x128xf32>
      %23 = arith.mulf %21, %22 : vector<1x128xf32>
      %24 = vector.shape_cast %18 : vector<1x128xf32> to vector<1x128xf32>
      %25 = vector.broadcast %24 : vector<1x128xf32> to vector<8x128xf32>
      %c0_18 = arith.constant 0 : index
      %c0_19 = arith.constant 0 : index
      %26 = vector.load %arg6[%c0_18, %c0_19] : memref<8x128xf32, #tpu.memory_space<vmem>>, vector<8x128xf32>
      tpu.vector_store %arg6[%c0_18, %c0_19], %25 {strides = array<i32>} : memref<8x128xf32, #tpu.memory_space<vmem>>, vector<8x128xf32>,
      %27 = vector.shape_cast %23 : vector<1x128xf32> to vector<1x128xf32>
      %28 = vector.broadcast %27 : vector<1x128xf32> to vector<8x128xf32>
      %c0_20 = arith.constant 0 : index
      %c0_21 = arith.constant 0 : index
      %29 = vector.load %arg7[%c0_20, %c0_21] : memref<8x128xf32, #tpu.memory_space<vmem>>, vector<8x128xf32>
      tpu.vector_store %arg7[%c0_20, %c0_21], %28 {strides = array<i32>} : memref<8x128xf32, #tpu.memory_space<vmem>>, vector<8x128xf32>,
    } else {
    }
    return
  }
  func.func @transform_0(%arg0: i32, %arg1: i32, %arg2: i32) -> (i32, i32) {
    %c0_i32 = arith.constant 0 : i32
    return %arg0, %arg2 : i32, i32
  }
  func.func @transform_1(%arg0: i32, %arg1: i32, %arg2: i32) -> (i32, i32) {
    %c0_i32 = arith.constant 0 : i32
    return %arg2, %arg1 : i32, i32
  }
  func.func @transform_2(%arg0: i32, %arg1: i32, %arg2: i32) -> (i32, i32) {
    %c0_i32 = arith.constant 0 : i32
    return %arg0, %arg1 : i32, i32
  }
  func.func @transform_3(%arg0: i32, %arg1: i32, %arg2: i32) -> (i32, i32) {
    %c0_i32 = arith.constant 0 : i32
    return %arg0, %arg1 : i32, i32
  }
  func.func @transform_4(%arg0: i32, %arg1: i32, %arg2: i32) -> (i32, i32) {
    %c0_i32 = arith.constant 0 : i32
    return %arg0, %arg1 : i32, i32
  }
}

module attributes {stable_mosaic.version = 11 : i64} {
  func.func @_mm_bias_act_kernel(%arg0: i32, %arg1: i32, %arg2: i32, %arg3: memref<16x1024xbf16, #tpu.memory_space<vmem>>, %arg4: memref<1024x128xbf16, #tpu.memory_space<vmem>>, %arg5: memref<1x128xf32, #tpu.memory_space<vmem>>, %arg6: memref<16x128xf32, #tpu.memory_space<vmem>>, %arg7: memref<16x128xf32, #tpu.memory_space<vmem>>) attributes {dimension_semantics = [#tpu.dimension_semantics<parallel>, #tpu.dimension_semantics<parallel>, #tpu.dimension_semantics<arbitrary>], iteration_bounds = array<i64: 1, 1, 1>, scalar_prefetch = 0 : i64, scratch_operands = 1 : i64, tpu.core_type = #tpu.core_type<tc>, window_params = [{transform_indices = @transform_0, window_bounds = array<i64: 16, 1024>}, {transform_indices = @transform_1, window_bounds = array<i64: 1024, 128>}, {transform_indices = @transform_2, window_bounds = array<i64: 1, 128>}, {transform_indices = @transform_3, window_bounds = array<i64: 16, 128>}]} {
    %c0_i32 = arith.constant 0 : i32
    %0 = arith.cmpi eq, %arg2, %c0_i32 : i32
    %1 = arith.extui %0 : i1 to i32
    %c0_i32_0 = arith.constant 0 : i32
    %2 = arith.cmpi ne, %1, %c0_i32_0 : i32
    scf.if %2 {
      %cst_10 = arith.constant 0.000000e+00 : f32
      %12 = vector.broadcast %cst_10 : f32 to vector<16x128xf32>
      %c0_11 = arith.constant 0 : index
      %c0_12 = arith.constant 0 : index
      %13 = vector.load %arg7[%c0_11, %c0_12] : memref<16x128xf32, #tpu.memory_space<vmem>>, vector<16x128xf32>
      tpu.vector_store %arg7[%c0_11, %c0_12], %12 {strides = array<i32>} : memref<16x128xf32, #tpu.memory_space<vmem>>, vector<16x128xf32>,
    } else {
    }
    %c0 = arith.constant 0 : index
    %c0_1 = arith.constant 0 : index
    %3 = vector.load %arg7[%c0, %c0_1] : memref<16x128xf32, #tpu.memory_space<vmem>>, vector<16x128xf32>
    %c0_2 = arith.constant 0 : index
    %c0_3 = arith.constant 0 : index
    %4 = vector.load %arg3[%c0_2, %c0_3] : memref<16x1024xbf16, #tpu.memory_space<vmem>>, vector<16x1024xbf16>
    %c0_4 = arith.constant 0 : index
    %c0_5 = arith.constant 0 : index
    %5 = vector.load %arg4[%c0_4, %c0_5] : memref<1024x128xbf16, #tpu.memory_space<vmem>>, vector<1024x128xbf16>
    %cst = arith.constant dense<0.000000e+00> : vector<16x128xf32>
    %6 = tpu.matmul %4, %5, %cst {dimension_numbers = #tpu.dot_dimension_numbers<[1], [0], [0], [1], [0, 0, 1, 1], [], []>} : vector<16x1024xbf16>, vector<1024x128xbf16>, vector<16x128xf32> -> vector<16x128xf32>
    %7 = arith.addf %3, %6 : vector<16x128xf32>
    %c0_6 = arith.constant 0 : index
    %c0_7 = arith.constant 0 : index
    %8 = vector.load %arg7[%c0_6, %c0_7] : memref<16x128xf32, #tpu.memory_space<vmem>>, vector<16x128xf32>
    tpu.vector_store %arg7[%c0_6, %c0_7], %7 {strides = array<i32>} : memref<16x128xf32, #tpu.memory_space<vmem>>, vector<16x128xf32>,
    %c0_i32_8 = arith.constant 0 : i32
    %9 = arith.cmpi eq, %arg2, %c0_i32_8 : i32
    %10 = arith.extui %9 : i1 to i32
    %c0_i32_9 = arith.constant 0 : i32
    %11 = arith.cmpi ne, %10, %c0_i32_9 : i32
    scf.if %11 {
      %c0_10 = arith.constant 0 : index
      %c0_11 = arith.constant 0 : index
      %12 = vector.load %arg7[%c0_10, %c0_11] : memref<16x128xf32, #tpu.memory_space<vmem>>, vector<16x128xf32>
      %c0_12 = arith.constant 0 : index
      %c0_13 = arith.constant 0 : index
      %13 = vector.load %arg5[%c0_12, %c0_13] : memref<1x128xf32, #tpu.memory_space<vmem>>, vector<1x128xf32>
      %14 = vector.broadcast %13 : vector<1x128xf32> to vector<16x128xf32>
      %15 = arith.addf %12, %14 : vector<16x128xf32>
      %c0_14 = arith.constant 0 : index
      %c0_15 = arith.constant 0 : index
      %16 = vector.load %arg6[%c0_14, %c0_15] : memref<16x128xf32, #tpu.memory_space<vmem>>, vector<16x128xf32>
      tpu.vector_store %arg6[%c0_14, %c0_15], %15 {strides = array<i32>} : memref<16x128xf32, #tpu.memory_space<vmem>>, vector<16x128xf32>,
    } else {
    }
    return
  }
  func.func @transform_0(%arg0: i32, %arg1: i32, %arg2: i32) -> (i32, i32) {
    %c0_i32 = arith.constant 0 : i32
    return %arg0, %arg2 : i32, i32
  }
  func.func @transform_1(%arg0: i32, %arg1: i32, %arg2: i32) -> (i32, i32) {
    %c0_i32 = arith.constant 0 : i32
    return %arg2, %arg1 : i32, i32
  }
  func.func @transform_2(%arg0: i32, %arg1: i32, %arg2: i32) -> (i32, i32) {
    %c0_i32 = arith.constant 0 : i32
    %c0_i32_0 = arith.constant 0 : i32
    return %c0_i32, %arg1 : i32, i32
  }
  func.func @transform_3(%arg0: i32, %arg1: i32, %arg2: i32) -> (i32, i32) {
    %c0_i32 = arith.constant 0 : i32
    return %arg0, %arg1 : i32, i32
  }
}

</mosaic_0001>

<llo_original>
// kernel: patchgan_forward.8
$region0: #{patchgan_forward.8}
  #allocation0 [shape = 'u32[]', space=smem, size = 0x4, offset = 0x4, fixed_abs, tag = 'smem constant byte address 0x4 - core index']
  #allocation1 [shape = 'u32[72,128]{1,0:T(1,128)}', space=vmem, size = 0x9000, scoped, tag = 'internal scratch']
  #allocation2 [shape = 'f32[256,128]{1,0:T(8,128)}', space=vmem, size = 0x20000, scoped, tag = 'scratch operand']
  %s0 = inlined_call_operand.vmem [shape: bf16[512,128], index: 0, kind: input, shape index: {}]
  %s1 = inlined_call_operand.vmem [shape: bf16[128,128], index: 1, kind: input, shape index: {}]
  %s2 = inlined_call_operand.vmem [shape: f32[1,128], index: 2, kind: input, shape index: {}]
  %s3 = inlined_call_operand.vmem [shape: bf16[512,128], index: 3, kind: output, shape index: {}]
  %s4 = sld [smem:[#allocation0]]
  $region53: #{patchgan_forward.8} parent=0
    _
  %s6 = ssub.s32 1, %s4
  %s7 = scalar_select 0, %s6, %s4
  loop: start=0, step=1, limit=4
  $region2: #{patchgan_forward.8} parent=0 // loop_pre_header
    _
  $region3: #{patchgan_forward.8} parent=0 // loop_header
    %s9 = sphi 0, %s13
    %p10 = scmp.ge.s32.totalorder %s9, 4
    %s16 = sphi 0, %s35
    %s17 = sphi 0, %s31
    %s18 = sphi 0, %s27
    %s19 = sphi 0, %s16
    %s20 = sphi 0, %s17
    %s21 = sphi 0, %s18
    %s22 = sphi 0, %s19
    %s23 = sphi 0, %s20
    %s24 = sphi 0, %s21
    %s40 = sphi 0, %s42
    %s43 = sphi 0, %s40
    %s44 = sphi 0, %s43
    %s60 = sphi 0, %s44
    %s68 = sphi 0, %s70
    %s71 = sphi 0, %s68
    %s72 = sphi 0, %s71
    %s88 = sphi 0, %s72
    %s94 = sphi 0, %s96
    %s97 = sphi 0, %s94
    %s98 = sphi 0, %s97
    %s114 = sphi 0, %s98
    %s122 = sphi 0, %s124
    %s125 = sphi 0, %s122
    %s126 = sphi 0, %s125
    %s142 = sphi 0, %s126
  $region4: #{patchgan_forward.8} parent=0 // loop_header_branch
    %12 = sbr.rel (%p10) target = $region8
  $region5: #{patchgan_forward.8} parent=0 // loop_body
    %s14 = ssub.s32 %s9, 1
    %s15 = ssub.s32 %s9, 2
    %s25 = sadd.s32 1, %s18
    %p26 = scmp.ge.s32.totalorder %s25, 1
    %s27 = scalar_select %p26, 0, %s25
    %s28 = sadd.s32 1, %s17
    %s29 = scalar_select %p26, %s28, %s17
    %p30 = scmp.ge.s32.totalorder %s29, 1
    %s31 = scalar_select %p30, 0, %s29
    %s32 = sadd.s32 1, %s16
    %s33 = scalar_select %p30, %s32, %s16
    %p34 = scmp.ge.s32.totalorder %s33, 2
    %s35 = scalar_select %p34, 0, %s33
    %s36 = ssub.s32 %s16, %s35
    %s37 = ssub.s32 %s18, %s27
    %s38 = sor.u32 %s36, %s37
    %p39 = scmp.eq.s32.totalorder %s38, 0
    %s41 = sadd.s32 %s40, 1
    %s42 = scalar_select %p39, %s40, %s41
    %p45 = pneg %p39
    %p46 = scmp.eq.s32.totalorder %s9, 1
    %p47 = por %p45, %p46
    %p48 = scmp.ne.s32.totalorder %s40, %s43
    %p49 = scmp.eq.s32.totalorder %s9, 0
    %p50 = por %p48, %p49
    %p51 = scmp.ne.s32.totalorder %s40, %s43
    %p52 = scmp.eq.s32.totalorder %s14, 1
    %p53 = por %p51, %p52
    %p54 = scmp.ne.s32.totalorder %s43, %s44
    %p55 = scmp.eq.s32.totalorder %s14, 0
    %p56 = por %p54, %p55
    %p57 = scmp.ne.s32.totalorder %s43, %s44
    %p58 = scmp.eq.s32.totalorder %s15, 1
    %p59 = por %p57, %p58
    %p61 = scmp.ne.s32.totalorder %s44, %s60
    %p62 = scmp.eq.s32.totalorder %s15, 0
    %p63 = por %p61, %p62
    %s64 = ssub.s32 %s18, %s27
    %s65 = ssub.s32 %s17, %s31
    %s66 = sor.u32 %s64, %s65
    %p67 = scmp.eq.s32.totalorder %s66, 0
    %s69 = sadd.s32 %s68, 1
    %s70 = scalar_select %p67, %s68, %s69
    %p73 = pneg %p67
    %p74 = scmp.eq.s32.totalorder %s9, 1
    %p75 = por %p73, %p74
    %p76 = scmp.ne.s32.totalorder %s68, %s71
    %p77 = scmp.eq.s32.totalorder %s9, 0
    %p78 = por %p76, %p77
    %p79 = scmp.ne.s32.totalorder %s68, %s71
    %p80 = scmp.eq.s32.totalorder %s14, 1
    %p81 = por %p79, %p80
    %p82 = scmp.ne.s32.totalorder %s71, %s72
    %p83 = scmp.eq.s32.totalorder %s14, 0
    %p84 = por %p82, %p83
    %p85 = scmp.ne.s32.totalorder %s71, %s72
    %p86 = scmp.eq.s32.totalorder %s15, 1
    %p87 = por %p85, %p86
    %p89 = scmp.ne.s32.totalorder %s72, %s88
    %p90 = scmp.eq.s32.totalorder %s15, 0
    %p91 = por %p89, %p90
    %s92 = ssub.s32 %s17, %s31
    %p93 = scmp.eq.s32.totalorder %s92, 0
    %s95 = sadd.s32 %s94, 1
    %s96 = scalar_select %p93, %s94, %s95
    %p99 = pneg %p93
    %p100 = scmp.eq.s32.totalorder %s9, 1
    %p101 = por %p99, %p100
    %p102 = scmp.ne.s32.totalorder %s94, %s97
    %p103 = scmp.eq.s32.totalorder %s9, 0
    %p104 = por %p102, %p103
    %p105 = scmp.ne.s32.totalorder %s94, %s97
    %p106 = scmp.eq.s32.totalorder %s14, 1
    %p107 = por %p105, %p106
    %p108 = scmp.ne.s32.totalorder %s97, %s98
    %p109 = scmp.eq.s32.totalorder %s14, 0
    %p110 = por %p108, %p109
    %p111 = scmp.ne.s32.totalorder %s97, %s98
    %p112 = scmp.eq.s32.totalorder %s15, 1
    %p113 = por %p111, %p112
    %p115 = scmp.ne.s32.totalorder %s98, %s114
    %p116 = scmp.eq.s32.totalorder %s15, 0
    %p117 = por %p115, %p116
    %s118 = ssub.s32 %s16, %s35
    %s119 = ssub.s32 %s17, %s31
    %s120 = sor.u32 %s118, %s119
    %p121 = scmp.eq.s32.totalorder %s120, 0
    %s123 = sadd.s32 %s122, 1
    %s124 = scalar_select %p121, %s122, %s123
    %p127 = pneg %p121
    %p128 = scmp.eq.s32.totalorder %s9, 1
    %p129 = por %p127, %p128
    %p130 = scmp.ne.s32.totalorder %s122, %s125
    %p131 = scmp.eq.s32.totalorder %s9, 0
    %p132 = por %p130, %p131
    %p133 = scmp.ne.s32.totalorder %s122, %s125
    %p134 = scmp.eq.s32.totalorder %s14, 1
    %p135 = por %p133, %p134
    %p136 = scmp.ne.s32.totalorder %s125, %s126
    %p137 = scmp.eq.s32.totalorder %s14, 0
    %p138 = por %p136, %p137
    %p139 = scmp.ne.s32.totalorder %s125, %s126
    %p140 = scmp.eq.s32.totalorder %s15, 1
    %p141 = por %p139, %p140
    %p143 = scmp.ne.s32.totalorder %s126, %s142
    %p144 = scmp.eq.s32.totalorder %s15, 0
    %p145 = por %p143, %p144
    %p146 = scmp.le.s32.totalorder 1, %s9
    %p147 = scmp.lt.s32.totalorder %s9, 3
    %p148 = pnand %p146, %p147
    %p149 = pneg %p148
    // Predicated region
    $region9: #{patchgan_forward.8} parent=5 // pred_check
      _
    $region10: #{patchgan_forward.8} parent=5 // pred_check_branch
      %151 = sbr.rel (%p148) target = $region12
    $region11: #{patchgan_forward.8} parent=5 // pred_region
      %s152 = ssub.s32 %s9, 1
      // Predicated region
      $region13: #{patchgan_forward.8} parent=11 // pred_check
        %p153 = pneg %p84
      $region14: #{patchgan_forward.8} parent=11 // pred_check_branch
        %155 = sbr.rel (%p153) target = $region16
      $region15: #{patchgan_forward.8} parent=11 // pred_region
        %s156 = smul.u32 16, %s21
        %p157 = scmp.lt.s32.totalorder %s156, 15
        %s158 = scalar_select %p157, %s156, 15
        %p159 = scmp.lt.s32.totalorder %s20, 0
        %s160 = scalar_select %p159, %s20, 0
        %s161 = sadd.s32 %s160, %s158
        %s162 = smul.addr %s161, 4
        %s163 = scalar_lea.vmem %s1, %s162
        %s164 = smul.u32 16, %s21
      $region16: #{patchgan_forward.8} parent=11 // pred_fallthru
        _
      // Predicated region
      $region17: #{patchgan_forward.8} parent=11 // pred_check
        %p165 = pneg %p110
      $region18: #{patchgan_forward.8} parent=11 // pred_check_branch
        %167 = sbr.rel (%p165) target = $region20
      $region19: #{patchgan_forward.8} parent=11 // pred_region
        %p168 = scmp.lt.s32.totalorder %s20, 0
        %s169 = scalar_select %p168, %s20, 0
        %s170 = scalar_lea.vmem %s2, %s169
      $region20: #{patchgan_forward.8} parent=11 // pred_fallthru
        _
    $region12: #{patchgan_forward.8} parent=5 // pred_fallthru
      _
    %p171 = scmp.lt.s32.totalorder %s9, 2
    // Predicated region
    $region21: #{patchgan_forward.8} parent=5 // pred_check
      %p172 = pneg %p171
    $region22: #{patchgan_forward.8} parent=5 // pred_check_branch
      %174 = sbr.rel (%p172) target = $region24
    $region23: #{patchgan_forward.8} parent=5 // pred_region
      // Predicated region
      $region25: #{patchgan_forward.8} parent=23 // pred_check
        %p175 = pneg %p50
      $region26: #{patchgan_forward.8} parent=23 // pred_check_branch
        %177 = sbr.rel (%p175) target = $region28
      $region27: #{patchgan_forward.8} parent=23 // pred_region
        %s178 = smul.u32 32, %s16
        %p179 = scmp.lt.s32.totalorder %s178, 63
        %s180 = scalar_select %p179, %s178, 63
        %p181 = scmp.lt.s32.totalorder %s18, 0
        %s182 = scalar_select %p181, %s18, 0
        %s183 = sadd.s32 %s182, %s180
        %s184 = smul.addr %s183, 4
        %s185 = scalar_lea.vmem %s0, %s184
        %s186 = smul.u32 32, %s16
      $region28: #{patchgan_forward.8} parent=23 // pred_fallthru
        _
    $region24: #{patchgan_forward.8} parent=5 // pred_fallthru
      _
    %p187 = scmp.le.s32.totalorder 1, %s9
    %p188 = scmp.lt.s32.totalorder %s9, 3
    %p189 = pnand %p187, %p188
    %p190 = pneg %p189
    // Predicated region
    $region29: #{patchgan_forward.8} parent=5 // pred_check
      _
    $region30: #{patchgan_forward.8} parent=5 // pred_check_branch
      %192 = sbr.rel (%p189) target = $region32
    $region31: #{patchgan_forward.8} parent=5 // pred_region
      %s193 = ssub.s32 %s9, 1
      %s194 = smul.u32 32, %s19
      %p195 = scmp.lt.s32.totalorder %s194, 63
      %s196 = scalar_select %p195, %s194, 63
      %p197 = scmp.lt.s32.totalorder %s21, 0
      %s198 = scalar_select %p197, %s21, 0
      %s199 = sadd.s32 %s198, %s196
      %s200 = smul.addr %s199, 4
      %s201 = scalar_lea.vmem %s0, %s200
      %p202 = pneg %p56
      %p203 = pneg %p53
      %s204 = smul.u32 16, %s21
      %p205 = scmp.lt.s32.totalorder %s204, 15
      %s206 = scalar_select %p205, %s204, 15
      %p207 = scmp.lt.s32.totalorder %s20, 0
      %s208 = scalar_select %p207, %s20, 0
      %s209 = sadd.s32 %s208, %s206
      %s210 = smul.addr %s209, 4
      %s211 = scalar_lea.vmem %s1, %s210
      %p212 = pneg %p84
      %p213 = pneg %p81
      %p214 = scmp.lt.s32.totalorder %s20, 0
      %s215 = scalar_select %p214, %s20, 0
      %s216 = scalar_lea.vmem %s2, %s215
      %p217 = pneg %p110
      %p218 = pneg %p107
      %p219 = pneg %p138
      %p220 = pneg %p135
      %s221 = smul.u32 32, %s19
      %p222 = scmp.lt.s32.totalorder %s221, 63
      %s223 = scalar_select %p222, %s221, 63
      %p224 = scmp.lt.s32.totalorder %s20, 0
      %s225 = scalar_select %p224, %s20, 0
      %s226 = sadd.s32 %s225, %s223
      %s227 = smul.addr %s226, 4
      %s228 = scalar_lea.vmem %s3, %s227
      %s229 = smul.u32 32, %s19
      %p230 = scmp.lt.s32.totalorder %s229, 63
      %s231 = scalar_select %p230, %s229, 63
      %p232 = scmp.lt.s32.totalorder %s21, 0
      %s233 = scalar_select %p232, %s21, 0
      %s234 = sadd.s32 %s233, %s231
      %s235 = smul.addr %s234, 4
      %s236 = scalar_lea.vmem %s0, %s235
      %s237 = smul.u32 32, %s19
      %s238 = smul.u32 16, %s21
      %p239 = scmp.lt.s32.totalorder %s238, 15
      %s240 = scalar_select %p239, %s238, 15
      %p241 = scmp.lt.s32.totalorder %s20, 0
      %s242 = scalar_select %p241, %s20, 0
      %s243 = sadd.s32 %s242, %s240
      %s244 = smul.addr %s243, 4
      %s245 = scalar_lea.vmem %s1, %s244
      %s246 = smul.u32 16, %s21
      %p247 = scmp.lt.s32.totalorder %s20, 0
      %s248 = scalar_select %p247, %s20, 0
      %s249 = scalar_lea.vmem %s2, %s248
      %s250 = smul.u32 32, %s19
      %p251 = scmp.lt.s32.totalorder %s250, 63
      %s252 = scalar_select %p251, %s250, 63
      %p253 = scmp.lt.s32.totalorder %s20, 0
      %s254 = scalar_select %p253, %s20, 0
      %s255 = sadd.s32 %s254, %s252
      %s256 = smul.addr %s255, 4
      %s257 = scalar_lea.vmem %s3, %s256
      %s258 = smul.u32 32, %s19
      %p259 = scmp.eq.s32.totalorder %s21, 0
      // Predicated region
      $region33: #{patchgan_forward.8} parent=31 // pred_check
        %p260 = pneg %p259
      $region34: #{patchgan_forward.8} parent=31 // pred_check_branch
        %262 = sbr.rel (%p260) target = $region36
      $region35: #{patchgan_forward.8} parent=31 // pred_region
        %263 = vst [vmem:[#allocation2] sm:$0xff] 0.0
        %264 = vst [vmem:[#allocation2 + $0x8] sm:$0xff] 0.0
        %265 = vst [vmem:[#allocation2 + $0x10] sm:$0xff] 0.0
        %266 = vst [vmem:[#allocation2 + $0x18] sm:$0xff] 0.0
        %267 = vst [vmem:[#allocation2 + $0x20] sm:$0xff] 0.0
        %268 = vst [vmem:[#allocation2 + $0x28] sm:$0xff] 0.0
        %269 = vst [vmem:[#allocation2 + $0x30] sm:$0xff] 0.0
        %270 = vst [vmem:[#allocation2 + $0x38] sm:$0xff] 0.0
        %271 = vst [vmem:[#allocation2 + $0x40] sm:$0xff] 0.0
        %272 = vst [vmem:[#allocation2 + $0x48] sm:$0xff] 0.0
        %273 = vst [vmem:[#allocation2 + $0x50] sm:$0xff] 0.0
        %274 = vst [vmem:[#allocation2 + $0x58] sm:$0xff] 0.0
        %275 = vst [vmem:[#allocation2 + $0x60] sm:$0xff] 0.0
        %276 = vst [vmem:[#allocation2 + $0x68] sm:$0xff] 0.0
        %277 = vst [vmem:[#allocation2 + $0x70] sm:$0xff] 0.0
        %278 = vst [vmem:[#allocation2 + $0x78] sm:$0xff] 0.0
        %279 = vst [vmem:[#allocation2 + $0x80] sm:$0xff] 0.0
        %280 = vst [vmem:[#allocation2 + $0x88] sm:$0xff] 0.0
        %281 = vst [vmem:[#allocation2 + $0x90] sm:$0xff] 0.0
        %282 = vst [vmem:[#allocation2 + $0x98] sm:$0xff] 0.0
        %283 = vst [vmem:[#allocation2 + $0xa0] sm:$0xff] 0.0
        %284 = vst [vmem:[#allocation2 + $0xa8] sm:$0xff] 0.0
        %285 = vst [vmem:[#allocation2 + $0xb0] sm:$0xff] 0.0
        %286 = vst [vmem:[#allocation2 + $0xb8] sm:$0xff] 0.0
        %287 = vst [vmem:[#allocation2 + $0xc0] sm:$0xff] 0.0
        %288 = vst [vmem:[#allocation2 + $0xc8] sm:$0xff] 0.0
        %289 = vst [vmem:[#allocation2 + $0xd0] sm:$0xff] 0.0
        %290 = vst [vmem:[#allocation2 + $0xd8] sm:$0xff] 0.0
        %291 = vst [vmem:[#allocation2 + $0xe0] sm:$0xff] 0.0
        %292 = vst [vmem:[#allocation2 + $0xe8] sm:$0xff] 0.0
        %293 = vst [vmem:[#allocation2 + $0xf0] sm:$0xff] 0.0
        %294 = vst [vmem:[#allocation2 + $0xf8] sm:$0xff] 0.0
      $region36: #{patchgan_forward.8} parent=31 // pred_fallthru
        _
      %v295 = vld [vmem:[#allocation2] sm:$0xff]
      %v296 = vld [vmem:[#allocation2 + $0x8] sm:$0xff]
      %v297 = vld [vmem:[#allocation2 + $0x10] sm:$0xff]
      %v298 = vld [vmem:[#allocation2 + $0x18] sm:$0xff]
      %v299 = vld [vmem:[#allocation2 + $0x20] sm:$0xff]
      %v300 = vld [vmem:[#allocation2 + $0x28] sm:$0xff]
      %v301 = vld [vmem:[#allocation2 + $0x30] sm:$0xff]
      %v302 = vld [vmem:[#allocation2 + $0x38] sm:$0xff]
      %v303 = vld [vmem:[#allocation2 + $0x40] sm:$0xff]
      %v304 = vld [vmem:[#allocation2 + $0x48] sm:$0xff]
      %v305 = vld [vmem:[#allocation2 + $0x50] sm:$0xff]
      %v306 = vld [vmem:[#allocation2 + $0x58] sm:$0xff]
      %v307 = vld [vmem:[#allocation2 + $0x60] sm:$0xff]
      %v308 = vld [vmem:[#allocation2 + $0x68] sm:$0xff]
      %v309 = vld [vmem:[#allocation2 + $0x70] sm:$0xff]
      %v310 = vld [vmem:[#allocation2 + $0x78] sm:$0xff]
      %v311 = vld [vmem:[#allocation2 + $0x80] sm:$0xff]
      %v312 = vld [vmem:[#allocation2 + $0x88] sm:$0xff]
      %v313 = vld [vmem:[#allocation2 + $0x90] sm:$0xff]
      %v314 = vld [vmem:[#allocation2 + $0x98] sm:$0xff]
      %v315 = vld [vmem:[#allocation2 + $0xa0] sm:$0xff]
      %v316 = vld [vmem:[#allocation2 + $0xa8] sm:$0xff]
      %v317 = vld [vmem:[#allocation2 + $0xb0] sm:$0xff]
      %v318 = vld [vmem:[#allocation2 + $0xb8] sm:$0xff]
      %v319 = vld [vmem:[#allocation2 + $0xc0] sm:$0xff]
      %v320 = vld [vmem:[#allocation2 + $0xc8] sm:$0xff]
      %v321 = vld [vmem:[#allocation2 + $0xd0] sm:$0xff]
      %v322 = vld [vmem:[#allocation2 + $0xd8] sm:$0xff]
      %v323 = vld [vmem:[#allocation2 + $0xe0] sm:$0xff]
      %v324 = vld [vmem:[#allocation2 + $0xe8] sm:$0xff]
      %v325 = vld [vmem:[#allocation2 + $0xf0] sm:$0xff]
      %v326 = vld [vmem:[#allocation2 + $0xf8] sm:$0xff]
      %v327 = vld [vmem:[%s236] sm:$0xf]
      %v328 = vld [vmem:[%s236 + $0x4] sm:$0xf]
      %v329 = vld [vmem:[%s236 + $0x8] sm:$0xf]
      %v330 = vld [vmem:[%s236 + $0xc] sm:$0xf]
      %v331 = vld [vmem:[%s236 + $0x10] sm:$0xf]
      %v332 = vld [vmem:[%s236 + $0x14] sm:$0xf]
      %v333 = vld [vmem:[%s236 + $0x18] sm:$0xf]
      %v334 = vld [vmem:[%s236 + $0x1c] sm:$0xf]
      %v335 = vld [vmem:[%s236 + $0x20] sm:$0xf]
      %v336 = vld [vmem:[%s236 + $0x24] sm:$0xf]
      %v337 = vld [vmem:[%s236 + $0x28] sm:$0xf]
      %v338 = vld [vmem:[%s236 + $0x2c] sm:$0xf]
      %v339 = vld [vmem:[%s236 + $0x30] sm:$0xf]
      %v340 = vld [vmem:[%s236 + $0x34] sm:$0xf]
      %v341 = vld [vmem:[%s236 + $0x38] sm:$0xf]
      %v342 = vld [vmem:[%s236 + $0x3c] sm:$0xf]
      %v343 = vld [vmem:[%s236 + $0x40] sm:$0xf]
      %v344 = vld [vmem:[%s236 + $0x44] sm:$0xf]
      %v345 = vld [vmem:[%s236 + $0x48] sm:$0xf]
      %v346 = vld [vmem:[%s236 + $0x4c] sm:$0xf]
      %v347 = vld [vmem:[%s236 + $0x50] sm:$0xf]
      %v348 = vld [vmem:[%s236 + $0x54] sm:$0xf]
      %v349 = vld [vmem:[%s236 + $0x58] sm:$0xf]
      %v350 = vld [vmem:[%s236 + $0x5c] sm:$0xf]
      %v351 = vld [vmem:[%s236 + $0x60] sm:$0xf]
      %v352 = vld [vmem:[%s236 + $0x64] sm:$0xf]
      %v353 = vld [vmem:[%s236 + $0x68] sm:$0xf]
      %v354 = vld [vmem:[%s236 + $0x6c] sm:$0xf]
      %v355 = vld [vmem:[%s236 + $0x70] sm:$0xf]
      %v356 = vld [vmem:[%s236 + $0x74] sm:$0xf]
      %v357 = vld [vmem:[%s236 + $0x78] sm:$0xf]
      %v358 = vld [vmem:[%s236 + $0x7c] sm:$0xf]
      %v359 = vld [vmem:[%s245] sm:$0xf]
      %v360 = vld [vmem:[%s245 + $0x4] sm:$0xf]
      %v361 = vld [vmem:[%s245 + $0x8] sm:$0xf]
      %v362 = vld [vmem:[%s245 + $0xc] sm:$0xf]
      %v363 = vld [vmem:[%s245 + $0x10] sm:$0xf]
      %v364 = vld [vmem:[%s245 + $0x14] sm:$0xf]
      %v365 = vld [vmem:[%s245 + $0x18] sm:$0xf]
      %v366 = vld [vmem:[%s245 + $0x1c] sm:$0xf]
      %v367 = vld [vmem:[%s245 + $0x20] sm:$0xf]
      %v368 = vld [vmem:[%s245 + $0x24] sm:$0xf]
      %v369 = vld [vmem:[%s245 + $0x28] sm:$0xf]
      %v370 = vld [vmem:[%s245 + $0x2c] sm:$0xf]
      %v371 = vld [vmem:[%s245 + $0x30] sm:$0xf]
      %v372 = vld [vmem:[%s245 + $0x34] sm:$0xf]
      %v373 = vld [vmem:[%s245 + $0x38] sm:$0xf]
      %v374 = vld [vmem:[%s245 + $0x3c] sm:$0xf]
      %v407 = vunpack.c.l.b16 %v327
      %v408 = vunpack.c.l.b16 %v328
      %v409 = vunpack.c.l.b16 %v329
      %v410 = vunpack.c.l.b16 %v330
      %v411 = vunpack.c.l.b16 %v331
      %v412 = vunpack.c.l.b16 %v332
      %v413 = vunpack.c.l.b16 %v333
      %v414 = vunpack.c.l.b16 %v334
      %v415 = vunpack.c.l.b16 %v335
      %v416 = vunpack.c.l.b16 %v336
      %v417 = vunpack.c.l.b16 %v337
      %v418 = vunpack.c.l.b16 %v338
      %v419 = vunpack.c.l.b16 %v339
      %v420 = vunpack.c.l.b16 %v340
      %v421 = vunpack.c.l.b16 %v341
      %v422 = vunpack.c.l.b16 %v342
      %v423 = vunpack.c.l.b16 %v343
      %v424 = vunpack.c.l.b16 %v344
      %v425 = vunpack.c.l.b16 %v345
      %v426 = vunpack.c.l.b16 %v346
      %v427 = vunpack.c.l.b16 %v347
      %v428 = vunpack.c.l.b16 %v348
      %v429 = vunpack.c.l.b16 %v349
      %v430 = vunpack.c.l.b16 %v350
      %v431 = vunpack.c.l.b16 %v351
      %v432 = vunpack.c.l.b16 %v352
      %v433 = vunpack.c.l.b16 %v353
      %v434 = vunpack.c.l.b16 %v354
      %v435 = vunpack.c.l.b16 %v355
      %v436 = vunpack.c.l.b16 %v356
      %v437 = vunpack.c.l.b16 %v357
      %v438 = vunpack.c.l.b16 %v358
      %v439 = vpack.c.b16 %v408, %v407
      %v440 = vpack.c.b16 %v410, %v409
      %v441 = vpack.c.b16 %v412, %v411
      %v442 = vpack.c.b16 %v414, %v413
      %v443 = vpack.c.b16 %v416, %v415
      %v444 = vpack.c.b16 %v418, %v417
      %v445 = vpack.c.b16 %v420, %v419
      %v446 = vpack.c.b16 %v422, %v421
      %v447 = vpack.c.b16 %v424, %v423
      %v448 = vpack.c.b16 %v426, %v425
      %v449 = vpack.c.b16 %v428, %v427
      %v450 = vpack.c.b16 %v430, %v429
      %v451 = vpack.c.b16 %v432, %v431
      %v452 = vpack.c.b16 %v434, %v433
      %v453 = vpack.c.b16 %v436, %v435
      %v454 = vpack.c.b16 %v438, %v437
      %v487 = vunpack.c.l.b16 %v359
      %v488 = vunpack.c.l.b16 %v360
      %v489 = vunpack.c.l.b16 %v361
      %v490 = vunpack.c.l.b16 %v362
      %v491 = vunpack.c.l.b16 %v363
      %v492 = vunpack.c.l.b16 %v364
      %v493 = vunpack.c.l.b16 %v365
      %v494 = vunpack.c.l.b16 %v366
      %v495 = vunpack.c.l.b16 %v367
      %v496 = vunpack.c.l.b16 %v368
      %v497 = vunpack.c.l.b16 %v369
      %v498 = vunpack.c.l.b16 %v370
      %v499 = vunpack.c.l.b16 %v371
      %v500 = vunpack.c.l.b16 %v372
      %v501 = vunpack.c.l.b16 %v373
      %v502 = vunpack.c.l.b16 %v374
      %v503 = vpack.c.b16 %v488, %v487
      %v504 = vpack.c.b16 %v490, %v489
      %v505 = vpack.c.b16 %v492, %v491
      %v506 = vpack.c.b16 %v494, %v493
      %v507 = vpack.c.b16 %v496, %v495
      %v508 = vpack.c.b16 %v498, %v497
      %v509 = vpack.c.b16 %v500, %v499
      %v510 = vpack.c.b16 %v502, %v501
      %519 = vmatpush.bf16.msra.mxu0 %v510
      %520 = vmatpush.bf16.msra.mxu0 %v509
      %521 = vmatpush.bf16.msra.mxu0 %v508
      %522 = vmatpush.bf16.msra.mxu0 %v507
      %523 = vmatpush.bf16.msra.mxu0 %v506
      %524 = vmatpush.bf16.msra.mxu0 %v505
      %525 = vmatpush.bf16.msra.mxu0 %v504
      %526 = vmatpush.bf16.msra.mxu0 %v503
      %527 = vmatmul.bf16.gmra.mxu0 %v439
      %v528 = vpop.f32.mrf.mxu0
      %v529 = vadd.f32 0.0, %v528
      %v530 = vpop.f32.mrf.mxu0
      %v531 = vadd.f32 0.0, %v530
      %532 = vmatmul.bf16.gmra.mxu0 %v440
      %v533 = vpop.f32.mrf.mxu0
      %v534 = vadd.f32 0.0, %v533
      %v535 = vpop.f32.mrf.mxu0
      %v536 = vadd.f32 0.0, %v535
      %537 = vmatmul.bf16.gmra.mxu0 %v441
      %v538 = vpop.f32.mrf.mxu0
      %v539 = vadd.f32 0.0, %v538
      %v540 = vpop.f32.mrf.mxu0
      %v541 = vadd.f32 0.0, %v540
      %542 = vmatmul.bf16.gmra.mxu0 %v442
      %v543 = vpop.f32.mrf.mxu0
      %v544 = vadd.f32 0.0, %v543
      %v545 = vpop.f32.mrf.mxu0
      %v546 = vadd.f32 0.0, %v545
      %547 = vmatmul.bf16.gmra.mxu0 %v443
      %v548 = vpop.f32.mrf.mxu0
      %v549 = vadd.f32 0.0, %v548
      %v550 = vpop.f32.mrf.mxu0
      %v551 = vadd.f32 0.0, %v550
      %552 = vmatmul.bf16.gmra.mxu0 %v444
      %v553 = vpop.f32.mrf.mxu0
      %v554 = vadd.f32 0.0, %v553
      %v555 = vpop.f32.mrf.mxu0
      %v556 = vadd.f32 0.0, %v555
      %557 = vmatmul.bf16.gmra.mxu0 %v445
      %v558 = vpop.f32.mrf.mxu0
      %v559 = vadd.f32 0.0, %v558
      %v560 = vpop.f32.mrf.mxu0
      %v561 = vadd.f32 0.0, %v560
      %562 = vmatmul.bf16.gmra.mxu0 %v446
      %v563 = vpop.f32.mrf.mxu0
      %v564 = vadd.f32 0.0, %v563
      %v565 = vpop.f32.mrf.mxu0
      %v566 = vadd.f32 0.0, %v565
      %567 = vmatmul.bf16.gmra.mxu0 %v447
      %v568 = vpop.f32.mrf.mxu0
      %v569 = vadd.f32 0.0, %v568
      %v570 = vpop.f32.mrf.mxu0
      %v571 = vadd.f32 0.0, %v570
      %572 = vmatmul.bf16.gmra.mxu0 %v448
      %v573 = vpop.f32.mrf.mxu0
      %v574 = vadd.f32 0.0, %v573
      %v575 = vpop.f32.mrf.mxu0
      %v576 = vadd.f32 0.0, %v575
      %577 = vmatmul.bf16.gmra.mxu0 %v449
      %v578 = vpop.f32.mrf.mxu0
      %v579 = vadd.f32 0.0, %v578
      %v580 = vpop.f32.mrf.mxu0
      %v581 = vadd.f32 0.0, %v580
      %582 = vmatmul.bf16.gmra.mxu0 %v450
      %v583 = vpop.f32.mrf.mxu0
      %v584 = vadd.f32 0.0, %v583
      %v585 = vpop.f32.mrf.mxu0
      %v586 = vadd.f32 0.0, %v585
      %587 = vmatmul.bf16.gmra.mxu0 %v451
      %v588 = vpop.f32.mrf.mxu0
      %v589 = vadd.f32 0.0, %v588
      %v590 = vpop.f32.mrf.mxu0
      %v591 = vadd.f32 0.0, %v590
      %592 = vmatmul.bf16.gmra.mxu0 %v452
      %v593 = vpop.f32.mrf.mxu0
      %v594 = vadd.f32 0.0, %v593
      %v595 = vpop.f32.mrf.mxu0
      %v596 = vadd.f32 0.0, %v595
      %597 = vmatmul.bf16.gmra.mxu0 %v453
      %v598 = vpop.f32.mrf.mxu0
      %v599 = vadd.f32 0.0, %v598
      %v600 = vpop.f32.mrf.mxu0
      %v601 = vadd.f32 0.0, %v600
      %602 = vmatmul.bf16.gmra.mxu0 %v454
      %v603 = vpop.f32.mrf.mxu0
      %v604 = vadd.f32 0.0, %v603
      %v605 = vpop.f32.mrf.mxu0
      %v606 = vadd.f32 0.0, %v605
      %607 = vdwg.mxu0
      %v608 = vadd.f32 %v295, %v529
      %v609 = vadd.f32 %v296, %v531
      %v610 = vadd.f32 %v297, %v534
      %v611 = vadd.f32 %v298, %v536
      %v612 = vadd.f32 %v299, %v539
      %v613 = vadd.f32 %v300, %v541
      %v614 = vadd.f32 %v301, %v544
      %v615 = vadd.f32 %v302, %v546
      %v616 = vadd.f32 %v303, %v549
      %v617 = vadd.f32 %v304, %v551
      %v618 = vadd.f32 %v305, %v554
      %v619 = vadd.f32 %v306, %v556
      %v620 = vadd.f32 %v307, %v559
      %v621 = vadd.f32 %v308, %v561
      %v622 = vadd.f32 %v309, %v564
      %v623 = vadd.f32 %v310, %v566
      %v624 = vadd.f32 %v311, %v569
      %v625 = vadd.f32 %v312, %v571
      %v626 = vadd.f32 %v313, %v574
      %v627 = vadd.f32 %v314, %v576
      %v628 = vadd.f32 %v315, %v579
      %v629 = vadd.f32 %v316, %v581
      %v630 = vadd.f32 %v317, %v584
      %v631 = vadd.f32 %v318, %v586
      %v632 = vadd.f32 %v319, %v589
      %v633 = vadd.f32 %v320, %v591
      %v634 = vadd.f32 %v321, %v594
      %v635 = vadd.f32 %v322, %v596
      %v636 = vadd.f32 %v323, %v599
      %v637 = vadd.f32 %v324, %v601
      %v638 = vadd.f32 %v325, %v604
      %v639 = vadd.f32 %v326, %v606
      %640 = vst [vmem:[#allocation2] sm:$0xff] %v608
      %641 = vst [vmem:[#allocation2 + $0x8] sm:$0xff] %v609
      %642 = vst [vmem:[#allocation2 + $0x10] sm:$0xff] %v610
      %643 = vst [vmem:[#allocation2 + $0x18] sm:$0xff] %v611
      %644 = vst [vmem:[#allocation2 + $0x20] sm:$0xff] %v612
      %645 = vst [vmem:[#allocation2 + $0x28] sm:$0xff] %v613
      %646 = vst [vmem:[#allocation2 + $0x30] sm:$0xff] %v614
      %647 = vst [vmem:[#allocation2 + $0x38] sm:$0xff] %v615
      %648 = vst [vmem:[#allocation2 + $0x40] sm:$0xff] %v616
      %649 = vst [vmem:[#allocation2 + $0x48] sm:$0xff] %v617
      %650 = vst [vmem:[#allocation2 + $0x50] sm:$0xff] %v618
      %651 = vst [vmem:[#allocation2 + $0x58] sm:$0xff] %v619
      %652 = vst [vmem:[#allocation2 + $0x60] sm:$0xff] %v620
      %653 = vst [vmem:[#allocation2 + $0x68] sm:$0xff] %v621
      %654 = vst [vmem:[#allocation2 + $0x70] sm:$0xff] %v622
      %655 = vst [vmem:[#allocation2 + $0x78] sm:$0xff] %v623
      %656 = vst [vmem:[#allocation2 + $0x80] sm:$0xff] %v624
      %657 = vst [vmem:[#allocation2 + $0x88] sm:$0xff] %v625
      %658 = vst [vmem:[#allocation2 + $0x90] sm:$0xff] %v626
      %659 = vst [vmem:[#allocation2 + $0x98] sm:$0xff] %v627
      %660 = vst [vmem:[#allocation2 + $0xa0] sm:$0xff] %v628
      %661 = vst [vmem:[#allocation2 + $0xa8] sm:$0xff] %v629
      %662 = vst [vmem:[#allocation2 + $0xb0] sm:$0xff] %v630
      %663 = vst [vmem:[#allocation2 + $0xb8] sm:$0xff] %v631
      %664 = vst [vmem:[#allocation2 + $0xc0] sm:$0xff] %v632
      %665 = vst [vmem:[#allocation2 + $0xc8] sm:$0xff] %v633
      %666 = vst [vmem:[#allocation2 + $0xd0] sm:$0xff] %v634
      %667 = vst [vmem:[#allocation2 + $0xd8] sm:$0xff] %v635
      %668 = vst [vmem:[#allocation2 + $0xe0] sm:$0xff] %v636
      %669 = vst [vmem:[#allocation2 + $0xe8] sm:$0xff] %v637
      %670 = vst [vmem:[#allocation2 + $0xf0] sm:$0xff] %v638
      %671 = vst [vmem:[#allocation2 + $0xf8] sm:$0xff] %v639
      // Predicated region
      $region37: #{patchgan_forward.8} parent=31 // pred_check
        %p672 = pneg %p259
      $region38: #{patchgan_forward.8} parent=31 // pred_check_branch
        %674 = sbr.rel (%p672) target = $region40
      $region39: #{patchgan_forward.8} parent=31 // pred_region
        %v675 = vld [vmem:[#allocation2] sm:$0xff]
        %v676 = vld [vmem:[#allocation2 + $0x8] sm:$0xff]
        %v677 = vld [vmem:[#allocation2 + $0x10] sm:$0xff]
        %v678 = vld [vmem:[#allocation2 + $0x18] sm:$0xff]
        %v679 = vld [vmem:[#allocation2 + $0x20] sm:$0xff]
        %v680 = vld [vmem:[#allocation2 + $0x28] sm:$0xff]
        %v681 = vld [vmem:[#allocation2 + $0x30] sm:$0xff]
        %v682 = vld [vmem:[#allocation2 + $0x38] sm:$0xff]
        %v683 = vld [vmem:[#allocation2 + $0x40] sm:$0xff]
        %v684 = vld [vmem:[#allocation2 + $0x48] sm:$0xff]
        %v685 = vld [vmem:[#allocation2 + $0x50] sm:$0xff]
        %v686 = vld [vmem:[#allocation2 + $0x58] sm:$0xff]
        %v687 = vld [vmem:[#allocation2 + $0x60] sm:$0xff]
        %v688 = vld [vmem:[#allocation2 + $0x68] sm:$0xff]
        %v689 = vld [vmem:[#allocation2 + $0x70] sm:$0xff]
        %v690 = vld [vmem:[#allocation2 + $0x78] sm:$0xff]
        %v691 = vld [vmem:[#allocation2 + $0x80] sm:$0xff]
        %v692 = vld [vmem:[#allocation2 + $0x88] sm:$0xff]
        %v693 = vld [vmem:[#allocation2 + $0x90] sm:$0xff]
        %v694 = vld [vmem:[#allocation2 + $0x98] sm:$0xff]
        %v695 = vld [vmem:[#allocation2 + $0xa0] sm:$0xff]
        %v696 = vld [vmem:[#allocation2 + $0xa8] sm:$0xff]
        %v697 = vld [vmem:[#allocation2 + $0xb0] sm:$0xff]
        %v698 = vld [vmem:[#allocation2 + $0xb8] sm:$0xff]
        %v699 = vld [vmem:[#allocation2 + $0xc0] sm:$0xff]
        %v700 = vld [vmem:[#allocation2 + $0xc8] sm:$0xff]
        %v701 = vld [vmem:[#allocation2 + $0xd0] sm:$0xff]
        %v702 = vld [vmem:[#allocation2 + $0xd8] sm:$0xff]
        %v703 = vld [vmem:[#allocation2 + $0xe0] sm:$0xff]
        %v704 = vld [vmem:[#allocation2 + $0xe8] sm:$0xff]
        %v705 = vld [vmem:[#allocation2 + $0xf0] sm:$0xff]
        %v706 = vld [vmem:[#allocation2 + $0xf8] sm:$0xff]
        %v707 = vld [vmem:[%s249] sm:$0x1]
        %v709 = vperm.slane %v707, 0
        %v711 = vadd.f32 %v675, %v709
        %v712 = vadd.f32 %v676, %v709
        %v713 = vadd.f32 %v677, %v709
        %v714 = vadd.f32 %v678, %v709
        %v715 = vadd.f32 %v679, %v709
        %v716 = vadd.f32 %v680, %v709
        %v717 = vadd.f32 %v681, %v709
        %v718 = vadd.f32 %v682, %v709
        %v719 = vadd.f32 %v683, %v709
        %v720 = vadd.f32 %v684, %v709
        %v721 = vadd.f32 %v685, %v709
        %v722 = vadd.f32 %v686, %v709
        %v723 = vadd.f32 %v687, %v709
        %v724 = vadd.f32 %v688, %v709
        %v725 = vadd.f32 %v689, %v709
        %v726 = vadd.f32 %v690, %v709
        %v727 = vadd.f32 %v691, %v709
        %v728 = vadd.f32 %v692, %v709
        %v729 = vadd.f32 %v693, %v709
        %v730 = vadd.f32 %v694, %v709
        %v731 = vadd.f32 %v695, %v709
        %v732 = vadd.f32 %v696, %v709
        %v733 = vadd.f32 %v697, %v709
        %v734 = vadd.f32 %v698, %v709
        %v735 = vadd.f32 %v699, %v709
        %v736 = vadd.f32 %v700, %v709
        %v737 = vadd.f32 %v701, %v709
        %v738 = vadd.f32 %v702, %v709
        %v739 = vadd.f32 %v703, %v709
        %v740 = vadd.f32 %v704, %v709
        %v741 = vadd.f32 %v705, %v709
        %v742 = vadd.f32 %v706, %v709
        %vm743 = vcmp.ge.f32.partialorder %v711, 0.0
        %vm744 = vcmp.ge.f32.partialorder %v712, 0.0
        %vm745 = vcmp.ge.f32.partialorder %v713, 0.0
        %vm746 = vcmp.ge.f32.partialorder %v714, 0.0
        %vm747 = vcmp.ge.f32.partialorder %v715, 0.0
        %vm748 = vcmp.ge.f32.partialorder %v716, 0.0
        %vm749 = vcmp.ge.f32.partialorder %v717, 0.0
        %vm750 = vcmp.ge.f32.partialorder %v718, 0.0
        %vm751 = vcmp.ge.f32.partialorder %v719, 0.0
        %vm752 = vcmp.ge.f32.partialorder %v720, 0.0
        %vm753 = vcmp.ge.f32.partialorder %v721, 0.0
        %vm754 = vcmp.ge.f32.partialorder %v722, 0.0
        %vm755 = vcmp.ge.f32.partialorder %v723, 0.0
        %vm756 = vcmp.ge.f32.partialorder %v724, 0.0
        %vm757 = vcmp.ge.f32.partialorder %v725, 0.0
        %vm758 = vcmp.ge.f32.partialorder %v726, 0.0
        %vm759 = vcmp.ge.f32.partialorder %v727, 0.0
        %vm760 = vcmp.ge.f32.partialorder %v728, 0.0
        %vm761 = vcmp.ge.f32.partialorder %v729, 0.0
        %vm762 = vcmp.ge.f32.partialorder %v730, 0.0
        %vm763 = vcmp.ge.f32.partialorder %v731, 0.0
        %vm764 = vcmp.ge.f32.partialorder %v732, 0.0
        %vm765 = vcmp.ge.f32.partialorder %v733, 0.0
        %vm766 = vcmp.ge.f32.partialorder %v734, 0.0
        %vm767 = vcmp.ge.f32.partialorder %v735, 0.0
        %vm768 = vcmp.ge.f32.partialorder %v736, 0.0
        %vm769 = vcmp.ge.f32.partialorder %v737, 0.0
        %vm770 = vcmp.ge.f32.partialorder %v738, 0.0
        %vm771 = vcmp.ge.f32.partialorder %v739, 0.0
        %vm772 = vcmp.ge.f32.partialorder %v740, 0.0
        %vm773 = vcmp.ge.f32.partialorder %v741, 0.0
        %vm774 = vcmp.ge.f32.partialorder %v742, 0.0
        %v775 = vmul.f32 %v711, 0.2
        %v776 = vmul.f32 %v712, 0.2
        %v777 = vmul.f32 %v713, 0.2
        %v778 = vmul.f32 %v714, 0.2
        %v779 = vmul.f32 %v715, 0.2
        %v780 = vmul.f32 %v716, 0.2
        %v781 = vmul.f32 %v717, 0.2
        %v782 = vmul.f32 %v718, 0.2
        %v783 = vmul.f32 %v719, 0.2
        %v784 = vmul.f32 %v720, 0.2
        %v785 = vmul.f32 %v721, 0.2
        %v786 = vmul.f32 %v722, 0.2
        %v787 = vmul.f32 %v723, 0.2
        %v788 = vmul.f32 %v724, 0.2
        %v789 = vmul.f32 %v725, 0.2
        %v790 = vmul.f32 %v726, 0.2
        %v791 = vmul.f32 %v727, 0.2
        %v792 = vmul.f32 %v728, 0.2
        %v793 = vmul.f32 %v729, 0.2
        %v794 = vmul.f32 %v730, 0.2
        %v795 = vmul.f32 %v731, 0.2
        %v796 = vmul.f32 %v732, 0.2
        %v797 = vmul.f32 %v733, 0.2
        %v798 = vmul.f32 %v734, 0.2
        %v799 = vmul.f32 %v735, 0.2
        %v800 = vmul.f32 %v736, 0.2
        %v801 = vmul.f32 %v737, 0.2
        %v802 = vmul.f32 %v738, 0.2
        %v803 = vmul.f32 %v739, 0.2
        %v804 = vmul.f32 %v740, 0.2
        %v805 = vmul.f32 %v741, 0.2
        %v806 = vmul.f32 %v742, 0.2
        %v807 = vsel %vm743, %v711, %v775
        %v808 = vsel %vm744, %v712, %v776
        %v809 = vsel %vm745, %v713, %v777
        %v810 = vsel %vm746, %v714, %v778
        %v811 = vsel %vm747, %v715, %v779
        %v812 = vsel %vm748, %v716, %v780
        %v813 = vsel %vm749, %v717, %v781
        %v814 = vsel %vm750, %v718, %v782
        %v815 = vsel %vm751, %v719, %v783
        %v816 = vsel %vm752, %v720, %v784
        %v817 = vsel %vm753, %v721, %v785
        %v818 = vsel %vm754, %v722, %v786
        %v819 = vsel %vm755, %v723, %v787
        %v820 = vsel %vm756, %v724, %v788
        %v821 = vsel %vm757, %v725, %v789
        %v822 = vsel %vm758, %v726, %v790
        %v823 = vsel %vm759, %v727, %v791
        %v824 = vsel %vm760, %v728, %v792
        %v825 = vsel %vm761, %v729, %v793
        %v826 = vsel %vm762, %v730, %v794
        %v827 = vsel %vm763, %v731, %v795
        %v828 = vsel %vm764, %v732, %v796
        %v829 = vsel %vm765, %v733, %v797
        %v830 = vsel %vm766, %v734, %v798
        %v831 = vsel %vm767, %v735, %v799
        %v832 = vsel %vm768, %v736, %v800
        %v833 = vsel %vm769, %v737, %v801
        %v834 = vsel %vm770, %v738, %v802
        %v835 = vsel %vm771, %v739, %v803
        %v836 = vsel %vm772, %v740, %v804
        %v837 = vsel %vm773, %v741, %v805
        %v838 = vsel %vm774, %v742, %v806
        %v839 = vpack.c.bf16 %v807, %v807
        %v840 = vpack.c.bf16 %v808, %v808
        %v841 = vpack.c.bf16 %v809, %v809
        %v842 = vpack.c.bf16 %v810, %v810
        %v843 = vpack.c.bf16 %v811, %v811
        %v844 = vpack.c.bf16 %v812, %v812
        %v845 = vpack.c.bf16 %v813, %v813
        %v846 = vpack.c.bf16 %v814, %v814
        %v847 = vpack.c.bf16 %v815, %v815
        %v848 = vpack.c.bf16 %v816, %v816
        %v849 = vpack.c.bf16 %v817, %v817
        %v850 = vpack.c.bf16 %v818, %v818
        %v851 = vpack.c.bf16 %v819, %v819
        %v852 = vpack.c.bf16 %v820, %v820
        %v853 = vpack.c.bf16 %v821, %v821
        %v854 = vpack.c.bf16 %v822, %v822
        %v855 = vpack.c.bf16 %v823, %v823
        %v856 = vpack.c.bf16 %v824, %v824
        %v857 = vpack.c.bf16 %v825, %v825
        %v858 = vpack.c.bf16 %v826, %v826
        %v859 = vpack.c.bf16 %v827, %v827
        %v860 = vpack.c.bf16 %v828, %v828
        %v861 = vpack.c.bf16 %v829, %v829
        %v862 = vpack.c.bf16 %v830, %v830
        %v863 = vpack.c.bf16 %v831, %v831
        %v864 = vpack.c.bf16 %v832, %v832
        %v865 = vpack.c.bf16 %v833, %v833
        %v866 = vpack.c.bf16 %v834, %v834
        %v867 = vpack.c.bf16 %v835, %v835
        %v868 = vpack.c.bf16 %v836, %v836
        %v869 = vpack.c.bf16 %v837, %v837
        %v870 = vpack.c.bf16 %v838, %v838
        %871 = vst [vmem:[%s257] sm:$0xf] %v839
        %872 = vst [vmem:[%s257 + $0x4] sm:$0xf] %v840
        %873 = vst [vmem:[%s257 + $0x8] sm:$0xf] %v841
        %874 = vst [vmem:[%s257 + $0xc] sm:$0xf] %v842
        %875 = vst [vmem:[%s257 + $0x10] sm:$0xf] %v843
        %876 = vst [vmem:[%s257 + $0x14] sm:$0xf] %v844
        %877 = vst [vmem:[%s257 + $0x18] sm:$0xf] %v845
        %878 = vst [vmem:[%s257 + $0x1c] sm:$0xf] %v846
        %879 = vst [vmem:[%s257 + $0x20] sm:$0xf] %v847
        %880 = vst [vmem:[%s257 + $0x24] sm:$0xf] %v848
        %881 = vst [vmem:[%s257 + $0x28] sm:$0xf] %v849
        %882 = vst [vmem:[%s257 + $0x2c] sm:$0xf] %v850
        %883 = vst [vmem:[%s257 + $0x30] sm:$0xf] %v851
        %884 = vst [vmem:[%s257 + $0x34] sm:$0xf] %v852
        %885 = vst [vmem:[%s257 + $0x38] sm:$0xf] %v853
        %886 = vst [vmem:[%s257 + $0x3c] sm:$0xf] %v854
        %887 = vst [vmem:[%s257 + $0x40] sm:$0xf] %v855
        %888 = vst [vmem:[%s257 + $0x44] sm:$0xf] %v856
        %889 = vst [vmem:[%s257 + $0x48] sm:$0xf] %v857
        %890 = vst [vmem:[%s257 + $0x4c] sm:$0xf] %v858
        %891 = vst [vmem:[%s257 + $0x50] sm:$0xf] %v859
        %892 = vst [vmem:[%s257 + $0x54] sm:$0xf] %v860
        %893 = vst [vmem:[%s257 + $0x58] sm:$0xf] %v861
        %894 = vst [vmem:[%s257 + $0x5c] sm:$0xf] %v862
        %895 = vst [vmem:[%s257 + $0x60] sm:$0xf] %v863
        %896 = vst [vmem:[%s257 + $0x64] sm:$0xf] %v864
        %897 = vst [vmem:[%s257 + $0x68] sm:$0xf] %v865
        %898 = vst [vmem:[%s257 + $0x6c] sm:$0xf] %v866
        %899 = vst [vmem:[%s257 + $0x70] sm:$0xf] %v867
        %900 = vst [vmem:[%s257 + $0x74] sm:$0xf] %v868
        %901 = vst [vmem:[%s257 + $0x78] sm:$0xf] %v869
        %902 = vst [vmem:[%s257 + $0x7c] sm:$0xf] %v870
      $region40: #{patchgan_forward.8} parent=31 // pred_fallthru
        _
      %s903 = smul.u32 32, %s19
      %p904 = scmp.lt.s32.totalorder %s903, 63
      %s905 = scalar_select %p904, %s903, 63
      %p906 = scmp.lt.s32.totalorder %s20, 0
      %s907 = scalar_select %p906, %s20, 0
      %s908 = sadd.s32 %s907, %s905
      %s909 = smul.addr %s908, 4
      %s910 = scalar_lea.vmem %s3, %s909
      // Predicated region
      $region41: #{patchgan_forward.8} parent=31 // pred_check
        %p911 = pneg %p135
      $region42: #{patchgan_forward.8} parent=31 // pred_check_branch
        %913 = sbr.rel (%p911) target = $region44
      $region43: #{patchgan_forward.8} parent=31 // pred_region
        %s914 = smul.u32 32, %s19
      $region44: #{patchgan_forward.8} parent=31 // pred_fallthru
        _
    $region32: #{patchgan_forward.8} parent=5 // pred_fallthru
      _
    %p915 = scmp.le.s32.totalorder 2, %s9
    // Predicated region
    $region45: #{patchgan_forward.8} parent=5 // pred_check
      %p916 = pneg %p915
    $region46: #{patchgan_forward.8} parent=5 // pred_check_branch
      %918 = sbr.rel (%p916) target = $region48
    $region47: #{patchgan_forward.8} parent=5 // pred_region
      %s919 = ssub.s32 %s9, 2
      // Predicated region
      $region49: #{patchgan_forward.8} parent=47 // pred_check
        %p920 = pneg %p141
      $region50: #{patchgan_forward.8} parent=47 // pred_check_branch
        %922 = sbr.rel (%p920) target = $region52
      $region51: #{patchgan_forward.8} parent=47 // pred_region
        %s923 = smul.u32 32, %s22
        %p924 = scmp.lt.s32.totalorder %s923, 63
        %s925 = scalar_select %p924, %s923, 63
        %p926 = scmp.lt.s32.totalorder %s23, 0
        %s927 = scalar_select %p926, %s23, 0
        %s928 = sadd.s32 %s927, %s925
        %s929 = smul.addr %s928, 4
        %s930 = scalar_lea.vmem %s3, %s929
      $region52: #{patchgan_forward.8} parent=47 // pred_fallthru
        _
    $region48: #{patchgan_forward.8} parent=5 // pred_fallthru
      _
  $region6: #{patchgan_forward.8} parent=0 // loop_footer
    %s13 = sadd.s32 1, %s9
  $region7: #{patchgan_forward.8} parent=0 // loop_footer_branch
    %8 = sbr.rel target = $region3
  $region8: #{patchgan_forward.8} parent=0 // loop_exit
    _

// kernel: patchgan_forward.10
$region0: #{patchgan_forward.10}
  #allocation0 [shape = 'u32[]', space=smem, size = 0x4, offset = 0x4, fixed_abs, tag = 'smem constant byte address 0x4 - core index']
  #allocation1 [shape = 'u32[72,128]{1,0:T(1,128)}', space=vmem, size = 0x9000, scoped, tag = 'internal scratch']
  %s0 = inlined_call_operand.vmem [shape: bf16[128,128], index: 0, kind: input, shape index: {}]
  %s1 = inlined_call_operand.vmem [shape: f32[1,128], index: 1, kind: input, shape index: {}]
  %s2 = inlined_call_operand.vmem [shape: f32[1,128], index: 2, kind: input, shape index: {}]
  %s3 = inlined_call_operand.vmem [shape: bf16[128,128], index: 3, kind: output, shape index: {}]
  %s4 = sld [smem:[#allocation0]]
  $region45: #{patchgan_forward.10} parent=0
    _
  %s6 = ssub.s32 1, %s4
  %s7 = scalar_select 0, %s6, %s4
  loop: start=0, step=1, limit=4
  $region2: #{patchgan_forward.10} parent=0 // loop_pre_header
    _
  $region3: #{patchgan_forward.10} parent=0 // loop_header
    %s9 = sphi 0, %s13
    %p10 = scmp.ge.s32.totalorder %s9, 4
    %s16 = sphi 0, %s28
    %s17 = sphi 0, %s24
    %s18 = sphi 0, %s16
    %s19 = sphi 0, %s17
    %s20 = sphi 0, %s18
    %s21 = sphi 0, %s19
    %s33 = sphi 0, %s35
    %s36 = sphi 0, %s33
    %s37 = sphi 0, %s36
    %s53 = sphi 0, %s37
    %s59 = sphi 0, %s61
    %s62 = sphi 0, %s59
    %s63 = sphi 0, %s62
    %s79 = sphi 0, %s63
    %s85 = sphi 0, %s87
    %s88 = sphi 0, %s85
    %s89 = sphi 0, %s88
    %s105 = sphi 0, %s89
    %s113 = sphi 0, %s115
    %s116 = sphi 0, %s113
    %s117 = sphi 0, %s116
    %s133 = sphi 0, %s117
  $region4: #{patchgan_forward.10} parent=0 // loop_header_branch
    %12 = sbr.rel (%p10) target = $region8
  $region5: #{patchgan_forward.10} parent=0 // loop_body
    %s14 = ssub.s32 %s9, 1
    %s15 = ssub.s32 %s9, 2
    %s22 = sadd.s32 1, %s17
    %p23 = scmp.ge.s32.totalorder %s22, 1
    %s24 = scalar_select %p23, 0, %s22
    %s25 = sadd.s32 1, %s16
    %s26 = scalar_select %p23, %s25, %s16
    %p27 = scmp.ge.s32.totalorder %s26, 2
    %s28 = scalar_select %p27, 0, %s26
    %s29 = ssub.s32 %s16, %s28
    %s30 = ssub.s32 %s17, %s24
    %s31 = sor.u32 %s29, %s30
    %p32 = scmp.eq.s32.totalorder %s31, 0
    %s34 = sadd.s32 %s33, 1
    %s35 = scalar_select %p32, %s33, %s34
    %p38 = pneg %p32
    %p39 = scmp.eq.s32.totalorder %s9, 1
    %p40 = por %p38, %p39
    %p41 = scmp.ne.s32.totalorder %s33, %s36
    %p42 = scmp.eq.s32.totalorder %s9, 0
    %p43 = por %p41, %p42
    %p44 = scmp.ne.s32.totalorder %s33, %s36
    %p45 = scmp.eq.s32.totalorder %s14, 1
    %p46 = por %p44, %p45
    %p47 = scmp.ne.s32.totalorder %s36, %s37
    %p48 = scmp.eq.s32.totalorder %s14, 0
    %p49 = por %p47, %p48
    %p50 = scmp.ne.s32.totalorder %s36, %s37
    %p51 = scmp.eq.s32.totalorder %s15, 1
    %p52 = por %p50, %p51
    %p54 = scmp.ne.s32.totalorder %s37, %s53
    %p55 = scmp.eq.s32.totalorder %s15, 0
    %p56 = por %p54, %p55
    %s57 = ssub.s32 %s17, %s24
    %p58 = scmp.eq.s32.totalorder %s57, 0
    %s60 = sadd.s32 %s59, 1
    %s61 = scalar_select %p58, %s59, %s60
    %p64 = pneg %p58
    %p65 = scmp.eq.s32.totalorder %s9, 1
    %p66 = por %p64, %p65
    %p67 = scmp.ne.s32.totalorder %s59, %s62
    %p68 = scmp.eq.s32.totalorder %s9, 0
    %p69 = por %p67, %p68
    %p70 = scmp.ne.s32.totalorder %s59, %s62
    %p71 = scmp.eq.s32.totalorder %s14, 1
    %p72 = por %p70, %p71
    %p73 = scmp.ne.s32.totalorder %s62, %s63
    %p74 = scmp.eq.s32.totalorder %s14, 0
    %p75 = por %p73, %p74
    %p76 = scmp.ne.s32.totalorder %s62, %s63
    %p77 = scmp.eq.s32.totalorder %s15, 1
    %p78 = por %p76, %p77
    %p80 = scmp.ne.s32.totalorder %s63, %s79
    %p81 = scmp.eq.s32.totalorder %s15, 0
    %p82 = por %p80, %p81
    %s83 = ssub.s32 %s17, %s24
    %p84 = scmp.eq.s32.totalorder %s83, 0
    %s86 = sadd.s32 %s85, 1
    %s87 = scalar_select %p84, %s85, %s86
    %p90 = pneg %p84
    %p91 = scmp.eq.s32.totalorder %s9, 1
    %p92 = por %p90, %p91
    %p93 = scmp.ne.s32.totalorder %s85, %s88
    %p94 = scmp.eq.s32.totalorder %s9, 0
    %p95 = por %p93, %p94
    %p96 = scmp.ne.s32.totalorder %s85, %s88
    %p97 = scmp.eq.s32.totalorder %s14, 1
    %p98 = por %p96, %p97
    %p99 = scmp.ne.s32.totalorder %s88, %s89
    %p100 = scmp.eq.s32.totalorder %s14, 0
    %p101 = por %p99, %p100
    %p102 = scmp.ne.s32.totalorder %s88, %s89
    %p103 = scmp.eq.s32.totalorder %s15, 1
    %p104 = por %p102, %p103
    %p106 = scmp.ne.s32.totalorder %s89, %s105
    %p107 = scmp.eq.s32.totalorder %s15, 0
    %p108 = por %p106, %p107
    %s109 = ssub.s32 %s16, %s28
    %s110 = ssub.s32 %s17, %s24
    %s111 = sor.u32 %s109, %s110
    %p112 = scmp.eq.s32.totalorder %s111, 0
    %s114 = sadd.s32 %s113, 1
    %s115 = scalar_select %p112, %s113, %s114
    %p118 = pneg %p112
    %p119 = scmp.eq.s32.totalorder %s9, 1
    %p120 = por %p118, %p119
    %p121 = scmp.ne.s32.totalorder %s113, %s116
    %p122 = scmp.eq.s32.totalorder %s9, 0
    %p123 = por %p121, %p122
    %p124 = scmp.ne.s32.totalorder %s113, %s116
    %p125 = scmp.eq.s32.totalorder %s14, 1
    %p126 = por %p124, %p125
    %p127 = scmp.ne.s32.totalorder %s116, %s117
    %p128 = scmp.eq.s32.totalorder %s14, 0
    %p129 = por %p127, %p128
    %p130 = scmp.ne.s32.totalorder %s116, %s117
    %p131 = scmp.eq.s32.totalorder %s15, 1
    %p132 = por %p130, %p131
    %p134 = scmp.ne.s32.totalorder %s117, %s133
    %p135 = scmp.eq.s32.totalorder %s15, 0
    %p136 = por %p134, %p135
    %p137 = scmp.le.s32.totalorder 1, %s9
    %p138 = scmp.lt.s32.totalorder %s9, 3
    %p139 = pnand %p137, %p138
    %p140 = pneg %p139
    // Predicated region
    $region9: #{patchgan_forward.10} parent=5 // pred_check
      _
    $region10: #{patchgan_forward.10} parent=5 // pred_check_branch
      %142 = sbr.rel (%p139) target = $region12
    $region11: #{patchgan_forward.10} parent=5 // pred_region
      %s143 = ssub.s32 %s9, 1
      // Predicated region
      $region13: #{patchgan_forward.10} parent=11 // pred_check
        %p144 = pneg %p75
      $region14: #{patchgan_forward.10} parent=11 // pred_check_branch
        %146 = sbr.rel (%p144) target = $region16
      $region15: #{patchgan_forward.10} parent=11 // pred_region
        %p147 = scmp.lt.s32.totalorder %s19, 0
        %s148 = scalar_select %p147, %s19, 0
        %s149 = scalar_lea.vmem %s1, %s148
      $region16: #{patchgan_forward.10} parent=11 // pred_fallthru
        _
      // Predicated region
      $region17: #{patchgan_forward.10} parent=11 // pred_check
        %p150 = pneg %p101
      $region18: #{patchgan_forward.10} parent=11 // pred_check_branch
        %152 = sbr.rel (%p150) target = $region20
      $region19: #{patchgan_forward.10} parent=11 // pred_region
        %p153 = scmp.lt.s32.totalorder %s19, 0
        %s154 = scalar_select %p153, %s19, 0
        %s155 = scalar_lea.vmem %s2, %s154
      $region20: #{patchgan_forward.10} parent=11 // pred_fallthru
        _
    $region12: #{patchgan_forward.10} parent=5 // pred_fallthru
      _
    %p156 = scmp.lt.s32.totalorder %s9, 2
    // Predicated region
    $region21: #{patchgan_forward.10} parent=5 // pred_check
      %p157 = pneg %p156
    $region22: #{patchgan_forward.10} parent=5 // pred_check_branch
      %159 = sbr.rel (%p157) target = $region24
    $region23: #{patchgan_forward.10} parent=5 // pred_region
      // Predicated region
      $region25: #{patchgan_forward.10} parent=23 // pred_check
        %p160 = pneg %p43
      $region26: #{patchgan_forward.10} parent=23 // pred_check_branch
        %162 = sbr.rel (%p160) target = $region28
      $region27: #{patchgan_forward.10} parent=23 // pred_region
        %s163 = smul.u32 8, %s16
        %p164 = scmp.lt.s32.totalorder %s163, 15
        %s165 = scalar_select %p164, %s163, 15
        %p166 = scmp.lt.s32.totalorder %s17, 0
        %s167 = scalar_select %p166, %s17, 0
        %s168 = sadd.s32 %s167, %s165
        %s169 = smul.addr %s168, 4
        %s170 = scalar_lea.vmem %s0, %s169
        %s171 = smul.u32 8, %s16
      $region28: #{patchgan_forward.10} parent=23 // pred_fallthru
        _
    $region24: #{patchgan_forward.10} parent=5 // pred_fallthru
      _
    %p172 = scmp.le.s32.totalorder 1, %s9
    %p173 = scmp.lt.s32.totalorder %s9, 3
    %p174 = pnand %p172, %p173
    %p175 = pneg %p174
    // Predicated region
    $region29: #{patchgan_forward.10} parent=5 // pred_check
      _
    $region30: #{patchgan_forward.10} parent=5 // pred_check_branch
      %177 = sbr.rel (%p174) target = $region32
    $region31: #{patchgan_forward.10} parent=5 // pred_region
      %s178 = ssub.s32 %s9, 1
      %s179 = smul.u32 8, %s18
      %p180 = scmp.lt.s32.totalorder %s179, 15
      %s181 = scalar_select %p180, %s179, 15
      %p182 = scmp.lt.s32.totalorder %s19, 0
      %s183 = scalar_select %p182, %s19, 0
      %s184 = sadd.s32 %s183, %s181
      %s185 = smul.addr %s184, 4
      %s186 = scalar_lea.vmem %s0, %s185
      %p187 = pneg %p49
      %p188 = pneg %p46
      %p189 = scmp.lt.s32.totalorder %s19, 0
      %s190 = scalar_select %p189, %s19, 0
      %s191 = scalar_lea.vmem %s1, %s190
      %p192 = pneg %p75
      %p193 = pneg %p72
      %p194 = scmp.lt.s32.totalorder %s19, 0
      %s195 = scalar_select %p194, %s19, 0
      %s196 = scalar_lea.vmem %s2, %s195
      %p197 = pneg %p101
      %p198 = pneg %p98
      %p199 = pneg %p129
      %p200 = pneg %p126
      %s201 = smul.u32 8, %s18
      %p202 = scmp.lt.s32.totalorder %s201, 15
      %s203 = scalar_select %p202, %s201, 15
      %p204 = scmp.lt.s32.totalorder %s19, 0
      %s205 = scalar_select %p204, %s19, 0
      %s206 = sadd.s32 %s205, %s203
      %s207 = smul.addr %s206, 4
      %s208 = scalar_lea.vmem %s3, %s207
      %s209 = smul.u32 8, %s18
      %p210 = scmp.lt.s32.totalorder %s209, 15
      %s211 = scalar_select %p210, %s209, 15
      %p212 = scmp.lt.s32.totalorder %s19, 0
      %s213 = scalar_select %p212, %s19, 0
      %s214 = sadd.s32 %s213, %s211
      %s215 = smul.addr %s214, 4
      %s216 = scalar_lea.vmem %s0, %s215
      %s217 = smul.u32 8, %s18
      %p218 = scmp.lt.s32.totalorder %s19, 0
      %s219 = scalar_select %p218, %s19, 0
      %s220 = scalar_lea.vmem %s1, %s219
      %p221 = scmp.lt.s32.totalorder %s19, 0
      %s222 = scalar_select %p221, %s19, 0
      %s223 = scalar_lea.vmem %s2, %s222
      %s224 = smul.u32 8, %s18
      %p225 = scmp.lt.s32.totalorder %s224, 15
      %s226 = scalar_select %p225, %s224, 15
      %p227 = scmp.lt.s32.totalorder %s19, 0
      %s228 = scalar_select %p227, %s19, 0
      %s229 = sadd.s32 %s228, %s226
      %s230 = smul.addr %s229, 4
      %s231 = scalar_lea.vmem %s3, %s230
      %s232 = smul.u32 8, %s18
      %v233 = vld [vmem:[%s216] sm:$0xf]
      %v234 = vld [vmem:[%s216 + $0x4] sm:$0xf]
      %v235 = vld [vmem:[%s216 + $0x8] sm:$0xf]
      %v236 = vld [vmem:[%s216 + $0xc] sm:$0xf]
      %v237 = vld [vmem:[%s216 + $0x10] sm:$0xf]
      %v238 = vld [vmem:[%s216 + $0x14] sm:$0xf]
      %v239 = vld [vmem:[%s216 + $0x18] sm:$0xf]
      %v240 = vld [vmem:[%s216 + $0x1c] sm:$0xf]
      %v241 = vunpack.c.l.bf16 %v233
      %v242 = vunpack.c.l.bf16 %v234
      %v243 = vunpack.c.l.bf16 %v235
      %v244 = vunpack.c.l.bf16 %v236
      %v245 = vunpack.c.l.bf16 %v237
      %v246 = vunpack.c.l.bf16 %v238
      %v247 = vunpack.c.l.bf16 %v239
      %v248 = vunpack.c.l.bf16 %v240
      %v249 = vld [vmem:[%s220] sm:$0x1]
      %v251 = vperm.slane %v249, 0
      %v253 = vmul.f32 %v241, %v251
      %v254 = vmul.f32 %v242, %v251
      %v255 = vmul.f32 %v243, %v251
      %v256 = vmul.f32 %v244, %v251
      %v257 = vmul.f32 %v245, %v251
      %v258 = vmul.f32 %v246, %v251
      %v259 = vmul.f32 %v247, %v251
      %v260 = vmul.f32 %v248, %v251
      %v261 = vld [vmem:[%s223] sm:$0x1]
      %v263 = vperm.slane %v261, 0
      %v265 = vadd.f32 %v253, %v263
      %v266 = vadd.f32 %v254, %v263
      %v267 = vadd.f32 %v255, %v263
      %v268 = vadd.f32 %v256, %v263
      %v269 = vadd.f32 %v257, %v263
      %v270 = vadd.f32 %v258, %v263
      %v271 = vadd.f32 %v259, %v263
      %v272 = vadd.f32 %v260, %v263
      %vm273 = vcmp.ge.f32.partialorder %v265, 0.0
      %vm274 = vcmp.ge.f32.partialorder %v266, 0.0
      %vm275 = vcmp.ge.f32.partialorder %v267, 0.0
      %vm276 = vcmp.ge.f32.partialorder %v268, 0.0
      %vm277 = vcmp.ge.f32.partialorder %v269, 0.0
      %vm278 = vcmp.ge.f32.partialorder %v270, 0.0
      %vm279 = vcmp.ge.f32.partialorder %v271, 0.0
      %vm280 = vcmp.ge.f32.partialorder %v272, 0.0
      %v281 = vmul.f32 %v265, 0.2
      %v282 = vmul.f32 %v266, 0.2
      %v283 = vmul.f32 %v267, 0.2
      %v284 = vmul.f32 %v268, 0.2
      %v285 = vmul.f32 %v269, 0.2
      %v286 = vmul.f32 %v270, 0.2
      %v287 = vmul.f32 %v271, 0.2
      %v288 = vmul.f32 %v272, 0.2
      %v289 = vsel %vm273, %v265, %v281
      %v290 = vsel %vm274, %v266, %v282
      %v291 = vsel %vm275, %v267, %v283
      %v292 = vsel %vm276, %v268, %v284
      %v293 = vsel %vm277, %v269, %v285
      %v294 = vsel %vm278, %v270, %v286
      %v295 = vsel %vm279, %v271, %v287
      %v296 = vsel %vm280, %v272, %v288
      %v297 = vpack.c.bf16 %v289, %v289
      %v298 = vpack.c.bf16 %v290, %v290
      %v299 = vpack.c.bf16 %v291, %v291
      %v300 = vpack.c.bf16 %v292, %v292
      %v301 = vpack.c.bf16 %v293, %v293
      %v302 = vpack.c.bf16 %v294, %v294
      %v303 = vpack.c.bf16 %v295, %v295
      %v304 = vpack.c.bf16 %v296, %v296
      %305 = vst [vmem:[%s231] sm:$0xf] %v297
      %306 = vst [vmem:[%s231 + $0x4] sm:$0xf] %v298
      %307 = vst [vmem:[%s231 + $0x8] sm:$0xf] %v299
      %308 = vst [vmem:[%s231 + $0xc] sm:$0xf] %v300
      %309 = vst [vmem:[%s231 + $0x10] sm:$0xf] %v301
      %310 = vst [vmem:[%s231 + $0x14] sm:$0xf] %v302
      %311 = vst [vmem:[%s231 + $0x18] sm:$0xf] %v303
      %312 = vst [vmem:[%s231 + $0x1c] sm:$0xf] %v304
      %s313 = smul.u32 8, %s18
      %p314 = scmp.lt.s32.totalorder %s313, 15
      %s315 = scalar_select %p314, %s313, 15
      %p316 = scmp.lt.s32.totalorder %s19, 0
      %s317 = scalar_select %p316, %s19, 0
      %s318 = sadd.s32 %s317, %s315
      %s319 = smul.addr %s318, 4
      %s320 = scalar_lea.vmem %s3, %s319
      // Predicated region
      $region33: #{patchgan_forward.10} parent=31 // pred_check
        %p321 = pneg %p126
      $region34: #{patchgan_forward.10} parent=31 // pred_check_branch
        %323 = sbr.rel (%p321) target = $region36
      $region35: #{patchgan_forward.10} parent=31 // pred_region
        %s324 = smul.u32 8, %s18
      $region36: #{patchgan_forward.10} parent=31 // pred_fallthru
        _
    $region32: #{patchgan_forward.10} parent=5 // pred_fallthru
      _
    %p325 = scmp.le.s32.totalorder 2, %s9
    // Predicated region
    $region37: #{patchgan_forward.10} parent=5 // pred_check
      %p326 = pneg %p325
    $region38: #{patchgan_forward.10} parent=5 // pred_check_branch
      %328 = sbr.rel (%p326) target = $region40
    $region39: #{patchgan_forward.10} parent=5 // pred_region
      %s329 = ssub.s32 %s9, 2
      // Predicated region
      $region41: #{patchgan_forward.10} parent=39 // pred_check
        %p330 = pneg %p132
      $region42: #{patchgan_forward.10} parent=39 // pred_check_branch
        %332 = sbr.rel (%p330) target = $region44
      $region43: #{patchgan_forward.10} parent=39 // pred_region
        %s333 = smul.u32 8, %s20
        %p334 = scmp.lt.s32.totalorder %s333, 15
        %s335 = scalar_select %p334, %s333, 15
        %p336 = scmp.lt.s32.totalorder %s21, 0
        %s337 = scalar_select %p336, %s21, 0
        %s338 = sadd.s32 %s337, %s335
        %s339 = smul.addr %s338, 4
        %s340 = scalar_lea.vmem %s3, %s339
      $region44: #{patchgan_forward.10} parent=39 // pred_fallthru
        _
    $region40: #{patchgan_forward.10} parent=5 // pred_fallthru
      _
  $region6: #{patchgan_forward.10} parent=0 // loop_footer
    %s13 = sadd.s32 1, %s9
  $region7: #{patchgan_forward.10} parent=0 // loop_footer_branch
    %8 = sbr.rel target = $region3
  $region8: #{patchgan_forward.10} parent=0 // loop_exit
    _

// kernel: patchgan_forward.9
$region0: #{patchgan_forward.9}
  #allocation0 [shape = 'u32[]', space=smem, size = 0x4, offset = 0x4, fixed_abs, tag = 'smem constant byte address 0x4 - core index']
  #allocation1 [shape = 'u32[72,128]{1,0:T(1,128)}', space=vmem, size = 0x9000, scoped, tag = 'internal scratch']
  #allocation2 [shape = 'f32[64,128]{1,0:T(8,128)}', space=vmem, size = 0x8000, scoped, tag = 'scratch operand']
  %s0 = inlined_call_operand.vmem [shape: bf16[128,128], index: 0, kind: input, shape index: {}]
  %s1 = inlined_call_operand.vmem [shape: bf16[128,128], index: 1, kind: input, shape index: {}]
  %s2 = inlined_call_operand.vmem [shape: bf16[128,128], index: 2, kind: output, shape index: {0}]
  %s3 = inlined_call_operand.vmem [shape: f32[16,128], index: 3, kind: output, shape index: {1}]
  %s4 = inlined_call_operand.vmem [shape: f32[16,128], index: 4, kind: output, shape index: {2}]
  %5 = xla_tuple %s2, %s3, %s4
  %s6 = sld [smem:[#allocation0]]
  $region65: #{patchgan_forward.9} parent=0
    _
  %s8 = ssub.s32 1, %s6
  %s9 = scalar_select 0, %s8, %s6
  loop: start=0, step=1, limit=4
  $region2: #{patchgan_forward.9} parent=0 // loop_pre_header
    _
  $region3: #{patchgan_forward.9} parent=0 // loop_header
    %s11 = sphi 0, %s15
    %p12 = scmp.ge.s32.totalorder %s11, 4
    %s18 = sphi 0, %s37
    %s19 = sphi 0, %s33
    %s20 = sphi 0, %s29
    %s21 = sphi 0, %s18
    %s22 = sphi 0, %s19
    %s23 = sphi 0, %s20
    %s24 = sphi 0, %s21
    %s25 = sphi 0, %s22
    %s26 = sphi 0, %s23
    %s42 = sphi 0, %s44
    %s45 = sphi 0, %s42
    %s46 = sphi 0, %s45
    %s62 = sphi 0, %s46
    %s70 = sphi 0, %s72
    %s73 = sphi 0, %s70
    %s74 = sphi 0, %s73
    %s90 = sphi 0, %s74
    %s98 = sphi 0, %s100
    %s101 = sphi 0, %s98
    %s102 = sphi 0, %s101
    %s118 = sphi 0, %s102
    %s126 = sphi 0, %s128
    %s129 = sphi 0, %s126
    %s130 = sphi 0, %s129
    %s146 = sphi 0, %s130
    %s154 = sphi 0, %s156
    %s157 = sphi 0, %s154
    %s158 = sphi 0, %s157
    %s174 = sphi 0, %s158
  $region4: #{patchgan_forward.9} parent=0 // loop_header_branch
    %14 = sbr.rel (%p12) target = $region8
  $region5: #{patchgan_forward.9} parent=0 // loop_body
    %s16 = ssub.s32 %s11, 1
    %s17 = ssub.s32 %s11, 2
    %s27 = sadd.s32 1, %s20
    %p28 = scmp.ge.s32.totalorder %s27, 1
    %s29 = scalar_select %p28, 0, %s27
    %s30 = sadd.s32 1, %s19
    %s31 = scalar_select %p28, %s30, %s19
    %p32 = scmp.ge.s32.totalorder %s31, 1
    %s33 = scalar_select %p32, 0, %s31
    %s34 = sadd.s32 1, %s18
    %s35 = scalar_select %p32, %s34, %s18
    %p36 = scmp.ge.s32.totalorder %s35, 2
    %s37 = scalar_select %p36, 0, %s35
    %s38 = ssub.s32 %s18, %s37
    %s39 = ssub.s32 %s20, %s29
    %s40 = sor.u32 %s38, %s39
    %p41 = scmp.eq.s32.totalorder %s40, 0
    %s43 = sadd.s32 %s42, 1
    %s44 = scalar_select %p41, %s42, %s43
    %p47 = pneg %p41
    %p48 = scmp.eq.s32.totalorder %s11, 1
    %p49 = por %p47, %p48
    %p50 = scmp.ne.s32.totalorder %s42, %s45
    %p51 = scmp.eq.s32.totalorder %s11, 0
    %p52 = por %p50, %p51
    %p53 = scmp.ne.s32.totalorder %s42, %s45
    %p54 = scmp.eq.s32.totalorder %s16, 1
    %p55 = por %p53, %p54
    %p56 = scmp.ne.s32.totalorder %s45, %s46
    %p57 = scmp.eq.s32.totalorder %s16, 0
    %p58 = por %p56, %p57
    %p59 = scmp.ne.s32.totalorder %s45, %s46
    %p60 = scmp.eq.s32.totalorder %s17, 1
    %p61 = por %p59, %p60
    %p63 = scmp.ne.s32.totalorder %s46, %s62
    %p64 = scmp.eq.s32.totalorder %s17, 0
    %p65 = por %p63, %p64
    %s66 = ssub.s32 %s20, %s29
    %s67 = ssub.s32 %s19, %s33
    %s68 = sor.u32 %s66, %s67
    %p69 = scmp.eq.s32.totalorder %s68, 0
    %s71 = sadd.s32 %s70, 1
    %s72 = scalar_select %p69, %s70, %s71
    %p75 = pneg %p69
    %p76 = scmp.eq.s32.totalorder %s11, 1
    %p77 = por %p75, %p76
    %p78 = scmp.ne.s32.totalorder %s70, %s73
    %p79 = scmp.eq.s32.totalorder %s11, 0
    %p80 = por %p78, %p79
    %p81 = scmp.ne.s32.totalorder %s70, %s73
    %p82 = scmp.eq.s32.totalorder %s16, 1
    %p83 = por %p81, %p82
    %p84 = scmp.ne.s32.totalorder %s73, %s74
    %p85 = scmp.eq.s32.totalorder %s16, 0
    %p86 = por %p84, %p85
    %p87 = scmp.ne.s32.totalorder %s73, %s74
    %p88 = scmp.eq.s32.totalorder %s17, 1
    %p89 = por %p87, %p88
    %p91 = scmp.ne.s32.totalorder %s74, %s90
    %p92 = scmp.eq.s32.totalorder %s17, 0
    %p93 = por %p91, %p92
    %s94 = ssub.s32 %s18, %s37
    %s95 = ssub.s32 %s19, %s33
    %s96 = sor.u32 %s94, %s95
    %p97 = scmp.eq.s32.totalorder %s96, 0
    %s99 = sadd.s32 %s98, 1
    %s100 = scalar_select %p97, %s98, %s99
    %p103 = pneg %p97
    %p104 = scmp.eq.s32.totalorder %s11, 1
    %p105 = por %p103, %p104
    %p106 = scmp.ne.s32.totalorder %s98, %s101
    %p107 = scmp.eq.s32.totalorder %s11, 0
    %p108 = por %p106, %p107
    %p109 = scmp.ne.s32.totalorder %s98, %s101
    %p110 = scmp.eq.s32.totalorder %s16, 1
    %p111 = por %p109, %p110
    %p112 = scmp.ne.s32.totalorder %s101, %s102
    %p113 = scmp.eq.s32.totalorder %s16, 0
    %p114 = por %p112, %p113
    %p115 = scmp.ne.s32.totalorder %s101, %s102
    %p116 = scmp.eq.s32.totalorder %s17, 1
    %p117 = por %p115, %p116
    %p119 = scmp.ne.s32.totalorder %s102, %s118
    %p120 = scmp.eq.s32.totalorder %s17, 0
    %p121 = por %p119, %p120
    %s122 = ssub.s32 %s18, %s37
    %s123 = ssub.s32 %s19, %s33
    %s124 = sor.u32 %s122, %s123
    %p125 = scmp.eq.s32.totalorder %s124, 0
    %s127 = sadd.s32 %s126, 1
    %s128 = scalar_select %p125, %s126, %s127
    %p131 = pneg %p125
    %p132 = scmp.eq.s32.totalorder %s11, 1
    %p133 = por %p131, %p132
    %p134 = scmp.ne.s32.totalorder %s126, %s129
    %p135 = scmp.eq.s32.totalorder %s11, 0
    %p136 = por %p134, %p135
    %p137 = scmp.ne.s32.totalorder %s126, %s129
    %p138 = scmp.eq.s32.totalorder %s16, 1
    %p139 = por %p137, %p138
    %p140 = scmp.ne.s32.totalorder %s129, %s130
    %p141 = scmp.eq.s32.totalorder %s16, 0
    %p142 = por %p140, %p141
    %p143 = scmp.ne.s32.totalorder %s129, %s130
    %p144 = scmp.eq.s32.totalorder %s17, 1
    %p145 = por %p143, %p144
    %p147 = scmp.ne.s32.totalorder %s130, %s146
    %p148 = scmp.eq.s32.totalorder %s17, 0
    %p149 = por %p147, %p148
    %s150 = ssub.s32 %s18, %s37
    %s151 = ssub.s32 %s19, %s33
    %s152 = sor.u32 %s150, %s151
    %p153 = scmp.eq.s32.totalorder %s152, 0
    %s155 = sadd.s32 %s154, 1
    %s156 = scalar_select %p153, %s154, %s155
    %p159 = pneg %p153
    %p160 = scmp.eq.s32.totalorder %s11, 1
    %p161 = por %p159, %p160
    %p162 = scmp.ne.s32.totalorder %s154, %s157
    %p163 = scmp.eq.s32.totalorder %s11, 0
    %p164 = por %p162, %p163
    %p165 = scmp.ne.s32.totalorder %s154, %s157
    %p166 = scmp.eq.s32.totalorder %s16, 1
    %p167 = por %p165, %p166
    %p168 = scmp.ne.s32.totalorder %s157, %s158
    %p169 = scmp.eq.s32.totalorder %s16, 0
    %p170 = por %p168, %p169
    %p171 = scmp.ne.s32.totalorder %s157, %s158
    %p172 = scmp.eq.s32.totalorder %s17, 1
    %p173 = por %p171, %p172
    %p175 = scmp.ne.s32.totalorder %s158, %s174
    %p176 = scmp.eq.s32.totalorder %s17, 0
    %p177 = por %p175, %p176
    %p178 = scmp.le.s32.totalorder 1, %s11
    %p179 = scmp.lt.s32.totalorder %s11, 3
    %p180 = pnand %p178, %p179
    %p181 = pneg %p180
    // Predicated region
    $region9: #{patchgan_forward.9} parent=5 // pred_check
      _
    $region10: #{patchgan_forward.9} parent=5 // pred_check_branch
      %183 = sbr.rel (%p180) target = $region12
    $region11: #{patchgan_forward.9} parent=5 // pred_region
      %s184 = ssub.s32 %s11, 1
      // Predicated region
      $region13: #{patchgan_forward.9} parent=11 // pred_check
        %p185 = pneg %p86
      $region14: #{patchgan_forward.9} parent=11 // pred_check_branch
        %187 = sbr.rel (%p185) target = $region16
      $region15: #{patchgan_forward.9} parent=11 // pred_region
        %s188 = smul.u32 16, %s23
        %p189 = scmp.lt.s32.totalorder %s188, 15
        %s190 = scalar_select %p189, %s188, 15
        %p191 = scmp.lt.s32.totalorder %s22, 0
        %s192 = scalar_select %p191, %s22, 0
        %s193 = sadd.s32 %s192, %s190
        %s194 = smul.addr %s193, 4
        %s195 = scalar_lea.vmem %s1, %s194
        %s196 = smul.u32 16, %s23
      $region16: #{patchgan_forward.9} parent=11 // pred_fallthru
        _
    $region12: #{patchgan_forward.9} parent=5 // pred_fallthru
      _
    %p197 = scmp.lt.s32.totalorder %s11, 2
    // Predicated region
    $region17: #{patchgan_forward.9} parent=5 // pred_check
      %p198 = pneg %p197
    $region18: #{patchgan_forward.9} parent=5 // pred_check_branch
      %200 = sbr.rel (%p198) target = $region20
    $region19: #{patchgan_forward.9} parent=5 // pred_region
      // Predicated region
      $region21: #{patchgan_forward.9} parent=19 // pred_check
        %p201 = pneg %p52
      $region22: #{patchgan_forward.9} parent=19 // pred_check_branch
        %203 = sbr.rel (%p201) target = $region24
      $region23: #{patchgan_forward.9} parent=19 // pred_region
        %s204 = smul.u32 8, %s18
        %p205 = scmp.lt.s32.totalorder %s204, 15
        %s206 = scalar_select %p205, %s204, 15
        %p207 = scmp.lt.s32.totalorder %s20, 0
        %s208 = scalar_select %p207, %s20, 0
        %s209 = sadd.s32 %s208, %s206
        %s210 = smul.addr %s209, 4
        %s211 = scalar_lea.vmem %s0, %s210
        %s212 = smul.u32 8, %s18
      $region24: #{patchgan_forward.9} parent=19 // pred_fallthru
        _
    $region20: #{patchgan_forward.9} parent=5 // pred_fallthru
      _
    %p213 = scmp.le.s32.totalorder 1, %s11
    %p214 = scmp.lt.s32.totalorder %s11, 3
    %p215 = pnand %p213, %p214
    %p216 = pneg %p215
    // Predicated region
    $region25: #{patchgan_forward.9} parent=5 // pred_check
      _
    $region26: #{patchgan_forward.9} parent=5 // pred_check_branch
      %218 = sbr.rel (%p215) target = $region28
    $region27: #{patchgan_forward.9} parent=5 // pred_region
      %s219 = ssub.s32 %s11, 1
      %s220 = smul.u32 8, %s21
      %p221 = scmp.lt.s32.totalorder %s220, 15
      %s222 = scalar_select %p221, %s220, 15
      %p223 = scmp.lt.s32.totalorder %s23, 0
      %s224 = scalar_select %p223, %s23, 0
      %s225 = sadd.s32 %s224, %s222
      %s226 = smul.addr %s225, 4
      %s227 = scalar_lea.vmem %s0, %s226
      %p228 = pneg %p58
      %p229 = pneg %p55
      %s230 = smul.u32 16, %s23
      %p231 = scmp.lt.s32.totalorder %s230, 15
      %s232 = scalar_select %p231, %s230, 15
      %p233 = scmp.lt.s32.totalorder %s22, 0
      %s234 = scalar_select %p233, %s22, 0
      %s235 = sadd.s32 %s234, %s232
      %s236 = smul.addr %s235, 4
      %s237 = scalar_lea.vmem %s1, %s236
      %p238 = pneg %p86
      %p239 = pneg %p83
      %p240 = pneg %p114
      %p241 = pneg %p111
      %s242 = smul.u32 8, %s21
      %p243 = scmp.lt.s32.totalorder %s242, 15
      %s244 = scalar_select %p243, %s242, 15
      %p245 = scmp.lt.s32.totalorder %s22, 0
      %s246 = scalar_select %p245, %s22, 0
      %s247 = sadd.s32 %s246, %s244
      %s248 = smul.addr %s247, 4
      %s249 = scalar_lea.vmem %s2, %s248
      %p250 = pneg %p142
      %p251 = pneg %p139
      %p252 = scmp.lt.s32.totalorder %s21, 1
      %s253 = scalar_select %p252, %s21, 1
      %p254 = scmp.lt.s32.totalorder %s22, 0
      %s255 = scalar_select %p254, %s22, 0
      %s256 = sadd.s32 %s255, %s253
      %s257 = smul.addr %s256, 8
      %s258 = scalar_lea.vmem %s3, %s257
      %p259 = pneg %p170
      %p260 = pneg %p167
      %p261 = scmp.lt.s32.totalorder %s21, 1
      %s262 = scalar_select %p261, %s21, 1
      %p263 = scmp.lt.s32.totalorder %s22, 0
      %s264 = scalar_select %p263, %s22, 0
      %s265 = sadd.s32 %s264, %s262
      %s266 = smul.addr %s265, 8
      %s267 = scalar_lea.vmem %s4, %s266
      %s268 = smul.u32 8, %s21
      %p269 = scmp.lt.s32.totalorder %s268, 15
      %s270 = scalar_select %p269, %s268, 15
      %p271 = scmp.lt.s32.totalorder %s23, 0
      %s272 = scalar_select %p271, %s23, 0
      %s273 = sadd.s32 %s272, %s270
      %s274 = smul.addr %s273, 4
      %s275 = scalar_lea.vmem %s0, %s274
      %s276 = smul.u32 8, %s21
      %s277 = smul.u32 16, %s23
      %p278 = scmp.lt.s32.totalorder %s277, 15
      %s279 = scalar_select %p278, %s277, 15
      %p280 = scmp.lt.s32.totalorder %s22, 0
      %s281 = scalar_select %p280, %s22, 0
      %s282 = sadd.s32 %s281, %s279
      %s283 = smul.addr %s282, 4
      %s284 = scalar_lea.vmem %s1, %s283
      %s285 = smul.u32 16, %s23
      %s286 = smul.u32 8, %s21
      %p287 = scmp.lt.s32.totalorder %s286, 15
      %s288 = scalar_select %p287, %s286, 15
      %p289 = scmp.lt.s32.totalorder %s22, 0
      %s290 = scalar_select %p289, %s22, 0
      %s291 = sadd.s32 %s290, %s288
      %s292 = smul.addr %s291, 4
      %s293 = scalar_lea.vmem %s2, %s292
      %s294 = smul.u32 8, %s21
      %p295 = scmp.lt.s32.totalorder %s21, 1
      %s296 = scalar_select %p295, %s21, 1
      %p297 = scmp.lt.s32.totalorder %s22, 0
      %s298 = scalar_select %p297, %s22, 0
      %s299 = sadd.s32 %s298, %s296
      %s300 = smul.addr %s299, 8
      %s301 = scalar_lea.vmem %s3, %s300
      %p302 = scmp.lt.s32.totalorder %s21, 1
      %s303 = scalar_select %p302, %s21, 1
      %p304 = scmp.lt.s32.totalorder %s22, 0
      %s305 = scalar_select %p304, %s22, 0
      %s306 = sadd.s32 %s305, %s303
      %s307 = smul.addr %s306, 8
      %s308 = scalar_lea.vmem %s4, %s307
      %p309 = scmp.eq.s32.totalorder %s23, 0
      // Predicated region
      $region29: #{patchgan_forward.9} parent=27 // pred_check
        %p310 = pneg %p309
      $region30: #{patchgan_forward.9} parent=27 // pred_check_branch
        %312 = sbr.rel (%p310) target = $region32
      $region31: #{patchgan_forward.9} parent=27 // pred_region
        %313 = vst [vmem:[#allocation2] sm:$0xff] 0.0
        %314 = vst [vmem:[#allocation2 + $0x8] sm:$0xff] 0.0
        %315 = vst [vmem:[#allocation2 + $0x10] sm:$0xff] 0.0
        %316 = vst [vmem:[#allocation2 + $0x18] sm:$0xff] 0.0
        %317 = vst [vmem:[#allocation2 + $0x20] sm:$0xff] 0.0
        %318 = vst [vmem:[#allocation2 + $0x28] sm:$0xff] 0.0
        %319 = vst [vmem:[#allocation2 + $0x30] sm:$0xff] 0.0
        %320 = vst [vmem:[#allocation2 + $0x38] sm:$0xff] 0.0
      $region32: #{patchgan_forward.9} parent=27 // pred_fallthru
        _
      %v321 = vld [vmem:[#allocation2] sm:$0xff]
      %v322 = vld [vmem:[#allocation2 + $0x8] sm:$0xff]
      %v323 = vld [vmem:[#allocation2 + $0x10] sm:$0xff]
      %v324 = vld [vmem:[#allocation2 + $0x18] sm:$0xff]
      %v325 = vld [vmem:[#allocation2 + $0x20] sm:$0xff]
      %v326 = vld [vmem:[#allocation2 + $0x28] sm:$0xff]
      %v327 = vld [vmem:[#allocation2 + $0x30] sm:$0xff]
      %v328 = vld [vmem:[#allocation2 + $0x38] sm:$0xff]
      %v329 = vld [vmem:[%s275] sm:$0xf]
      %v330 = vld [vmem:[%s275 + $0x4] sm:$0xf]
      %v331 = vld [vmem:[%s275 + $0x8] sm:$0xf]
      %v332 = vld [vmem:[%s275 + $0xc] sm:$0xf]
      %v333 = vld [vmem:[%s275 + $0x10] sm:$0xf]
      %v334 = vld [vmem:[%s275 + $0x14] sm:$0xf]
      %v335 = vld [vmem:[%s275 + $0x18] sm:$0xf]
      %v336 = vld [vmem:[%s275 + $0x1c] sm:$0xf]
      %v337 = vld [vmem:[%s284] sm:$0xf]
      %v338 = vld [vmem:[%s284 + $0x4] sm:$0xf]
      %v339 = vld [vmem:[%s284 + $0x8] sm:$0xf]
      %v340 = vld [vmem:[%s284 + $0xc] sm:$0xf]
      %v341 = vld [vmem:[%s284 + $0x10] sm:$0xf]
      %v342 = vld [vmem:[%s284 + $0x14] sm:$0xf]
      %v343 = vld [vmem:[%s284 + $0x18] sm:$0xf]
      %v344 = vld [vmem:[%s284 + $0x1c] sm:$0xf]
      %v345 = vld [vmem:[%s284 + $0x20] sm:$0xf]
      %v346 = vld [vmem:[%s284 + $0x24] sm:$0xf]
      %v347 = vld [vmem:[%s284 + $0x28] sm:$0xf]
      %v348 = vld [vmem:[%s284 + $0x2c] sm:$0xf]
      %v349 = vld [vmem:[%s284 + $0x30] sm:$0xf]
      %v350 = vld [vmem:[%s284 + $0x34] sm:$0xf]
      %v351 = vld [vmem:[%s284 + $0x38] sm:$0xf]
      %v352 = vld [vmem:[%s284 + $0x3c] sm:$0xf]
      %v361 = vunpack.c.l.b16 %v329
      %v362 = vunpack.c.l.b16 %v330
      %v363 = vunpack.c.l.b16 %v331
      %v364 = vunpack.c.l.b16 %v332
      %v365 = vunpack.c.l.b16 %v333
      %v366 = vunpack.c.l.b16 %v334
      %v367 = vunpack.c.l.b16 %v335
      %v368 = vunpack.c.l.b16 %v336
      %v369 = vpack.c.b16 %v362, %v361
      %v370 = vpack.c.b16 %v364, %v363
      %v371 = vpack.c.b16 %v366, %v365
      %v372 = vpack.c.b16 %v368, %v367
      %v393 = vunpack.c.l.b16 %v337
      %v394 = vunpack.c.l.b16 %v338
      %v395 = vunpack.c.l.b16 %v339
      %v396 = vunpack.c.l.b16 %v340
      %v397 = vunpack.c.l.b16 %v341
      %v398 = vunpack.c.l.b16 %v342
      %v399 = vunpack.c.l.b16 %v343
      %v400 = vunpack.c.l.b16 %v344
      %v401 = vunpack.c.l.b16 %v345
      %v402 = vunpack.c.l.b16 %v346
      %v403 = vunpack.c.l.b16 %v347
      %v404 = vunpack.c.l.b16 %v348
      %v405 = vunpack.c.l.b16 %v349
      %v406 = vunpack.c.l.b16 %v350
      %v407 = vunpack.c.l.b16 %v351
      %v408 = vunpack.c.l.b16 %v352
      %v409 = vpack.c.b16 %v394, %v393
      %v410 = vpack.c.b16 %v396, %v395
      %v411 = vpack.c.b16 %v398, %v397
      %v412 = vpack.c.b16 %v400, %v399
      %v413 = vpack.c.b16 %v402, %v401
      %v414 = vpack.c.b16 %v404, %v403
      %v415 = vpack.c.b16 %v406, %v405
      %v416 = vpack.c.b16 %v408, %v407
      %425 = vmatpush.bf16.msra.mxu0 %v416
      %426 = vmatpush.bf16.msra.mxu0 %v415
      %427 = vmatpush.bf16.msra.mxu0 %v414
      %428 = vmatpush.bf16.msra.mxu0 %v413
      %429 = vmatpush.bf16.msra.mxu0 %v412
      %430 = vmatpush.bf16.msra.mxu0 %v411
      %431 = vmatpush.bf16.msra.mxu0 %v410
      %432 = vmatpush.bf16.msra.mxu0 %v409
      %433 = vmatmul.bf16.gmra.mxu0 %v369
      %v434 = vpop.f32.mrf.mxu0
      %v435 = vadd.f32 0.0, %v434
      %v436 = vpop.f32.mrf.mxu0
      %v437 = vadd.f32 0.0, %v436
      %438 = vmatmul.bf16.gmra.mxu0 %v370
      %v439 = vpop.f32.mrf.mxu0
      %v440 = vadd.f32 0.0, %v439
      %v441 = vpop.f32.mrf.mxu0
      %v442 = vadd.f32 0.0, %v441
      %443 = vmatmul.bf16.gmra.mxu0 %v371
      %v444 = vpop.f32.mrf.mxu0
      %v445 = vadd.f32 0.0, %v444
      %v446 = vpop.f32.mrf.mxu0
      %v447 = vadd.f32 0.0, %v446
      %448 = vmatmul.bf16.gmra.mxu0 %v372
      %v449 = vpop.f32.mrf.mxu0
      %v450 = vadd.f32 0.0, %v449
      %v451 = vpop.f32.mrf.mxu0
      %v452 = vadd.f32 0.0, %v451
      %453 = vdwg.mxu0
      %v454 = vadd.f32 %v321, %v435
      %v455 = vadd.f32 %v322, %v437
      %v456 = vadd.f32 %v323, %v440
      %v457 = vadd.f32 %v324, %v442
      %v458 = vadd.f32 %v325, %v445
      %v459 = vadd.f32 %v326, %v447
      %v460 = vadd.f32 %v327, %v450
      %v461 = vadd.f32 %v328, %v452
      %462 = vst [vmem:[#allocation2] sm:$0xff] %v454
      %463 = vst [vmem:[#allocation2 + $0x8] sm:$0xff] %v455
      %464 = vst [vmem:[#allocation2 + $0x10] sm:$0xff] %v456
      %465 = vst [vmem:[#allocation2 + $0x18] sm:$0xff] %v457
      %466 = vst [vmem:[#allocation2 + $0x20] sm:$0xff] %v458
      %467 = vst [vmem:[#allocation2 + $0x28] sm:$0xff] %v459
      %468 = vst [vmem:[#allocation2 + $0x30] sm:$0xff] %v460
      %469 = vst [vmem:[#allocation2 + $0x38] sm:$0xff] %v461
      // Predicated region
      $region33: #{patchgan_forward.9} parent=27 // pred_check
        %p470 = pneg %p309
      $region34: #{patchgan_forward.9} parent=27 // pred_check_branch
        %472 = sbr.rel (%p470) target = $region36
      $region35: #{patchgan_forward.9} parent=27 // pred_region
        %v473 = vld [vmem:[#allocation2] sm:$0xff]
        %v474 = vld [vmem:[#allocation2 + $0x8] sm:$0xff]
        %v475 = vld [vmem:[#allocation2 + $0x10] sm:$0xff]
        %v476 = vld [vmem:[#allocation2 + $0x18] sm:$0xff]
        %v477 = vld [vmem:[#allocation2 + $0x20] sm:$0xff]
        %v478 = vld [vmem:[#allocation2 + $0x28] sm:$0xff]
        %v479 = vld [vmem:[#allocation2 + $0x30] sm:$0xff]
        %v480 = vld [vmem:[#allocation2 + $0x38] sm:$0xff]
        %v481 = vpack.c.bf16 %v473, %v473
        %v482 = vpack.c.bf16 %v474, %v474
        %v483 = vpack.c.bf16 %v475, %v475
        %v484 = vpack.c.bf16 %v476, %v476
        %v485 = vpack.c.bf16 %v477, %v477
        %v486 = vpack.c.bf16 %v478, %v478
        %v487 = vpack.c.bf16 %v479, %v479
        %v488 = vpack.c.bf16 %v480, %v480
        %489 = vst [vmem:[%s293] sm:$0xf] %v481
        %490 = vst [vmem:[%s293 + $0x4] sm:$0xf] %v482
        %491 = vst [vmem:[%s293 + $0x8] sm:$0xf] %v483
        %492 = vst [vmem:[%s293 + $0xc] sm:$0xf] %v484
        %493 = vst [vmem:[%s293 + $0x10] sm:$0xf] %v485
        %494 = vst [vmem:[%s293 + $0x14] sm:$0xf] %v486
        %495 = vst [vmem:[%s293 + $0x18] sm:$0xf] %v487
        %496 = vst [vmem:[%s293 + $0x1c] sm:$0xf] %v488
        %v497 = vadd.f32 %v473, %v474
        %v498 = vadd.f32 %v497, %v475
        %v499 = vadd.f32 %v498, %v476
        %v500 = vadd.f32 %v499, %v477
        %v501 = vadd.f32 %v500, %v478
        %v502 = vadd.f32 %v501, %v479
        %v503 = vadd.f32 %v502, %v480
        %v504 = vrot.slane %v503, 4
        %v505 = vadd.f32 %v503, %v504
        %v506 = vrot.slane %v505, 2
        %v507 = vadd.f32 %v505, %v506
        %v508 = vrot.slane %v507, 1
        %v509 = vadd.f32 %v507, %v508
        %v510 = vmul.f32 %v509, 0.125
        %v511 = vmul.f32 %v473, %v473
        %v512 = vmul.f32 %v474, %v474
        %v513 = vmul.f32 %v475, %v475
        %v514 = vmul.f32 %v476, %v476
        %v515 = vmul.f32 %v477, %v477
        %v516 = vmul.f32 %v478, %v478
        %v517 = vmul.f32 %v479, %v479
        %v518 = vmul.f32 %v480, %v480
        %v519 = vadd.f32 %v511, %v512
        %v520 = vadd.f32 %v519, %v513
        %v521 = vadd.f32 %v520, %v514
        %v522 = vadd.f32 %v521, %v515
        %v523 = vadd.f32 %v522, %v516
        %v524 = vadd.f32 %v523, %v517
        %v525 = vadd.f32 %v524, %v518
        %v526 = vrot.slane %v525, 4
        %v527 = vadd.f32 %v525, %v526
        %v528 = vrot.slane %v527, 2
        %v529 = vadd.f32 %v527, %v528
        %v530 = vrot.slane %v529, 1
        %v531 = vadd.f32 %v529, %v530
        %v532 = vmul.f32 %v531, 0.125
        %533 = vst [vmem:[%s301] sm:$0xff] %v510
        %534 = vst [vmem:[%s308] sm:$0xff] %v532
      $region36: #{patchgan_forward.9} parent=27 // pred_fallthru
        _
      %s535 = smul.u32 8, %s21
      %p536 = scmp.lt.s32.totalorder %s535, 15
      %s537 = scalar_select %p536, %s535, 15
      %p538 = scmp.lt.s32.totalorder %s22, 0
      %s539 = scalar_select %p538, %s22, 0
      %s540 = sadd.s32 %s539, %s537
      %s541 = smul.addr %s540, 4
      %s542 = scalar_lea.vmem %s2, %s541
      %p543 = scmp.lt.s32.totalorder %s21, 1
      %s544 = scalar_select %p543, %s21, 1
      %p545 = scmp.lt.s32.totalorder %s22, 0
      %s546 = scalar_select %p545, %s22, 0
      %s547 = sadd.s32 %s546, %s544
      %s548 = smul.addr %s547, 8
      %s549 = scalar_lea.vmem %s3, %s548
      %p550 = scmp.lt.s32.totalorder %s21, 1
      %s551 = scalar_select %p550, %s21, 1
      %p552 = scmp.lt.s32.totalorder %s22, 0
      %s553 = scalar_select %p552, %s22, 0
      %s554 = sadd.s32 %s553, %s551
      %s555 = smul.addr %s554, 8
      %s556 = scalar_lea.vmem %s4, %s555
      // Predicated region
      $region37: #{patchgan_forward.9} parent=27 // pred_check
        %p557 = pneg %p111
      $region38: #{patchgan_forward.9} parent=27 // pred_check_branch
        %559 = sbr.rel (%p557) target = $region40
      $region39: #{patchgan_forward.9} parent=27 // pred_region
        %s560 = smul.u32 8, %s21
      $region40: #{patchgan_forward.9} parent=27 // pred_fallthru
        _
      // Predicated region
      $region41: #{patchgan_forward.9} parent=27 // pred_check
        %p561 = pneg %p139
      $region42: #{patchgan_forward.9} parent=27 // pred_check_branch
        %563 = sbr.rel (%p561) target = $region44
      $region43: #{patchgan_forward.9} parent=27 // pred_region
        _
      $region44: #{patchgan_forward.9} parent=27 // pred_fallthru
        _
      // Predicated region
      $region45: #{patchgan_forward.9} parent=27 // pred_check
        %p564 = pneg %p167
      $region46: #{patchgan_forward.9} parent=27 // pred_check_branch
        %566 = sbr.rel (%p564) target = $region48
      $region47: #{patchgan_forward.9} parent=27 // pred_region
        _
      $region48: #{patchgan_forward.9} parent=27 // pred_fallthru
        _
    $region28: #{patchgan_forward.9} parent=5 // pred_fallthru
      _
    %p567 = scmp.le.s32.totalorder 2, %s11
    // Predicated region
    $region49: #{patchgan_forward.9} parent=5 // pred_check
      %p568 = pneg %p567
    $region50: #{patchgan_forward.9} parent=5 // pred_check_branch
      %570 = sbr.rel (%p568) target = $region52
    $region51: #{patchgan_forward.9} parent=5 // pred_region
      %s571 = ssub.s32 %s11, 2
      // Predicated region
      $region53: #{patchgan_forward.9} parent=51 // pred_check
        %p572 = pneg %p117
      $region54: #{patchgan_forward.9} parent=51 // pred_check_branch
        %574 = sbr.rel (%p572) target = $region56
      $region55: #{patchgan_forward.9} parent=51 // pred_region
        %s575 = smul.u32 8, %s24
        %p576 = scmp.lt.s32.totalorder %s575, 15
        %s577 = scalar_select %p576, %s575, 15
        %p578 = scmp.lt.s32.totalorder %s25, 0
        %s579 = scalar_select %p578, %s25, 0
        %s580 = sadd.s32 %s579, %s577
        %s581 = smul.addr %s580, 4
        %s582 = scalar_lea.vmem %s2, %s581
      $region56: #{patchgan_forward.9} parent=51 // pred_fallthru
        _
      // Predicated region
      $region57: #{patchgan_forward.9} parent=51 // pred_check
        %p583 = pneg %p145
      $region58: #{patchgan_forward.9} parent=51 // pred_check_branch
        %585 = sbr.rel (%p583) target = $region60
      $region59: #{patchgan_forward.9} parent=51 // pred_region
        %p586 = scmp.lt.s32.totalorder %s24, 1
        %s587 = scalar_select %p586, %s24, 1
        %p588 = scmp.lt.s32.totalorder %s25, 0
        %s589 = scalar_select %p588, %s25, 0
        %s590 = sadd.s32 %s589, %s587
        %s591 = smul.addr %s590, 8
        %s592 = scalar_lea.vmem %s3, %s591
      $region60: #{patchgan_forward.9} parent=51 // pred_fallthru
        _
      // Predicated region
      $region61: #{patchgan_forward.9} parent=51 // pred_check
        %p593 = pneg %p173
      $region62: #{patchgan_forward.9} parent=51 // pred_check_branch
        %595 = sbr.rel (%p593) target = $region64
      $region63: #{patchgan_forward.9} parent=51 // pred_region
        %p596 = scmp.lt.s32.totalorder %s24, 1
        %s597 = scalar_select %p596, %s24, 1
        %p598 = scmp.lt.s32.totalorder %s25, 0
        %s599 = scalar_select %p598, %s25, 0
        %s600 = sadd.s32 %s599, %s597
        %s601 = smul.addr %s600, 8
        %s602 = scalar_lea.vmem %s4, %s601
      $region64: #{patchgan_forward.9} parent=51 // pred_fallthru
        _
    $region52: #{patchgan_forward.9} parent=5 // pred_fallthru
      _
  $region6: #{patchgan_forward.9} parent=0 // loop_footer
    %s15 = sadd.s32 1, %s11
  $region7: #{patchgan_forward.9} parent=0 // loop_footer_branch
    %10 = sbr.rel target = $region3
  $region8: #{patchgan_forward.9} parent=0 // loop_exit
    _

// kernel: patchgan_forward.12
$region0: #{patchgan_forward.12}
  #allocation0 [shape = 'u32[]', space=smem, size = 0x4, offset = 0x4, fixed_abs, tag = 'smem constant byte address 0x4 - core index']
  #allocation1 [shape = 'u32[72,128]{1,0:T(1,128)}', space=vmem, size = 0x9000, scoped, tag = 'internal scratch']
  %s0 = inlined_call_operand.vmem [shape: bf16[32,128], index: 0, kind: input, shape index: {}]
  %s1 = inlined_call_operand.vmem [shape: f32[1,128], index: 1, kind: input, shape index: {}]
  %s2 = inlined_call_operand.vmem [shape: f32[1,128], index: 2, kind: input, shape index: {}]
  %s3 = inlined_call_operand.vmem [shape: bf16[32,128], index: 3, kind: output, shape index: {}]
  %s4 = sld [smem:[#allocation0]]
  $region45: #{patchgan_forward.12} parent=0
    _
  %s6 = ssub.s32 1, %s4
  %s7 = scalar_select 0, %s6, %s4
  loop: start=0, step=1, limit=4
  $region2: #{patchgan_forward.12} parent=0 // loop_pre_header
    _
  $region3: #{patchgan_forward.12} parent=0 // loop_header
    %s9 = sphi 0, %s13
    %p10 = scmp.ge.s32.totalorder %s9, 4
    %s16 = sphi 0, %s28
    %s17 = sphi 0, %s24
    %s18 = sphi 0, %s16
    %s19 = sphi 0, %s17
    %s20 = sphi 0, %s18
    %s21 = sphi 0, %s19
    %s33 = sphi 0, %s35
    %s36 = sphi 0, %s33
    %s37 = sphi 0, %s36
    %s53 = sphi 0, %s37
    %s59 = sphi 0, %s61
    %s62 = sphi 0, %s59
    %s63 = sphi 0, %s62
    %s79 = sphi 0, %s63
    %s85 = sphi 0, %s87
    %s88 = sphi 0, %s85
    %s89 = sphi 0, %s88
    %s105 = sphi 0, %s89
    %s113 = sphi 0, %s115
    %s116 = sphi 0, %s113
    %s117 = sphi 0, %s116
    %s133 = sphi 0, %s117
  $region4: #{patchgan_forward.12} parent=0 // loop_header_branch
    %12 = sbr.rel (%p10) target = $region8
  $region5: #{patchgan_forward.12} parent=0 // loop_body
    %s14 = ssub.s32 %s9, 1
    %s15 = ssub.s32 %s9, 2
    %s22 = sadd.s32 1, %s17
    %p23 = scmp.ge.s32.totalorder %s22, 1
    %s24 = scalar_select %p23, 0, %s22
    %s25 = sadd.s32 1, %s16
    %s26 = scalar_select %p23, %s25, %s16
    %p27 = scmp.ge.s32.totalorder %s26, 2
    %s28 = scalar_select %p27, 0, %s26
    %s29 = ssub.s32 %s16, %s28
    %s30 = ssub.s32 %s17, %s24
    %s31 = sor.u32 %s29, %s30
    %p32 = scmp.eq.s32.totalorder %s31, 0
    %s34 = sadd.s32 %s33, 1
    %s35 = scalar_select %p32, %s33, %s34
    %p38 = pneg %p32
    %p39 = scmp.eq.s32.totalorder %s9, 1
    %p40 = por %p38, %p39
    %p41 = scmp.ne.s32.totalorder %s33, %s36
    %p42 = scmp.eq.s32.totalorder %s9, 0
    %p43 = por %p41, %p42
    %p44 = scmp.ne.s32.totalorder %s33, %s36
    %p45 = scmp.eq.s32.totalorder %s14, 1
    %p46 = por %p44, %p45
    %p47 = scmp.ne.s32.totalorder %s36, %s37
    %p48 = scmp.eq.s32.totalorder %s14, 0
    %p49 = por %p47, %p48
    %p50 = scmp.ne.s32.totalorder %s36, %s37
    %p51 = scmp.eq.s32.totalorder %s15, 1
    %p52 = por %p50, %p51
    %p54 = scmp.ne.s32.totalorder %s37, %s53
    %p55 = scmp.eq.s32.totalorder %s15, 0
    %p56 = por %p54, %p55
    %s57 = ssub.s32 %s17, %s24
    %p58 = scmp.eq.s32.totalorder %s57, 0
    %s60 = sadd.s32 %s59, 1
    %s61 = scalar_select %p58, %s59, %s60
    %p64 = pneg %p58
    %p65 = scmp.eq.s32.totalorder %s9, 1
    %p66 = por %p64, %p65
    %p67 = scmp.ne.s32.totalorder %s59, %s62
    %p68 = scmp.eq.s32.totalorder %s9, 0
    %p69 = por %p67, %p68
    %p70 = scmp.ne.s32.totalorder %s59, %s62
    %p71 = scmp.eq.s32.totalorder %s14, 1
    %p72 = por %p70, %p71
    %p73 = scmp.ne.s32.totalorder %s62, %s63
    %p74 = scmp.eq.s32.totalorder %s14, 0
    %p75 = por %p73, %p74
    %p76 = scmp.ne.s32.totalorder %s62, %s63
    %p77 = scmp.eq.s32.totalorder %s15, 1
    %p78 = por %p76, %p77
    %p80 = scmp.ne.s32.totalorder %s63, %s79
    %p81 = scmp.eq.s32.totalorder %s15, 0
    %p82 = por %p80, %p81
    %s83 = ssub.s32 %s17, %s24
    %p84 = scmp.eq.s32.totalorder %s83, 0
    %s86 = sadd.s32 %s85, 1
    %s87 = scalar_select %p84, %s85, %s86
    %p90 = pneg %p84
    %p91 = scmp.eq.s32.totalorder %s9, 1
    %p92 = por %p90, %p91
    %p93 = scmp.ne.s32.totalorder %s85, %s88
    %p94 = scmp.eq.s32.totalorder %s9, 0
    %p95 = por %p93, %p94
    %p96 = scmp.ne.s32.totalorder %s85, %s88
    %p97 = scmp.eq.s32.totalorder %s14, 1
    %p98 = por %p96, %p97
    %p99 = scmp.ne.s32.totalorder %s88, %s89
    %p100 = scmp.eq.s32.totalorder %s14, 0
    %p101 = por %p99, %p100
    %p102 = scmp.ne.s32.totalorder %s88, %s89
    %p103 = scmp.eq.s32.totalorder %s15, 1
    %p104 = por %p102, %p103
    %p106 = scmp.ne.s32.totalorder %s89, %s105
    %p107 = scmp.eq.s32.totalorder %s15, 0
    %p108 = por %p106, %p107
    %s109 = ssub.s32 %s16, %s28
    %s110 = ssub.s32 %s17, %s24
    %s111 = sor.u32 %s109, %s110
    %p112 = scmp.eq.s32.totalorder %s111, 0
    %s114 = sadd.s32 %s113, 1
    %s115 = scalar_select %p112, %s113, %s114
    %p118 = pneg %p112
    %p119 = scmp.eq.s32.totalorder %s9, 1
    %p120 = por %p118, %p119
    %p121 = scmp.ne.s32.totalorder %s113, %s116
    %p122 = scmp.eq.s32.totalorder %s9, 0
    %p123 = por %p121, %p122
    %p124 = scmp.ne.s32.totalorder %s113, %s116
    %p125 = scmp.eq.s32.totalorder %s14, 1
    %p126 = por %p124, %p125
    %p127 = scmp.ne.s32.totalorder %s116, %s117
    %p128 = scmp.eq.s32.totalorder %s14, 0
    %p129 = por %p127, %p128
    %p130 = scmp.ne.s32.totalorder %s116, %s117
    %p131 = scmp.eq.s32.totalorder %s15, 1
    %p132 = por %p130, %p131
    %p134 = scmp.ne.s32.totalorder %s117, %s133
    %p135 = scmp.eq.s32.totalorder %s15, 0
    %p136 = por %p134, %p135
    %p137 = scmp.le.s32.totalorder 1, %s9
    %p138 = scmp.lt.s32.totalorder %s9, 3
    %p139 = pnand %p137, %p138
    %p140 = pneg %p139
    // Predicated region
    $region9: #{patchgan_forward.12} parent=5 // pred_check
      _
    $region10: #{patchgan_forward.12} parent=5 // pred_check_branch
      %142 = sbr.rel (%p139) target = $region12
    $region11: #{patchgan_forward.12} parent=5 // pred_region
      %s143 = ssub.s32 %s9, 1
      // Predicated region
      $region13: #{patchgan_forward.12} parent=11 // pred_check
        %p144 = pneg %p75
      $region14: #{patchgan_forward.12} parent=11 // pred_check_branch
        %146 = sbr.rel (%p144) target = $region16
      $region15: #{patchgan_forward.12} parent=11 // pred_region
        %p147 = scmp.lt.s32.totalorder %s19, 0
        %s148 = scalar_select %p147, %s19, 0
        %s149 = scalar_lea.vmem %s1, %s148
      $region16: #{patchgan_forward.12} parent=11 // pred_fallthru
        _
      // Predicated region
      $region17: #{patchgan_forward.12} parent=11 // pred_check
        %p150 = pneg %p101
      $region18: #{patchgan_forward.12} parent=11 // pred_check_branch
        %152 = sbr.rel (%p150) target = $region20
      $region19: #{patchgan_forward.12} parent=11 // pred_region
        %p153 = scmp.lt.s32.totalorder %s19, 0
        %s154 = scalar_select %p153, %s19, 0
        %s155 = scalar_lea.vmem %s2, %s154
      $region20: #{patchgan_forward.12} parent=11 // pred_fallthru
        _
    $region12: #{patchgan_forward.12} parent=5 // pred_fallthru
      _
    %p156 = scmp.lt.s32.totalorder %s9, 2
    // Predicated region
    $region21: #{patchgan_forward.12} parent=5 // pred_check
      %p157 = pneg %p156
    $region22: #{patchgan_forward.12} parent=5 // pred_check_branch
      %159 = sbr.rel (%p157) target = $region24
    $region23: #{patchgan_forward.12} parent=5 // pred_region
      // Predicated region
      $region25: #{patchgan_forward.12} parent=23 // pred_check
        %p160 = pneg %p43
      $region26: #{patchgan_forward.12} parent=23 // pred_check_branch
        %162 = sbr.rel (%p160) target = $region28
      $region27: #{patchgan_forward.12} parent=23 // pred_region
        %s163 = smul.u32 2, %s16
        %p164 = scmp.lt.s32.totalorder %s163, 3
        %s165 = scalar_select %p164, %s163, 3
        %p166 = scmp.lt.s32.totalorder %s17, 0
        %s167 = scalar_select %p166, %s17, 0
        %s168 = sadd.s32 %s167, %s165
        %s169 = smul.addr %s168, 4
        %s170 = scalar_lea.vmem %s0, %s169
        %s171 = smul.u32 2, %s16
      $region28: #{patchgan_forward.12} parent=23 // pred_fallthru
        _
    $region24: #{patchgan_forward.12} parent=5 // pred_fallthru
      _
    %p172 = scmp.le.s32.totalorder 1, %s9
    %p173 = scmp.lt.s32.totalorder %s9, 3
    %p174 = pnand %p172, %p173
    %p175 = pneg %p174
    // Predicated region
    $region29: #{patchgan_forward.12} parent=5 // pred_check
      _
    $region30: #{patchgan_forward.12} parent=5 // pred_check_branch
      %177 = sbr.rel (%p174) target = $region32
    $region31: #{patchgan_forward.12} parent=5 // pred_region
      %s178 = ssub.s32 %s9, 1
      %s179 = smul.u32 2, %s18
      %p180 = scmp.lt.s32.totalorder %s179, 3
      %s181 = scalar_select %p180, %s179, 3
      %p182 = scmp.lt.s32.totalorder %s19, 0
      %s183 = scalar_select %p182, %s19, 0
      %s184 = sadd.s32 %s183, %s181
      %s185 = smul.addr %s184, 4
      %s186 = scalar_lea.vmem %s0, %s185
      %p187 = pneg %p49
      %p188 = pneg %p46
      %p189 = scmp.lt.s32.totalorder %s19, 0
      %s190 = scalar_select %p189, %s19, 0
      %s191 = scalar_lea.vmem %s1, %s190
      %p192 = pneg %p75
      %p193 = pneg %p72
      %p194 = scmp.lt.s32.totalorder %s19, 0
      %s195 = scalar_select %p194, %s19, 0
      %s196 = scalar_lea.vmem %s2, %s195
      %p197 = pneg %p101
      %p198 = pneg %p98
      %p199 = pneg %p129
      %p200 = pneg %p126
      %s201 = smul.u32 2, %s18
      %p202 = scmp.lt.s32.totalorder %s201, 3
      %s203 = scalar_select %p202, %s201, 3
      %p204 = scmp.lt.s32.totalorder %s19, 0
      %s205 = scalar_select %p204, %s19, 0
      %s206 = sadd.s32 %s205, %s203
      %s207 = smul.addr %s206, 4
      %s208 = scalar_lea.vmem %s3, %s207
      %s209 = smul.u32 2, %s18
      %p210 = scmp.lt.s32.totalorder %s209, 3
      %s211 = scalar_select %p210, %s209, 3
      %p212 = scmp.lt.s32.totalorder %s19, 0
      %s213 = scalar_select %p212, %s19, 0
      %s214 = sadd.s32 %s213, %s211
      %s215 = smul.addr %s214, 4
      %s216 = scalar_lea.vmem %s0, %s215
      %s217 = smul.u32 2, %s18
      %p218 = scmp.lt.s32.totalorder %s19, 0
      %s219 = scalar_select %p218, %s19, 0
      %s220 = scalar_lea.vmem %s1, %s219
      %p221 = scmp.lt.s32.totalorder %s19, 0
      %s222 = scalar_select %p221, %s19, 0
      %s223 = scalar_lea.vmem %s2, %s222
      %s224 = smul.u32 2, %s18
      %p225 = scmp.lt.s32.totalorder %s224, 3
      %s226 = scalar_select %p225, %s224, 3
      %p227 = scmp.lt.s32.totalorder %s19, 0
      %s228 = scalar_select %p227, %s19, 0
      %s229 = sadd.s32 %s228, %s226
      %s230 = smul.addr %s229, 4
      %s231 = scalar_lea.vmem %s3, %s230
      %s232 = smul.u32 2, %s18
      %v233 = vld [vmem:[%s216] sm:$0xf]
      %v234 = vld [vmem:[%s216 + $0x4] sm:$0xf]
      %v235 = vunpack.c.l.bf16 %v233
      %v236 = vunpack.c.l.bf16 %v234
      %v237 = vld [vmem:[%s220] sm:$0x1]
      %v239 = vperm.slane %v237, 0
      %v241 = vmul.f32 %v235, %v239
      %v242 = vmul.f32 %v236, %v239
      %v243 = vld [vmem:[%s223] sm:$0x1]
      %v245 = vperm.slane %v243, 0
      %v247 = vadd.f32 %v241, %v245
      %v248 = vadd.f32 %v242, %v245
      %vm249 = vcmp.ge.f32.partialorder %v247, 0.0
      %vm250 = vcmp.ge.f32.partialorder %v248, 0.0
      %v251 = vmul.f32 %v247, 0.2
      %v252 = vmul.f32 %v248, 0.2
      %v253 = vsel %vm249, %v247, %v251
      %v254 = vsel %vm250, %v248, %v252
      %v255 = vpack.c.bf16 %v253, %v253
      %v256 = vpack.c.bf16 %v254, %v254
      %257 = vst [vmem:[%s231] sm:$0xf] %v255
      %258 = vst [vmem:[%s231 + $0x4] sm:$0xf] %v256
      %s259 = smul.u32 2, %s18
      %p260 = scmp.lt.s32.totalorder %s259, 3
      %s261 = scalar_select %p260, %s259, 3
      %p262 = scmp.lt.s32.totalorder %s19, 0
      %s263 = scalar_select %p262, %s19, 0
      %s264 = sadd.s32 %s263, %s261
      %s265 = smul.addr %s264, 4
      %s266 = scalar_lea.vmem %s3, %s265
      // Predicated region
      $region33: #{patchgan_forward.12} parent=31 // pred_check
        %p267 = pneg %p126
      $region34: #{patchgan_forward.12} parent=31 // pred_check_branch
        %269 = sbr.rel (%p267) target = $region36
      $region35: #{patchgan_forward.12} parent=31 // pred_region
        %s270 = smul.u32 2, %s18
      $region36: #{patchgan_forward.12} parent=31 // pred_fallthru
        _
    $region32: #{patchgan_forward.12} parent=5 // pred_fallthru
      _
    %p271 = scmp.le.s32.totalorder 2, %s9
    // Predicated region
    $region37: #{patchgan_forward.12} parent=5 // pred_check
      %p272 = pneg %p271
    $region38: #{patchgan_forward.12} parent=5 // pred_check_branch
      %274 = sbr.rel (%p272) target = $region40
    $region39: #{patchgan_forward.12} parent=5 // pred_region
      %s275 = ssub.s32 %s9, 2
      // Predicated region
      $region41: #{patchgan_forward.12} parent=39 // pred_check
        %p276 = pneg %p132
      $region42: #{patchgan_forward.12} parent=39 // pred_check_branch
        %278 = sbr.rel (%p276) target = $region44
      $region43: #{patchgan_forward.12} parent=39 // pred_region
        %s279 = smul.u32 2, %s20
        %p280 = scmp.lt.s32.totalorder %s279, 3
        %s281 = scalar_select %p280, %s279, 3
        %p282 = scmp.lt.s32.totalorder %s21, 0
        %s283 = scalar_select %p282, %s21, 0
        %s284 = sadd.s32 %s283, %s281
        %s285 = smul.addr %s284, 4
        %s286 = scalar_lea.vmem %s3, %s285
      $region44: #{patchgan_forward.12} parent=39 // pred_fallthru
        _
    $region40: #{patchgan_forward.12} parent=5 // pred_fallthru
      _
  $region6: #{patchgan_forward.12} parent=0 // loop_footer
    %s13 = sadd.s32 1, %s9
  $region7: #{patchgan_forward.12} parent=0 // loop_footer_branch
    %8 = sbr.rel target = $region3
  $region8: #{patchgan_forward.12} parent=0 // loop_exit
    _

// kernel: patchgan_forward.11
$region0: #{patchgan_forward.11}
  #allocation0 [shape = 'u32[]', space=smem, size = 0x4, offset = 0x4, fixed_abs, tag = 'smem constant byte address 0x4 - core index']
  #allocation1 [shape = 'u32[72,128]{1,0:T(1,128)}', space=vmem, size = 0x9000, scoped, tag = 'internal scratch']
  #allocation2 [shape = 'f32[16,128]{1,0:T(8,128)}', space=vmem, size = 0x2000, scoped, tag = 'scratch operand']
  %s0 = inlined_call_operand.vmem [shape: bf16[32,256], index: 0, kind: input, shape index: {}]
  %s1 = inlined_call_operand.vmem [shape: bf16[256,128], index: 1, kind: input, shape index: {}]
  %s2 = inlined_call_operand.vmem [shape: bf16[32,128], index: 2, kind: output, shape index: {0}]
  %s3 = inlined_call_operand.vmem [shape: f32[16,128], index: 3, kind: output, shape index: {1}]
  %s4 = inlined_call_operand.vmem [shape: f32[16,128], index: 4, kind: output, shape index: {2}]
  %5 = xla_tuple %s2, %s3, %s4
  %s6 = sld [smem:[#allocation0]]
  $region65: #{patchgan_forward.11} parent=0
    _
  %s8 = ssub.s32 1, %s6
  %s9 = scalar_select 0, %s8, %s6
  loop: start=0, step=1, limit=4
  $region2: #{patchgan_forward.11} parent=0 // loop_pre_header
    _
  $region3: #{patchgan_forward.11} parent=0 // loop_header
    %s11 = sphi 0, %s15
    %p12 = scmp.ge.s32.totalorder %s11, 4
    %s18 = sphi 0, %s37
    %s19 = sphi 0, %s33
    %s20 = sphi 0, %s29
    %s21 = sphi 0, %s18
    %s22 = sphi 0, %s19
    %s23 = sphi 0, %s20
    %s24 = sphi 0, %s21
    %s25 = sphi 0, %s22
    %s26 = sphi 0, %s23
    %s42 = sphi 0, %s44
    %s45 = sphi 0, %s42
    %s46 = sphi 0, %s45
    %s62 = sphi 0, %s46
    %s70 = sphi 0, %s72
    %s73 = sphi 0, %s70
    %s74 = sphi 0, %s73
    %s90 = sphi 0, %s74
    %s98 = sphi 0, %s100
    %s101 = sphi 0, %s98
    %s102 = sphi 0, %s101
    %s118 = sphi 0, %s102
    %s126 = sphi 0, %s128
    %s129 = sphi 0, %s126
    %s130 = sphi 0, %s129
    %s146 = sphi 0, %s130
    %s154 = sphi 0, %s156
    %s157 = sphi 0, %s154
    %s158 = sphi 0, %s157
    %s174 = sphi 0, %s158
  $region4: #{patchgan_forward.11} parent=0 // loop_header_branch
    %14 = sbr.rel (%p12) target = $region8
  $region5: #{patchgan_forward.11} parent=0 // loop_body
    %s16 = ssub.s32 %s11, 1
    %s17 = ssub.s32 %s11, 2
    %s27 = sadd.s32 1, %s20
    %p28 = scmp.ge.s32.totalorder %s27, 1
    %s29 = scalar_select %p28, 0, %s27
    %s30 = sadd.s32 1, %s19
    %s31 = scalar_select %p28, %s30, %s19
    %p32 = scmp.ge.s32.totalorder %s31, 1
    %s33 = scalar_select %p32, 0, %s31
    %s34 = sadd.s32 1, %s18
    %s35 = scalar_select %p32, %s34, %s18
    %p36 = scmp.ge.s32.totalorder %s35, 2
    %s37 = scalar_select %p36, 0, %s35
    %s38 = ssub.s32 %s18, %s37
    %s39 = ssub.s32 %s20, %s29
    %s40 = sor.u32 %s38, %s39
    %p41 = scmp.eq.s32.totalorder %s40, 0
    %s43 = sadd.s32 %s42, 1
    %s44 = scalar_select %p41, %s42, %s43
    %p47 = pneg %p41
    %p48 = scmp.eq.s32.totalorder %s11, 1
    %p49 = por %p47, %p48
    %p50 = scmp.ne.s32.totalorder %s42, %s45
    %p51 = scmp.eq.s32.totalorder %s11, 0
    %p52 = por %p50, %p51
    %p53 = scmp.ne.s32.totalorder %s42, %s45
    %p54 = scmp.eq.s32.totalorder %s16, 1
    %p55 = por %p53, %p54
    %p56 = scmp.ne.s32.totalorder %s45, %s46
    %p57 = scmp.eq.s32.totalorder %s16, 0
    %p58 = por %p56, %p57
    %p59 = scmp.ne.s32.totalorder %s45, %s46
    %p60 = scmp.eq.s32.totalorder %s17, 1
    %p61 = por %p59, %p60
    %p63 = scmp.ne.s32.totalorder %s46, %s62
    %p64 = scmp.eq.s32.totalorder %s17, 0
    %p65 = por %p63, %p64
    %s66 = ssub.s32 %s20, %s29
    %s67 = ssub.s32 %s19, %s33
    %s68 = sor.u32 %s66, %s67
    %p69 = scmp.eq.s32.totalorder %s68, 0
    %s71 = sadd.s32 %s70, 1
    %s72 = scalar_select %p69, %s70, %s71
    %p75 = pneg %p69
    %p76 = scmp.eq.s32.totalorder %s11, 1
    %p77 = por %p75, %p76
    %p78 = scmp.ne.s32.totalorder %s70, %s73
    %p79 = scmp.eq.s32.totalorder %s11, 0
    %p80 = por %p78, %p79
    %p81 = scmp.ne.s32.totalorder %s70, %s73
    %p82 = scmp.eq.s32.totalorder %s16, 1
    %p83 = por %p81, %p82
    %p84 = scmp.ne.s32.totalorder %s73, %s74
    %p85 = scmp.eq.s32.totalorder %s16, 0
    %p86 = por %p84, %p85
    %p87 = scmp.ne.s32.totalorder %s73, %s74
    %p88 = scmp.eq.s32.totalorder %s17, 1
    %p89 = por %p87, %p88
    %p91 = scmp.ne.s32.totalorder %s74, %s90
    %p92 = scmp.eq.s32.totalorder %s17, 0
    %p93 = por %p91, %p92
    %s94 = ssub.s32 %s18, %s37
    %s95 = ssub.s32 %s19, %s33
    %s96 = sor.u32 %s94, %s95
    %p97 = scmp.eq.s32.totalorder %s96, 0
    %s99 = sadd.s32 %s98, 1
    %s100 = scalar_select %p97, %s98, %s99
    %p103 = pneg %p97
    %p104 = scmp.eq.s32.totalorder %s11, 1
    %p105 = por %p103, %p104
    %p106 = scmp.ne.s32.totalorder %s98, %s101
    %p107 = scmp.eq.s32.totalorder %s11, 0
    %p108 = por %p106, %p107
    %p109 = scmp.ne.s32.totalorder %s98, %s101
    %p110 = scmp.eq.s32.totalorder %s16, 1
    %p111 = por %p109, %p110
    %p112 = scmp.ne.s32.totalorder %s101, %s102
    %p113 = scmp.eq.s32.totalorder %s16, 0
    %p114 = por %p112, %p113
    %p115 = scmp.ne.s32.totalorder %s101, %s102
    %p116 = scmp.eq.s32.totalorder %s17, 1
    %p117 = por %p115, %p116
    %p119 = scmp.ne.s32.totalorder %s102, %s118
    %p120 = scmp.eq.s32.totalorder %s17, 0
    %p121 = por %p119, %p120
    %s122 = ssub.s32 %s18, %s37
    %s123 = ssub.s32 %s19, %s33
    %s124 = sor.u32 %s122, %s123
    %p125 = scmp.eq.s32.totalorder %s124, 0
    %s127 = sadd.s32 %s126, 1
    %s128 = scalar_select %p125, %s126, %s127
    %p131 = pneg %p125
    %p132 = scmp.eq.s32.totalorder %s11, 1
    %p133 = por %p131, %p132
    %p134 = scmp.ne.s32.totalorder %s126, %s129
    %p135 = scmp.eq.s32.totalorder %s11, 0
    %p136 = por %p134, %p135
    %p137 = scmp.ne.s32.totalorder %s126, %s129
    %p138 = scmp.eq.s32.totalorder %s16, 1
    %p139 = por %p137, %p138
    %p140 = scmp.ne.s32.totalorder %s129, %s130
    %p141 = scmp.eq.s32.totalorder %s16, 0
    %p142 = por %p140, %p141
    %p143 = scmp.ne.s32.totalorder %s129, %s130
    %p144 = scmp.eq.s32.totalorder %s17, 1
    %p145 = por %p143, %p144
    %p147 = scmp.ne.s32.totalorder %s130, %s146
    %p148 = scmp.eq.s32.totalorder %s17, 0
    %p149 = por %p147, %p148
    %s150 = ssub.s32 %s18, %s37
    %s151 = ssub.s32 %s19, %s33
    %s152 = sor.u32 %s150, %s151
    %p153 = scmp.eq.s32.totalorder %s152, 0
    %s155 = sadd.s32 %s154, 1
    %s156 = scalar_select %p153, %s154, %s155
    %p159 = pneg %p153
    %p160 = scmp.eq.s32.totalorder %s11, 1
    %p161 = por %p159, %p160
    %p162 = scmp.ne.s32.totalorder %s154, %s157
    %p163 = scmp.eq.s32.totalorder %s11, 0
    %p164 = por %p162, %p163
    %p165 = scmp.ne.s32.totalorder %s154, %s157
    %p166 = scmp.eq.s32.totalorder %s16, 1
    %p167 = por %p165, %p166
    %p168 = scmp.ne.s32.totalorder %s157, %s158
    %p169 = scmp.eq.s32.totalorder %s16, 0
    %p170 = por %p168, %p169
    %p171 = scmp.ne.s32.totalorder %s157, %s158
    %p172 = scmp.eq.s32.totalorder %s17, 1
    %p173 = por %p171, %p172
    %p175 = scmp.ne.s32.totalorder %s158, %s174
    %p176 = scmp.eq.s32.totalorder %s17, 0
    %p177 = por %p175, %p176
    %p178 = scmp.le.s32.totalorder 1, %s11
    %p179 = scmp.lt.s32.totalorder %s11, 3
    %p180 = pnand %p178, %p179
    %p181 = pneg %p180
    // Predicated region
    $region9: #{patchgan_forward.11} parent=5 // pred_check
      _
    $region10: #{patchgan_forward.11} parent=5 // pred_check_branch
      %183 = sbr.rel (%p180) target = $region12
    $region11: #{patchgan_forward.11} parent=5 // pred_region
      %s184 = ssub.s32 %s11, 1
      // Predicated region
      $region13: #{patchgan_forward.11} parent=11 // pred_check
        %p185 = pneg %p86
      $region14: #{patchgan_forward.11} parent=11 // pred_check_branch
        %187 = sbr.rel (%p185) target = $region16
      $region15: #{patchgan_forward.11} parent=11 // pred_region
        %s188 = smul.u32 32, %s23
        %p189 = scmp.lt.s32.totalorder %s188, 31
        %s190 = scalar_select %p189, %s188, 31
        %p191 = scmp.lt.s32.totalorder %s22, 0
        %s192 = scalar_select %p191, %s22, 0
        %s193 = sadd.s32 %s192, %s190
        %s194 = smul.addr %s193, 4
        %s195 = scalar_lea.vmem %s1, %s194
        %s196 = smul.u32 32, %s23
      $region16: #{patchgan_forward.11} parent=11 // pred_fallthru
        _
    $region12: #{patchgan_forward.11} parent=5 // pred_fallthru
      _
    %p197 = scmp.lt.s32.totalorder %s11, 2
    // Predicated region
    $region17: #{patchgan_forward.11} parent=5 // pred_check
      %p198 = pneg %p197
    $region18: #{patchgan_forward.11} parent=5 // pred_check_branch
      %200 = sbr.rel (%p198) target = $region20
    $region19: #{patchgan_forward.11} parent=5 // pred_region
      // Predicated region
      $region21: #{patchgan_forward.11} parent=19 // pred_check
        %p201 = pneg %p52
      $region22: #{patchgan_forward.11} parent=19 // pred_check_branch
        %203 = sbr.rel (%p201) target = $region24
      $region23: #{patchgan_forward.11} parent=19 // pred_region
        %s204 = smul.u32 2, %s18
        %s205 = smul.u32 2, %s20
        %p206 = scmp.lt.s32.totalorder %s204, 3
        %s207 = scalar_select %p206, %s204, 3
        %p208 = scmp.lt.s32.totalorder %s205, 1
        %s209 = scalar_select %p208, %s205, 1
        %s210 = smul.addr %s207, 2
        %s211 = sadd.s32 %s209, %s210
        %s212 = smul.addr %s211, 4
        %s213 = scalar_lea.vmem %s0, %s212
        %s214 = smul.u32 2, %s18
        %s215 = smul.u32 2, %s20
      $region24: #{patchgan_forward.11} parent=19 // pred_fallthru
        _
    $region20: #{patchgan_forward.11} parent=5 // pred_fallthru
      _
    %p216 = scmp.le.s32.totalorder 1, %s11
    %p217 = scmp.lt.s32.totalorder %s11, 3
    %p218 = pnand %p216, %p217
    %p219 = pneg %p218
    // Predicated region
    $region25: #{patchgan_forward.11} parent=5 // pred_check
      _
    $region26: #{patchgan_forward.11} parent=5 // pred_check_branch
      %221 = sbr.rel (%p218) target = $region28
    $region27: #{patchgan_forward.11} parent=5 // pred_region
      %s222 = ssub.s32 %s11, 1
      %s223 = smul.u32 2, %s21
      %s224 = smul.u32 2, %s23
      %p225 = scmp.lt.s32.totalorder %s223, 3
      %s226 = scalar_select %p225, %s223, 3
      %p227 = scmp.lt.s32.totalorder %s224, 1
      %s228 = scalar_select %p227, %s224, 1
      %s229 = smul.addr %s226, 2
      %s230 = sadd.s32 %s228, %s229
      %s231 = smul.addr %s230, 4
      %s232 = scalar_lea.vmem %s0, %s231
      %p233 = pneg %p58
      %p234 = pneg %p55
      %s235 = smul.u32 32, %s23
      %p236 = scmp.lt.s32.totalorder %s235, 31
      %s237 = scalar_select %p236, %s235, 31
      %p238 = scmp.lt.s32.totalorder %s22, 0
      %s239 = scalar_select %p238, %s22, 0
      %s240 = sadd.s32 %s239, %s237
      %s241 = smul.addr %s240, 4
      %s242 = scalar_lea.vmem %s1, %s241
      %p243 = pneg %p86
      %p244 = pneg %p83
      %p245 = pneg %p114
      %p246 = pneg %p111
      %s247 = smul.u32 2, %s21
      %p248 = scmp.lt.s32.totalorder %s247, 3
      %s249 = scalar_select %p248, %s247, 3
      %p250 = scmp.lt.s32.totalorder %s22, 0
      %s251 = scalar_select %p250, %s22, 0
      %s252 = sadd.s32 %s251, %s249
      %s253 = smul.addr %s252, 4
      %s254 = scalar_lea.vmem %s2, %s253
      %p255 = pneg %p142
      %p256 = pneg %p139
      %p257 = scmp.lt.s32.totalorder %s21, 1
      %s258 = scalar_select %p257, %s21, 1
      %p259 = scmp.lt.s32.totalorder %s22, 0
      %s260 = scalar_select %p259, %s22, 0
      %s261 = sadd.s32 %s260, %s258
      %s262 = smul.addr %s261, 8
      %s263 = scalar_lea.vmem %s3, %s262
      %p264 = pneg %p170
      %p265 = pneg %p167
      %p266 = scmp.lt.s32.totalorder %s21, 1
      %s267 = scalar_select %p266, %s21, 1
      %p268 = scmp.lt.s32.totalorder %s22, 0
      %s269 = scalar_select %p268, %s22, 0
      %s270 = sadd.s32 %s269, %s267
      %s271 = smul.addr %s270, 8
      %s272 = scalar_lea.vmem %s4, %s271
      %s273 = smul.u32 2, %s21
      %s274 = smul.u32 2, %s23
      %p275 = scmp.lt.s32.totalorder %s273, 3
      %s276 = scalar_select %p275, %s273, 3
      %p277 = scmp.lt.s32.totalorder %s274, 1
      %s278 = scalar_select %p277, %s274, 1
      %s279 = smul.addr %s276, 2
      %s280 = sadd.s32 %s278, %s279
      %s281 = smul.addr %s280, 4
      %s282 = scalar_lea.vmem %s0, %s281
      %s283 = smul.u32 2, %s21
      %s284 = smul.u32 2, %s23
      %s285 = smul.u32 32, %s23
      %p286 = scmp.lt.s32.totalorder %s285, 31
      %s287 = scalar_select %p286, %s285, 31
      %p288 = scmp.lt.s32.totalorder %s22, 0
      %s289 = scalar_select %p288, %s22, 0
      %s290 = sadd.s32 %s289, %s287
      %s291 = smul.addr %s290, 4
      %s292 = scalar_lea.vmem %s1, %s291
      %s293 = smul.u32 32, %s23
      %s294 = smul.u32 2, %s21
      %p295 = scmp.lt.s32.totalorder %s294, 3
      %s296 = scalar_select %p295, %s294, 3
      %p297 = scmp.lt.s32.totalorder %s22, 0
      %s298 = scalar_select %p297, %s22, 0
      %s299 = sadd.s32 %s298, %s296
      %s300 = smul.addr %s299, 4
      %s301 = scalar_lea.vmem %s2, %s300
      %s302 = smul.u32 2, %s21
      %p303 = scmp.lt.s32.totalorder %s21, 1
      %s304 = scalar_select %p303, %s21, 1
      %p305 = scmp.lt.s32.totalorder %s22, 0
      %s306 = scalar_select %p305, %s22, 0
      %s307 = sadd.s32 %s306, %s304
      %s308 = smul.addr %s307, 8
      %s309 = scalar_lea.vmem %s3, %s308
      %p310 = scmp.lt.s32.totalorder %s21, 1
      %s311 = scalar_select %p310, %s21, 1
      %p312 = scmp.lt.s32.totalorder %s22, 0
      %s313 = scalar_select %p312, %s22, 0
      %s314 = sadd.s32 %s313, %s311
      %s315 = smul.addr %s314, 8
      %s316 = scalar_lea.vmem %s4, %s315
      %p317 = scmp.eq.s32.totalorder %s23, 0
      // Predicated region
      $region29: #{patchgan_forward.11} parent=27 // pred_check
        %p318 = pneg %p317
      $region30: #{patchgan_forward.11} parent=27 // pred_check_branch
        %320 = sbr.rel (%p318) target = $region32
      $region31: #{patchgan_forward.11} parent=27 // pred_region
        %321 = vst [vmem:[#allocation2] sm:$0xff] 0.0
        %322 = vst [vmem:[#allocation2 + $0x8] sm:$0xff] 0.0
      $region32: #{patchgan_forward.11} parent=27 // pred_fallthru
        _
      %v323 = vld [vmem:[#allocation2] sm:$0xff]
      %v324 = vld [vmem:[#allocation2 + $0x8] sm:$0xff]
      %v325 = vld [vmem:[%s282] sm:$0xff]
      %v326 = vld [vmem:[%s282 + $0x8] sm:$0xff]
      %v327 = vld [vmem:[%s292] sm:$0xf]
      %v328 = vld [vmem:[%s292 + $0x4] sm:$0xf]
      %v329 = vld [vmem:[%s292 + $0x8] sm:$0xf]
      %v330 = vld [vmem:[%s292 + $0xc] sm:$0xf]
      %v331 = vld [vmem:[%s292 + $0x10] sm:$0xf]
      %v332 = vld [vmem:[%s292 + $0x14] sm:$0xf]
      %v333 = vld [vmem:[%s292 + $0x18] sm:$0xf]
      %v334 = vld [vmem:[%s292 + $0x1c] sm:$0xf]
      %v335 = vld [vmem:[%s292 + $0x20] sm:$0xf]
      %v336 = vld [vmem:[%s292 + $0x24] sm:$0xf]
      %v337 = vld [vmem:[%s292 + $0x28] sm:$0xf]
      %v338 = vld [vmem:[%s292 + $0x2c] sm:$0xf]
      %v339 = vld [vmem:[%s292 + $0x30] sm:$0xf]
      %v340 = vld [vmem:[%s292 + $0x34] sm:$0xf]
      %v341 = vld [vmem:[%s292 + $0x38] sm:$0xf]
      %v342 = vld [vmem:[%s292 + $0x3c] sm:$0xf]
      %v343 = vld [vmem:[%s292 + $0x40] sm:$0xf]
      %v344 = vld [vmem:[%s292 + $0x44] sm:$0xf]
      %v345 = vld [vmem:[%s292 + $0x48] sm:$0xf]
      %v346 = vld [vmem:[%s292 + $0x4c] sm:$0xf]
      %v347 = vld [vmem:[%s292 + $0x50] sm:$0xf]
      %v348 = vld [vmem:[%s292 + $0x54] sm:$0xf]
      %v349 = vld [vmem:[%s292 + $0x58] sm:$0xf]
      %v350 = vld [vmem:[%s292 + $0x5c] sm:$0xf]
      %v351 = vld [vmem:[%s292 + $0x60] sm:$0xf]
      %v352 = vld [vmem:[%s292 + $0x64] sm:$0xf]
      %v353 = vld [vmem:[%s292 + $0x68] sm:$0xf]
      %v354 = vld [vmem:[%s292 + $0x6c] sm:$0xf]
      %v355 = vld [vmem:[%s292 + $0x70] sm:$0xf]
      %v356 = vld [vmem:[%s292 + $0x74] sm:$0xf]
      %v357 = vld [vmem:[%s292 + $0x78] sm:$0xf]
      %v358 = vld [vmem:[%s292 + $0x7c] sm:$0xf]
      %v361 = vunpack.c.l.b16 %v325
      %v362 = vunpack.c.h.b16 %v325
      %v363 = vunpack.c.l.b16 %v326
      %v364 = vunpack.c.h.b16 %v326
      %v365 = vpack.c.b16 %v363, %v361
      %v366 = vpack.c.b16 %v364, %v362
      %v401 = vunpack.c.l.b16 %v327
      %v402 = vunpack.c.l.b16 %v328
      %v403 = vunpack.c.l.b16 %v329
      %v404 = vunpack.c.l.b16 %v330
      %v405 = vunpack.c.l.b16 %v331
      %v406 = vunpack.c.l.b16 %v332
      %v407 = vunpack.c.l.b16 %v333
      %v408 = vunpack.c.l.b16 %v334
      %v409 = vunpack.c.l.b16 %v335
      %v410 = vunpack.c.l.b16 %v336
      %v411 = vunpack.c.l.b16 %v337
      %v412 = vunpack.c.l.b16 %v338
      %v413 = vunpack.c.l.b16 %v339
      %v414 = vunpack.c.l.b16 %v340
      %v415 = vunpack.c.l.b16 %v341
      %v416 = vunpack.c.l.b16 %v342
      %v417 = vunpack.c.l.b16 %v343
      %v418 = vunpack.c.l.b16 %v344
      %v419 = vunpack.c.l.b16 %v345
      %v420 = vunpack.c.l.b16 %v346
      %v421 = vunpack.c.l.b16 %v347
      %v422 = vunpack.c.l.b16 %v348
      %v423 = vunpack.c.l.b16 %v349
      %v424 = vunpack.c.l.b16 %v350
      %v425 = vunpack.c.l.b16 %v351
      %v426 = vunpack.c.l.b16 %v352
      %v427 = vunpack.c.l.b16 %v353
      %v428 = vunpack.c.l.b16 %v354
      %v429 = vunpack.c.l.b16 %v355
      %v430 = vunpack.c.l.b16 %v356
      %v431 = vunpack.c.l.b16 %v357
      %v432 = vunpack.c.l.b16 %v358
      %v433 = vpack.c.b16 %v402, %v401
      %v434 = vpack.c.b16 %v404, %v403
      %v435 = vpack.c.b16 %v406, %v405
      %v436 = vpack.c.b16 %v408, %v407
      %v437 = vpack.c.b16 %v410, %v409
      %v438 = vpack.c.b16 %v412, %v411
      %v439 = vpack.c.b16 %v414, %v413
      %v440 = vpack.c.b16 %v416, %v415
      %v441 = vpack.c.b16 %v418, %v417
      %v442 = vpack.c.b16 %v420, %v419
      %v443 = vpack.c.b16 %v422, %v421
      %v444 = vpack.c.b16 %v424, %v423
      %v445 = vpack.c.b16 %v426, %v425
      %v446 = vpack.c.b16 %v428, %v427
      %v447 = vpack.c.b16 %v430, %v429
      %v448 = vpack.c.b16 %v432, %v431
      %465 = vmatpush.bf16.msra.mxu0 %v440
      %466 = vmatpush.bf16.msra.mxu0 %v439
      %467 = vmatpush.bf16.msra.mxu0 %v438
      %468 = vmatpush.bf16.msra.mxu0 %v437
      %469 = vmatpush.bf16.msra.mxu0 %v436
      %470 = vmatpush.bf16.msra.mxu0 %v435
      %471 = vmatpush.bf16.msra.mxu0 %v434
      %472 = vmatpush.bf16.msra.mxu0 %v433
      %473 = vmatmul.bf16.gmra.mxu0 %v365
      %v474 = vpop.f32.mrf.mxu0
      %v475 = vadd.f32 0.0, %v474
      %v476 = vpop.f32.mrf.mxu0
      %v477 = vadd.f32 0.0, %v476
      %478 = vdwg.mxu0
      %479 = vmatpush.bf16.msra.mxu0 %v448
      %480 = vmatpush.bf16.msra.mxu0 %v447
      %481 = vmatpush.bf16.msra.mxu0 %v446
      %482 = vmatpush.bf16.msra.mxu0 %v445
      %483 = vmatpush.bf16.msra.mxu0 %v444
      %484 = vmatpush.bf16.msra.mxu0 %v443
      %485 = vmatpush.bf16.msra.mxu0 %v442
      %486 = vmatpush.bf16.msra.mxu0 %v441
      %487 = vmatmul.bf16.gmra.mxu0 %v366
      %v488 = vpop.f32.mrf.mxu0
      %v489 = vadd.f32 %v475, %v488
      %v490 = vpop.f32.mrf.mxu0
      %v491 = vadd.f32 %v477, %v490
      %492 = vdwg.mxu0
      %v493 = vadd.f32 %v323, %v489
      %v494 = vadd.f32 %v324, %v491
      %495 = vst [vmem:[#allocation2] sm:$0xff] %v493
      %496 = vst [vmem:[#allocation2 + $0x8] sm:$0xff] %v494
      // Predicated region
      $region33: #{patchgan_forward.11} parent=27 // pred_check
        %p497 = pneg %p317
      $region34: #{patchgan_forward.11} parent=27 // pred_check_branch
        %499 = sbr.rel (%p497) target = $region36
      $region35: #{patchgan_forward.11} parent=27 // pred_region
        %v500 = vld [vmem:[#allocation2] sm:$0xff]
        %v501 = vld [vmem:[#allocation2 + $0x8] sm:$0xff]
        %v502 = vpack.c.bf16 %v500, %v500
        %v503 = vpack.c.bf16 %v501, %v501
        %504 = vst [vmem:[%s301] sm:$0xf] %v502
        %505 = vst [vmem:[%s301 + $0x4] sm:$0xf] %v503
        %v506 = vadd.f32 %v500, %v501
        %v507 = vrot.slane %v506, 4
        %v508 = vadd.f32 %v506, %v507
        %v509 = vrot.slane %v508, 2
        %v510 = vadd.f32 %v508, %v509
        %v511 = vrot.slane %v510, 1
        %v512 = vadd.f32 %v510, %v511
        %v513 = vmul.f32 %v512, 0.125
        %v514 = vmul.f32 %v500, %v500
        %v515 = vmul.f32 %v501, %v501
        %v516 = vadd.f32 %v514, %v515
        %v517 = vrot.slane %v516, 4
        %v518 = vadd.f32 %v516, %v517
        %v519 = vrot.slane %v518, 2
        %v520 = vadd.f32 %v518, %v519
        %v521 = vrot.slane %v520, 1
        %v522 = vadd.f32 %v520, %v521
        %v523 = vmul.f32 %v522, 0.125
        %524 = vst [vmem:[%s309] sm:$0xff] %v513
        %525 = vst [vmem:[%s316] sm:$0xff] %v523
      $region36: #{patchgan_forward.11} parent=27 // pred_fallthru
        _
      %s526 = smul.u32 2, %s21
      %p527 = scmp.lt.s32.totalorder %s526, 3
      %s528 = scalar_select %p527, %s526, 3
      %p529 = scmp.lt.s32.totalorder %s22, 0
      %s530 = scalar_select %p529, %s22, 0
      %s531 = sadd.s32 %s530, %s528
      %s532 = smul.addr %s531, 4
      %s533 = scalar_lea.vmem %s2, %s532
      %p534 = scmp.lt.s32.totalorder %s21, 1
      %s535 = scalar_select %p534, %s21, 1
      %p536 = scmp.lt.s32.totalorder %s22, 0
      %s537 = scalar_select %p536, %s22, 0
      %s538 = sadd.s32 %s537, %s535
      %s539 = smul.addr %s538, 8
      %s540 = scalar_lea.vmem %s3, %s539
      %p541 = scmp.lt.s32.totalorder %s21, 1
      %s542 = scalar_select %p541, %s21, 1
      %p543 = scmp.lt.s32.totalorder %s22, 0
      %s544 = scalar_select %p543, %s22, 0
      %s545 = sadd.s32 %s544, %s542
      %s546 = smul.addr %s545, 8
      %s547 = scalar_lea.vmem %s4, %s546
      // Predicated region
      $region37: #{patchgan_forward.11} parent=27 // pred_check
        %p548 = pneg %p111
      $region38: #{patchgan_forward.11} parent=27 // pred_check_branch
        %550 = sbr.rel (%p548) target = $region40
      $region39: #{patchgan_forward.11} parent=27 // pred_region
        %s551 = smul.u32 2, %s21
      $region40: #{patchgan_forward.11} parent=27 // pred_fallthru
        _
      // Predicated region
      $region41: #{patchgan_forward.11} parent=27 // pred_check
        %p552 = pneg %p139
      $region42: #{patchgan_forward.11} parent=27 // pred_check_branch
        %554 = sbr.rel (%p552) target = $region44
      $region43: #{patchgan_forward.11} parent=27 // pred_region
        _
      $region44: #{patchgan_forward.11} parent=27 // pred_fallthru
        _
      // Predicated region
      $region45: #{patchgan_forward.11} parent=27 // pred_check
        %p555 = pneg %p167
      $region46: #{patchgan_forward.11} parent=27 // pred_check_branch
        %557 = sbr.rel (%p555) target = $region48
      $region47: #{patchgan_forward.11} parent=27 // pred_region
        _
      $region48: #{patchgan_forward.11} parent=27 // pred_fallthru
        _
    $region28: #{patchgan_forward.11} parent=5 // pred_fallthru
      _
    %p558 = scmp.le.s32.totalorder 2, %s11
    // Predicated region
    $region49: #{patchgan_forward.11} parent=5 // pred_check
      %p559 = pneg %p558
    $region50: #{patchgan_forward.11} parent=5 // pred_check_branch
      %561 = sbr.rel (%p559) target = $region52
    $region51: #{patchgan_forward.11} parent=5 // pred_region
      %s562 = ssub.s32 %s11, 2
      // Predicated region
      $region53: #{patchgan_forward.11} parent=51 // pred_check
        %p563 = pneg %p117
      $region54: #{patchgan_forward.11} parent=51 // pred_check_branch
        %565 = sbr.rel (%p563) target = $region56
      $region55: #{patchgan_forward.11} parent=51 // pred_region
        %s566 = smul.u32 2, %s24
        %p567 = scmp.lt.s32.totalorder %s566, 3
        %s568 = scalar_select %p567, %s566, 3
        %p569 = scmp.lt.s32.totalorder %s25, 0
        %s570 = scalar_select %p569, %s25, 0
        %s571 = sadd.s32 %s570, %s568
        %s572 = smul.addr %s571, 4
        %s573 = scalar_lea.vmem %s2, %s572
      $region56: #{patchgan_forward.11} parent=51 // pred_fallthru
        _
      // Predicated region
      $region57: #{patchgan_forward.11} parent=51 // pred_check
        %p574 = pneg %p145
      $region58: #{patchgan_forward.11} parent=51 // pred_check_branch
        %576 = sbr.rel (%p574) target = $region60
      $region59: #{patchgan_forward.11} parent=51 // pred_region
        %p577 = scmp.lt.s32.totalorder %s24, 1
        %s578 = scalar_select %p577, %s24, 1
        %p579 = scmp.lt.s32.totalorder %s25, 0
        %s580 = scalar_select %p579, %s25, 0
        %s581 = sadd.s32 %s580, %s578
        %s582 = smul.addr %s581, 8
        %s583 = scalar_lea.vmem %s3, %s582
      $region60: #{patchgan_forward.11} parent=51 // pred_fallthru
        _
      // Predicated region
      $region61: #{patchgan_forward.11} parent=51 // pred_check
        %p584 = pneg %p173
      $region62: #{patchgan_forward.11} parent=51 // pred_check_branch
        %586 = sbr.rel (%p584) target = $region64
      $region63: #{patchgan_forward.11} parent=51 // pred_region
        %p587 = scmp.lt.s32.totalorder %s24, 1
        %s588 = scalar_select %p587, %s24, 1
        %p589 = scmp.lt.s32.totalorder %s25, 0
        %s590 = scalar_select %p589, %s25, 0
        %s591 = sadd.s32 %s590, %s588
        %s592 = smul.addr %s591, 8
        %s593 = scalar_lea.vmem %s4, %s592
      $region64: #{patchgan_forward.11} parent=51 // pred_fallthru
        _
    $region52: #{patchgan_forward.11} parent=5 // pred_fallthru
      _
  $region6: #{patchgan_forward.11} parent=0 // loop_footer
    %s15 = sadd.s32 1, %s11
  $region7: #{patchgan_forward.11} parent=0 // loop_footer_branch
    %10 = sbr.rel target = $region3
  $region8: #{patchgan_forward.11} parent=0 // loop_exit
    _

// kernel: patchgan_forward.13
$region0: #{patchgan_forward.13}
  #allocation0 [shape = 'u32[]', space=smem, size = 0x4, offset = 0x4, fixed_abs, tag = 'smem constant byte address 0x4 - core index']
  #allocation1 [shape = 'u32[72,128]{1,0:T(1,128)}', space=vmem, size = 0x9000, scoped, tag = 'internal scratch']
  #allocation2 [shape = 'f32[16,128]{1,0:T(8,128)}', space=vmem, size = 0x2000, scoped, tag = 'scratch operand']
  %s0 = inlined_call_operand.vmem [shape: bf16[32,512], index: 0, kind: input, shape index: {}]
  %s1 = inlined_call_operand.vmem [shape: bf16[512,128], index: 1, kind: input, shape index: {}]
  %s2 = inlined_call_operand.vmem [shape: bf16[32,128], index: 2, kind: output, shape index: {0}]
  %s3 = inlined_call_operand.vmem [shape: f32[16,128], index: 3, kind: output, shape index: {1}]
  %s4 = inlined_call_operand.vmem [shape: f32[16,128], index: 4, kind: output, shape index: {2}]
  %5 = xla_tuple %s2, %s3, %s4
  %s6 = sld [smem:[#allocation0]]
  $region65: #{patchgan_forward.13} parent=0
    _
  %s8 = ssub.s32 1, %s6
  %s9 = scalar_select 0, %s8, %s6
  loop: start=0, step=1, limit=4
  $region2: #{patchgan_forward.13} parent=0 // loop_pre_header
    _
  $region3: #{patchgan_forward.13} parent=0 // loop_header
    %s11 = sphi 0, %s15
    %p12 = scmp.ge.s32.totalorder %s11, 4
    %s18 = sphi 0, %s37
    %s19 = sphi 0, %s33
    %s20 = sphi 0, %s29
    %s21 = sphi 0, %s18
    %s22 = sphi 0, %s19
    %s23 = sphi 0, %s20
    %s24 = sphi 0, %s21
    %s25 = sphi 0, %s22
    %s26 = sphi 0, %s23
    %s42 = sphi 0, %s44
    %s45 = sphi 0, %s42
    %s46 = sphi 0, %s45
    %s62 = sphi 0, %s46
    %s70 = sphi 0, %s72
    %s73 = sphi 0, %s70
    %s74 = sphi 0, %s73
    %s90 = sphi 0, %s74
    %s98 = sphi 0, %s100
    %s101 = sphi 0, %s98
    %s102 = sphi 0, %s101
    %s118 = sphi 0, %s102
    %s126 = sphi 0, %s128
    %s129 = sphi 0, %s126
    %s130 = sphi 0, %s129
    %s146 = sphi 0, %s130
    %s154 = sphi 0, %s156
    %s157 = sphi 0, %s154
    %s158 = sphi 0, %s157
    %s174 = sphi 0, %s158
  $region4: #{patchgan_forward.13} parent=0 // loop_header_branch
    %14 = sbr.rel (%p12) target = $region8
  $region5: #{patchgan_forward.13} parent=0 // loop_body
    %s16 = ssub.s32 %s11, 1
    %s17 = ssub.s32 %s11, 2
    %s27 = sadd.s32 1, %s20
    %p28 = scmp.ge.s32.totalorder %s27, 1
    %s29 = scalar_select %p28, 0, %s27
    %s30 = sadd.s32 1, %s19
    %s31 = scalar_select %p28, %s30, %s19
    %p32 = scmp.ge.s32.totalorder %s31, 1
    %s33 = scalar_select %p32, 0, %s31
    %s34 = sadd.s32 1, %s18
    %s35 = scalar_select %p32, %s34, %s18
    %p36 = scmp.ge.s32.totalorder %s35, 2
    %s37 = scalar_select %p36, 0, %s35
    %s38 = ssub.s32 %s18, %s37
    %s39 = ssub.s32 %s20, %s29
    %s40 = sor.u32 %s38, %s39
    %p41 = scmp.eq.s32.totalorder %s40, 0
    %s43 = sadd.s32 %s42, 1
    %s44 = scalar_select %p41, %s42, %s43
    %p47 = pneg %p41
    %p48 = scmp.eq.s32.totalorder %s11, 1
    %p49 = por %p47, %p48
    %p50 = scmp.ne.s32.totalorder %s42, %s45
    %p51 = scmp.eq.s32.totalorder %s11, 0
    %p52 = por %p50, %p51
    %p53 = scmp.ne.s32.totalorder %s42, %s45
    %p54 = scmp.eq.s32.totalorder %s16, 1
    %p55 = por %p53, %p54
    %p56 = scmp.ne.s32.totalorder %s45, %s46
    %p57 = scmp.eq.s32.totalorder %s16, 0
    %p58 = por %p56, %p57
    %p59 = scmp.ne.s32.totalorder %s45, %s46
    %p60 = scmp.eq.s32.totalorder %s17, 1
    %p61 = por %p59, %p60
    %p63 = scmp.ne.s32.totalorder %s46, %s62
    %p64 = scmp.eq.s32.totalorder %s17, 0
    %p65 = por %p63, %p64
    %s66 = ssub.s32 %s20, %s29
    %s67 = ssub.s32 %s19, %s33
    %s68 = sor.u32 %s66, %s67
    %p69 = scmp.eq.s32.totalorder %s68, 0
    %s71 = sadd.s32 %s70, 1
    %s72 = scalar_select %p69, %s70, %s71
    %p75 = pneg %p69
    %p76 = scmp.eq.s32.totalorder %s11, 1
    %p77 = por %p75, %p76
    %p78 = scmp.ne.s32.totalorder %s70, %s73
    %p79 = scmp.eq.s32.totalorder %s11, 0
    %p80 = por %p78, %p79
    %p81 = scmp.ne.s32.totalorder %s70, %s73
    %p82 = scmp.eq.s32.totalorder %s16, 1
    %p83 = por %p81, %p82
    %p84 = scmp.ne.s32.totalorder %s73, %s74
    %p85 = scmp.eq.s32.totalorder %s16, 0
    %p86 = por %p84, %p85
    %p87 = scmp.ne.s32.totalorder %s73, %s74
    %p88 = scmp.eq.s32.totalorder %s17, 1
    %p89 = por %p87, %p88
    %p91 = scmp.ne.s32.totalorder %s74, %s90
    %p92 = scmp.eq.s32.totalorder %s17, 0
    %p93 = por %p91, %p92
    %s94 = ssub.s32 %s18, %s37
    %s95 = ssub.s32 %s19, %s33
    %s96 = sor.u32 %s94, %s95
    %p97 = scmp.eq.s32.totalorder %s96, 0
    %s99 = sadd.s32 %s98, 1
    %s100 = scalar_select %p97, %s98, %s99
    %p103 = pneg %p97
    %p104 = scmp.eq.s32.totalorder %s11, 1
    %p105 = por %p103, %p104
    %p106 = scmp.ne.s32.totalorder %s98, %s101
    %p107 = scmp.eq.s32.totalorder %s11, 0
    %p108 = por %p106, %p107
    %p109 = scmp.ne.s32.totalorder %s98, %s101
    %p110 = scmp.eq.s32.totalorder %s16, 1
    %p111 = por %p109, %p110
    %p112 = scmp.ne.s32.totalorder %s101, %s102
    %p113 = scmp.eq.s32.totalorder %s16, 0
    %p114 = por %p112, %p113
    %p115 = scmp.ne.s32.totalorder %s101, %s102
    %p116 = scmp.eq.s32.totalorder %s17, 1
    %p117 = por %p115, %p116
    %p119 = scmp.ne.s32.totalorder %s102, %s118
    %p120 = scmp.eq.s32.totalorder %s17, 0
    %p121 = por %p119, %p120
    %s122 = ssub.s32 %s18, %s37
    %s123 = ssub.s32 %s19, %s33
    %s124 = sor.u32 %s122, %s123
    %p125 = scmp.eq.s32.totalorder %s124, 0
    %s127 = sadd.s32 %s126, 1
    %s128 = scalar_select %p125, %s126, %s127
    %p131 = pneg %p125
    %p132 = scmp.eq.s32.totalorder %s11, 1
    %p133 = por %p131, %p132
    %p134 = scmp.ne.s32.totalorder %s126, %s129
    %p135 = scmp.eq.s32.totalorder %s11, 0
    %p136 = por %p134, %p135
    %p137 = scmp.ne.s32.totalorder %s126, %s129
    %p138 = scmp.eq.s32.totalorder %s16, 1
    %p139 = por %p137, %p138
    %p140 = scmp.ne.s32.totalorder %s129, %s130
    %p141 = scmp.eq.s32.totalorder %s16, 0
    %p142 = por %p140, %p141
    %p143 = scmp.ne.s32.totalorder %s129, %s130
    %p144 = scmp.eq.s32.totalorder %s17, 1
    %p145 = por %p143, %p144
    %p147 = scmp.ne.s32.totalorder %s130, %s146
    %p148 = scmp.eq.s32.totalorder %s17, 0
    %p149 = por %p147, %p148
    %s150 = ssub.s32 %s18, %s37
    %s151 = ssub.s32 %s19, %s33
    %s152 = sor.u32 %s150, %s151
    %p153 = scmp.eq.s32.totalorder %s152, 0
    %s155 = sadd.s32 %s154, 1
    %s156 = scalar_select %p153, %s154, %s155
    %p159 = pneg %p153
    %p160 = scmp.eq.s32.totalorder %s11, 1
    %p161 = por %p159, %p160
    %p162 = scmp.ne.s32.totalorder %s154, %s157
    %p163 = scmp.eq.s32.totalorder %s11, 0
    %p164 = por %p162, %p163
    %p165 = scmp.ne.s32.totalorder %s154, %s157
    %p166 = scmp.eq.s32.totalorder %s16, 1
    %p167 = por %p165, %p166
    %p168 = scmp.ne.s32.totalorder %s157, %s158
    %p169 = scmp.eq.s32.totalorder %s16, 0
    %p170 = por %p168, %p169
    %p171 = scmp.ne.s32.totalorder %s157, %s158
    %p172 = scmp.eq.s32.totalorder %s17, 1
    %p173 = por %p171, %p172
    %p175 = scmp.ne.s32.totalorder %s158, %s174
    %p176 = scmp.eq.s32.totalorder %s17, 0
    %p177 = por %p175, %p176
    %p178 = scmp.le.s32.totalorder 1, %s11
    %p179 = scmp.lt.s32.totalorder %s11, 3
    %p180 = pnand %p178, %p179
    %p181 = pneg %p180
    // Predicated region
    $region9: #{patchgan_forward.13} parent=5 // pred_check
      _
    $region10: #{patchgan_forward.13} parent=5 // pred_check_branch
      %183 = sbr.rel (%p180) target = $region12
    $region11: #{patchgan_forward.13} parent=5 // pred_region
      %s184 = ssub.s32 %s11, 1
      // Predicated region
      $region13: #{patchgan_forward.13} parent=11 // pred_check
        %p185 = pneg %p86
      $region14: #{patchgan_forward.13} parent=11 // pred_check_branch
        %187 = sbr.rel (%p185) target = $region16
      $region15: #{patchgan_forward.13} parent=11 // pred_region
        %s188 = smul.u32 64, %s23
        %p189 = scmp.lt.s32.totalorder %s188, 63
        %s190 = scalar_select %p189, %s188, 63
        %p191 = scmp.lt.s32.totalorder %s22, 0
        %s192 = scalar_select %p191, %s22, 0
        %s193 = sadd.s32 %s192, %s190
        %s194 = smul.addr %s193, 4
        %s195 = scalar_lea.vmem %s1, %s194
        %s196 = smul.u32 64, %s23
      $region16: #{patchgan_forward.13} parent=11 // pred_fallthru
        _
    $region12: #{patchgan_forward.13} parent=5 // pred_fallthru
      _
    %p197 = scmp.lt.s32.totalorder %s11, 2
    // Predicated region
    $region17: #{patchgan_forward.13} parent=5 // pred_check
      %p198 = pneg %p197
    $region18: #{patchgan_forward.13} parent=5 // pred_check_branch
      %200 = sbr.rel (%p198) target = $region20
    $region19: #{patchgan_forward.13} parent=5 // pred_region
      // Predicated region
      $region21: #{patchgan_forward.13} parent=19 // pred_check
        %p201 = pneg %p52
      $region22: #{patchgan_forward.13} parent=19 // pred_check_branch
        %203 = sbr.rel (%p201) target = $region24
      $region23: #{patchgan_forward.13} parent=19 // pred_region
        %s204 = smul.u32 2, %s18
        %s205 = smul.u32 4, %s20
        %p206 = scmp.lt.s32.totalorder %s204, 3
        %s207 = scalar_select %p206, %s204, 3
        %p208 = scmp.lt.s32.totalorder %s205, 3
        %s209 = scalar_select %p208, %s205, 3
        %s210 = smul.addr %s207, 4
        %s211 = sadd.s32 %s209, %s210
        %s212 = smul.addr %s211, 4
        %s213 = scalar_lea.vmem %s0, %s212
        %s214 = smul.u32 2, %s18
        %s215 = smul.u32 4, %s20
      $region24: #{patchgan_forward.13} parent=19 // pred_fallthru
        _
    $region20: #{patchgan_forward.13} parent=5 // pred_fallthru
      _
    %p216 = scmp.le.s32.totalorder 1, %s11
    %p217 = scmp.lt.s32.totalorder %s11, 3
    %p218 = pnand %p216, %p217
    %p219 = pneg %p218
    // Predicated region
    $region25: #{patchgan_forward.13} parent=5 // pred_check
      _
    $region26: #{patchgan_forward.13} parent=5 // pred_check_branch
      %221 = sbr.rel (%p218) target = $region28
    $region27: #{patchgan_forward.13} parent=5 // pred_region
      %s222 = ssub.s32 %s11, 1
      %s223 = smul.u32 2, %s21
      %s224 = smul.u32 4, %s23
      %p225 = scmp.lt.s32.totalorder %s223, 3
      %s226 = scalar_select %p225, %s223, 3
      %p227 = scmp.lt.s32.totalorder %s224, 3
      %s228 = scalar_select %p227, %s224, 3
      %s229 = smul.addr %s226, 4
      %s230 = sadd.s32 %s228, %s229
      %s231 = smul.addr %s230, 4
      %s232 = scalar_lea.vmem %s0, %s231
      %p233 = pneg %p58
      %p234 = pneg %p55
      %s235 = smul.u32 64, %s23
      %p236 = scmp.lt.s32.totalorder %s235, 63
      %s237 = scalar_select %p236, %s235, 63
      %p238 = scmp.lt.s32.totalorder %s22, 0
      %s239 = scalar_select %p238, %s22, 0
      %s240 = sadd.s32 %s239, %s237
      %s241 = smul.addr %s240, 4
      %s242 = scalar_lea.vmem %s1, %s241
      %p243 = pneg %p86
      %p244 = pneg %p83
      %p245 = pneg %p114
      %p246 = pneg %p111
      %s247 = smul.u32 2, %s21
      %p248 = scmp.lt.s32.totalorder %s247, 3
      %s249 = scalar_select %p248, %s247, 3
      %p250 = scmp.lt.s32.totalorder %s22, 0
      %s251 = scalar_select %p250, %s22, 0
      %s252 = sadd.s32 %s251, %s249
      %s253 = smul.addr %s252, 4
      %s254 = scalar_lea.vmem %s2, %s253
      %p255 = pneg %p142
      %p256 = pneg %p139
      %p257 = scmp.lt.s32.totalorder %s21, 1
      %s258 = scalar_select %p257, %s21, 1
      %p259 = scmp.lt.s32.totalorder %s22, 0
      %s260 = scalar_select %p259, %s22, 0
      %s261 = sadd.s32 %s260, %s258
      %s262 = smul.addr %s261, 8
      %s263 = scalar_lea.vmem %s3, %s262
      %p264 = pneg %p170
      %p265 = pneg %p167
      %p266 = scmp.lt.s32.totalorder %s21, 1
      %s267 = scalar_select %p266, %s21, 1
      %p268 = scmp.lt.s32.totalorder %s22, 0
      %s269 = scalar_select %p268, %s22, 0
      %s270 = sadd.s32 %s269, %s267
      %s271 = smul.addr %s270, 8
      %s272 = scalar_lea.vmem %s4, %s271
      %s273 = smul.u32 2, %s21
      %s274 = smul.u32 4, %s23
      %p275 = scmp.lt.s32.totalorder %s273, 3
      %s276 = scalar_select %p275, %s273, 3
      %p277 = scmp.lt.s32.totalorder %s274, 3
      %s278 = scalar_select %p277, %s274, 3
      %s279 = smul.addr %s276, 4
      %s280 = sadd.s32 %s278, %s279
      %s281 = smul.addr %s280, 4
      %s282 = scalar_lea.vmem %s0, %s281
      %s283 = smul.u32 2, %s21
      %s284 = smul.u32 4, %s23
      %s285 = smul.u32 64, %s23
      %p286 = scmp.lt.s32.totalorder %s285, 63
      %s287 = scalar_select %p286, %s285, 63
      %p288 = scmp.lt.s32.totalorder %s22, 0
      %s289 = scalar_select %p288, %s22, 0
      %s290 = sadd.s32 %s289, %s287
      %s291 = smul.addr %s290, 4
      %s292 = scalar_lea.vmem %s1, %s291
      %s293 = smul.u32 64, %s23
      %s294 = smul.u32 2, %s21
      %p295 = scmp.lt.s32.totalorder %s294, 3
      %s296 = scalar_select %p295, %s294, 3
      %p297 = scmp.lt.s32.totalorder %s22, 0
      %s298 = scalar_select %p297, %s22, 0
      %s299 = sadd.s32 %s298, %s296
      %s300 = smul.addr %s299, 4
      %s301 = scalar_lea.vmem %s2, %s300
      %s302 = smul.u32 2, %s21
      %p303 = scmp.lt.s32.totalorder %s21, 1
      %s304 = scalar_select %p303, %s21, 1
      %p305 = scmp.lt.s32.totalorder %s22, 0
      %s306 = scalar_select %p305, %s22, 0
      %s307 = sadd.s32 %s306, %s304
      %s308 = smul.addr %s307, 8
      %s309 = scalar_lea.vmem %s3, %s308
      %p310 = scmp.lt.s32.totalorder %s21, 1
      %s311 = scalar_select %p310, %s21, 1
      %p312 = scmp.lt.s32.totalorder %s22, 0
      %s313 = scalar_select %p312, %s22, 0
      %s314 = sadd.s32 %s313, %s311
      %s315 = smul.addr %s314, 8
      %s316 = scalar_lea.vmem %s4, %s315
      %p317 = scmp.eq.s32.totalorder %s23, 0
      // Predicated region
      $region29: #{patchgan_forward.13} parent=27 // pred_check
        %p318 = pneg %p317
      $region30: #{patchgan_forward.13} parent=27 // pred_check_branch
        %320 = sbr.rel (%p318) target = $region32
      $region31: #{patchgan_forward.13} parent=27 // pred_region
        %321 = vst [vmem:[#allocation2] sm:$0xff] 0.0
        %322 = vst [vmem:[#allocation2 + $0x8] sm:$0xff] 0.0
      $region32: #{patchgan_forward.13} parent=27 // pred_fallthru
        _
      %v323 = vld [vmem:[#allocation2] sm:$0xff]
      %v324 = vld [vmem:[#allocation2 + $0x8] sm:$0xff]
      %v325 = vld [vmem:[%s282] sm:$0xff]
      %v326 = vld [vmem:[%s282 + $0x8] sm:$0xff]
      %v327 = vld [vmem:[%s282 + $0x10] sm:$0xff]
      %v328 = vld [vmem:[%s282 + $0x18] sm:$0xff]
      %v329 = vld [vmem:[%s292] sm:$0xf]
      %v330 = vld [vmem:[%s292 + $0x4] sm:$0xf]
      %v331 = vld [vmem:[%s292 + $0x8] sm:$0xf]
      %v332 = vld [vmem:[%s292 + $0xc] sm:$0xf]
      %v333 = vld [vmem:[%s292 + $0x10] sm:$0xf]
      %v334 = vld [vmem:[%s292 + $0x14] sm:$0xf]
      %v335 = vld [vmem:[%s292 + $0x18] sm:$0xf]
      %v336 = vld [vmem:[%s292 + $0x1c] sm:$0xf]
      %v337 = vld [vmem:[%s292 + $0x20] sm:$0xf]
      %v338 = vld [vmem:[%s292 + $0x24] sm:$0xf]
      %v339 = vld [vmem:[%s292 + $0x28] sm:$0xf]
      %v340 = vld [vmem:[%s292 + $0x2c] sm:$0xf]
      %v341 = vld [vmem:[%s292 + $0x30] sm:$0xf]
      %v342 = vld [vmem:[%s292 + $0x34] sm:$0xf]
      %v343 = vld [vmem:[%s292 + $0x38] sm:$0xf]
      %v344 = vld [vmem:[%s292 + $0x3c] sm:$0xf]
      %v345 = vld [vmem:[%s292 + $0x40] sm:$0xf]
      %v346 = vld [vmem:[%s292 + $0x44] sm:$0xf]
      %v347 = vld [vmem:[%s292 + $0x48] sm:$0xf]
      %v348 = vld [vmem:[%s292 + $0x4c] sm:$0xf]
      %v349 = vld [vmem:[%s292 + $0x50] sm:$0xf]
      %v350 = vld [vmem:[%s292 + $0x54] sm:$0xf]
      %v351 = vld [vmem:[%s292 + $0x58] sm:$0xf]
      %v352 = vld [vmem:[%s292 + $0x5c] sm:$0xf]
      %v353 = vld [vmem:[%s292 + $0x60] sm:$0xf]
      %v354 = vld [vmem:[%s292 + $0x64] sm:$0xf]
      %v355 = vld [vmem:[%s292 + $0x68] sm:$0xf]
      %v356 = vld [vmem:[%s292 + $0x6c] sm:$0xf]
      %v357 = vld [vmem:[%s292 + $0x70] sm:$0xf]
      %v358 = vld [vmem:[%s292 + $0x74] sm:$0xf]
      %v359 = vld [vmem:[%s292 + $0x78] sm:$0xf]
      %v360 = vld [vmem:[%s292 + $0x7c] sm:$0xf]
      %v361 = vld [vmem:[%s292 + $0x80] sm:$0xf]
      %v362 = vld [vmem:[%s292 + $0x84] sm:$0xf]
      %v363 = vld [vmem:[%s292 + $0x88] sm:$0xf]
      %v364 = vld [vmem:[%s292 + $0x8c] sm:$0xf]
      %v365 = vld [vmem:[%s292 + $0x90] sm:$0xf]
      %v366 = vld [vmem:[%s292 + $0x94] sm:$0xf]
      %v367 = vld [vmem:[%s292 + $0x98] sm:$0xf]
      %v368 = vld [vmem:[%s292 + $0x9c] sm:$0xf]
      %v369 = vld [vmem:[%s292 + $0xa0] sm:$0xf]
      %v370 = vld [vmem:[%s292 + $0xa4] sm:$0xf]
      %v371 = vld [vmem:[%s292 + $0xa8] sm:$0xf]
      %v372 = vld [vmem:[%s292 + $0xac] sm:$0xf]
      %v373 = vld [vmem:[%s292 + $0xb0] sm:$0xf]
      %v374 = vld [vmem:[%s292 + $0xb4] sm:$0xf]
      %v375 = vld [vmem:[%s292 + $0xb8] sm:$0xf]
      %v376 = vld [vmem:[%s292 + $0xbc] sm:$0xf]
      %v377 = vld [vmem:[%s292 + $0xc0] sm:$0xf]
      %v378 = vld [vmem:[%s292 + $0xc4] sm:$0xf]
      %v379 = vld [vmem:[%s292 + $0xc8] sm:$0xf]
      %v380 = vld [vmem:[%s292 + $0xcc] sm:$0xf]
      %v381 = vld [vmem:[%s292 + $0xd0] sm:$0xf]
      %v382 = vld [vmem:[%s292 + $0xd4] sm:$0xf]
      %v383 = vld [vmem:[%s292 + $0xd8] sm:$0xf]
      %v384 = vld [vmem:[%s292 + $0xdc] sm:$0xf]
      %v385 = vld [vmem:[%s292 + $0xe0] sm:$0xf]
      %v386 = vld [vmem:[%s292 + $0xe4] sm:$0xf]
      %v387 = vld [vmem:[%s292 + $0xe8] sm:$0xf]
      %v388 = vld [vmem:[%s292 + $0xec] sm:$0xf]
      %v389 = vld [vmem:[%s292 + $0xf0] sm:$0xf]
      %v390 = vld [vmem:[%s292 + $0xf4] sm:$0xf]
      %v391 = vld [vmem:[%s292 + $0xf8] sm:$0xf]
      %v392 = vld [vmem:[%s292 + $0xfc] sm:$0xf]
      %v397 = vunpack.c.l.b16 %v325
      %v398 = vunpack.c.h.b16 %v325
      %v399 = vunpack.c.l.b16 %v326
      %v400 = vunpack.c.h.b16 %v326
      %v401 = vunpack.c.l.b16 %v327
      %v402 = vunpack.c.h.b16 %v327
      %v403 = vunpack.c.l.b16 %v328
      %v404 = vunpack.c.h.b16 %v328
      %v405 = vpack.c.b16 %v401, %v397
      %v406 = vpack.c.b16 %v402, %v398
      %v407 = vpack.c.b16 %v403, %v399
      %v408 = vpack.c.b16 %v404, %v400
      %v477 = vunpack.c.l.b16 %v329
      %v478 = vunpack.c.l.b16 %v330
      %v479 = vunpack.c.l.b16 %v331
      %v480 = vunpack.c.l.b16 %v332
      %v481 = vunpack.c.l.b16 %v333
      %v482 = vunpack.c.l.b16 %v334
      %v483 = vunpack.c.l.b16 %v335
      %v484 = vunpack.c.l.b16 %v336
      %v485 = vunpack.c.l.b16 %v337
      %v486 = vunpack.c.l.b16 %v338
      %v487 = vunpack.c.l.b16 %v339
      %v488 = vunpack.c.l.b16 %v340
      %v489 = vunpack.c.l.b16 %v341
      %v490 = vunpack.c.l.b16 %v342
      %v491 = vunpack.c.l.b16 %v343
      %v492 = vunpack.c.l.b16 %v344
      %v493 = vunpack.c.l.b16 %v345
      %v494 = vunpack.c.l.b16 %v346
      %v495 = vunpack.c.l.b16 %v347
      %v496 = vunpack.c.l.b16 %v348
      %v497 = vunpack.c.l.b16 %v349
      %v498 = vunpack.c.l.b16 %v350
      %v499 = vunpack.c.l.b16 %v351
      %v500 = vunpack.c.l.b16 %v352
      %v501 = vunpack.c.l.b16 %v353
      %v502 = vunpack.c.l.b16 %v354
      %v503 = vunpack.c.l.b16 %v355
      %v504 = vunpack.c.l.b16 %v356
      %v505 = vunpack.c.l.b16 %v357
      %v506 = vunpack.c.l.b16 %v358
      %v507 = vunpack.c.l.b16 %v359
      %v508 = vunpack.c.l.b16 %v360
      %v509 = vunpack.c.l.b16 %v361
      %v510 = vunpack.c.l.b16 %v362
      %v511 = vunpack.c.l.b16 %v363
      %v512 = vunpack.c.l.b16 %v364
      %v513 = vunpack.c.l.b16 %v365
      %v514 = vunpack.c.l.b16 %v366
      %v515 = vunpack.c.l.b16 %v367
      %v516 = vunpack.c.l.b16 %v368
      %v517 = vunpack.c.l.b16 %v369
      %v518 = vunpack.c.l.b16 %v370
      %v519 = vunpack.c.l.b16 %v371
      %v520 = vunpack.c.l.b16 %v372
      %v521 = vunpack.c.l.b16 %v373
      %v522 = vunpack.c.l.b16 %v374
      %v523 = vunpack.c.l.b16 %v375
      %v524 = vunpack.c.l.b16 %v376
      %v525 = vunpack.c.l.b16 %v377
      %v526 = vunpack.c.l.b16 %v378
      %v527 = vunpack.c.l.b16 %v379
      %v528 = vunpack.c.l.b16 %v380
      %v529 = vunpack.c.l.b16 %v381
      %v530 = vunpack.c.l.b16 %v382
      %v531 = vunpack.c.l.b16 %v383
      %v532 = vunpack.c.l.b16 %v384
      %v533 = vunpack.c.l.b16 %v385
      %v534 = vunpack.c.l.b16 %v386
      %v535 = vunpack.c.l.b16 %v387
      %v536 = vunpack.c.l.b16 %v388
      %v537 = vunpack.c.l.b16 %v389
      %v538 = vunpack.c.l.b16 %v390
      %v539 = vunpack.c.l.b16 %v391
      %v540 = vunpack.c.l.b16 %v392
      %v541 = vpack.c.b16 %v478, %v477
      %v542 = vpack.c.b16 %v480, %v479
      %v543 = vpack.c.b16 %v482, %v481
      %v544 = vpack.c.b16 %v484, %v483
      %v545 = vpack.c.b16 %v486, %v485
      %v546 = vpack.c.b16 %v488, %v487
      %v547 = vpack.c.b16 %v490, %v489
      %v548 = vpack.c.b16 %v492, %v491
      %v549 = vpack.c.b16 %v494, %v493
      %v550 = vpack.c.b16 %v496, %v495
      %v551 = vpack.c.b16 %v498, %v497
      %v552 = vpack.c.b16 %v500, %v499
      %v553 = vpack.c.b16 %v502, %v501
      %v554 = vpack.c.b16 %v504, %v503
      %v555 = vpack.c.b16 %v506, %v505
      %v556 = vpack.c.b16 %v508, %v507
      %v557 = vpack.c.b16 %v510, %v509
      %v558 = vpack.c.b16 %v512, %v511
      %v559 = vpack.c.b16 %v514, %v513
      %v560 = vpack.c.b16 %v516, %v515
      %v561 = vpack.c.b16 %v518, %v517
      %v562 = vpack.c.b16 %v520, %v519
      %v563 = vpack.c.b16 %v522, %v521
      %v564 = vpack.c.b16 %v524, %v523
      %v565 = vpack.c.b16 %v526, %v525
      %v566 = vpack.c.b16 %v528, %v527
      %v567 = vpack.c.b16 %v530, %v529
      %v568 = vpack.c.b16 %v532, %v531
      %v569 = vpack.c.b16 %v534, %v533
      %v570 = vpack.c.b16 %v536, %v535
      %v571 = vpack.c.b16 %v538, %v537
      %v572 = vpack.c.b16 %v540, %v539
      %605 = vmatpush.bf16.msra.mxu0 %v548
      %606 = vmatpush.bf16.msra.mxu0 %v547
      %607 = vmatpush.bf16.msra.mxu0 %v546
      %608 = vmatpush.bf16.msra.mxu0 %v545
      %609 = vmatpush.bf16.msra.mxu0 %v544
      %610 = vmatpush.bf16.msra.mxu0 %v543
      %611 = vmatpush.bf16.msra.mxu0 %v542
      %612 = vmatpush.bf16.msra.mxu0 %v541
      %613 = vmatmul.bf16.gmra.mxu0 %v405
      %v614 = vpop.f32.mrf.mxu0
      %v615 = vadd.f32 0.0, %v614
      %v616 = vpop.f32.mrf.mxu0
      %v617 = vadd.f32 0.0, %v616
      %618 = vdwg.mxu0
      %619 = vmatpush.bf16.msra.mxu0 %v556
      %620 = vmatpush.bf16.msra.mxu0 %v555
      %621 = vmatpush.bf16.msra.mxu0 %v554
      %622 = vmatpush.bf16.msra.mxu0 %v553
      %623 = vmatpush.bf16.msra.mxu0 %v552
      %624 = vmatpush.bf16.msra.mxu0 %v551
      %625 = vmatpush.bf16.msra.mxu0 %v550
      %626 = vmatpush.bf16.msra.mxu0 %v549
      %627 = vmatmul.bf16.gmra.mxu0 %v406
      %v628 = vpop.f32.mrf.mxu0
      %v629 = vadd.f32 %v615, %v628
      %v630 = vpop.f32.mrf.mxu0
      %v631 = vadd.f32 %v617, %v630
      %632 = vdwg.mxu0
      %633 = vmatpush.bf16.msra.mxu0 %v564
      %634 = vmatpush.bf16.msra.mxu0 %v563
      %635 = vmatpush.bf16.msra.mxu0 %v562
      %636 = vmatpush.bf16.msra.mxu0 %v561
      %637 = vmatpush.bf16.msra.mxu0 %v560
      %638 = vmatpush.bf16.msra.mxu0 %v559
      %639 = vmatpush.bf16.msra.mxu0 %v558
      %640 = vmatpush.bf16.msra.mxu0 %v557
      %641 = vmatmul.bf16.gmra.mxu0 %v407
      %v642 = vpop.f32.mrf.mxu0
      %v643 = vadd.f32 %v629, %v642
      %v644 = vpop.f32.mrf.mxu0
      %v645 = vadd.f32 %v631, %v644
      %646 = vdwg.mxu0
      %647 = vmatpush.bf16.msra.mxu0 %v572
      %648 = vmatpush.bf16.msra.mxu0 %v571
      %649 = vmatpush.bf16.msra.mxu0 %v570
      %650 = vmatpush.bf16.msra.mxu0 %v569
      %651 = vmatpush.bf16.msra.mxu0 %v568
      %652 = vmatpush.bf16.msra.mxu0 %v567
      %653 = vmatpush.bf16.msra.mxu0 %v566
      %654 = vmatpush.bf16.msra.mxu0 %v565
      %655 = vmatmul.bf16.gmra.mxu0 %v408
      %v656 = vpop.f32.mrf.mxu0
      %v657 = vadd.f32 %v643, %v656
      %v658 = vpop.f32.mrf.mxu0
      %v659 = vadd.f32 %v645, %v658
      %660 = vdwg.mxu0
      %v661 = vadd.f32 %v323, %v657
      %v662 = vadd.f32 %v324, %v659
      %663 = vst [vmem:[#allocation2] sm:$0xff] %v661
      %664 = vst [vmem:[#allocation2 + $0x8] sm:$0xff] %v662
      // Predicated region
      $region33: #{patchgan_forward.13} parent=27 // pred_check
        %p665 = pneg %p317
      $region34: #{patchgan_forward.13} parent=27 // pred_check_branch
        %667 = sbr.rel (%p665) target = $region36
      $region35: #{patchgan_forward.13} parent=27 // pred_region
        %v668 = vld [vmem:[#allocation2] sm:$0xff]
        %v669 = vld [vmem:[#allocation2 + $0x8] sm:$0xff]
        %v670 = vpack.c.bf16 %v668, %v668
        %v671 = vpack.c.bf16 %v669, %v669
        %672 = vst [vmem:[%s301] sm:$0xf] %v670
        %673 = vst [vmem:[%s301 + $0x4] sm:$0xf] %v671
        %v674 = vadd.f32 %v668, %v669
        %v675 = vrot.slane %v674, 4
        %v676 = vadd.f32 %v674, %v675
        %v677 = vrot.slane %v676, 2
        %v678 = vadd.f32 %v676, %v677
        %v679 = vrot.slane %v678, 1
        %v680 = vadd.f32 %v678, %v679
        %v681 = vmul.f32 %v680, 0.125
        %v682 = vmul.f32 %v668, %v668
        %v683 = vmul.f32 %v669, %v669
        %v684 = vadd.f32 %v682, %v683
        %v685 = vrot.slane %v684, 4
        %v686 = vadd.f32 %v684, %v685
        %v687 = vrot.slane %v686, 2
        %v688 = vadd.f32 %v686, %v687
        %v689 = vrot.slane %v688, 1
        %v690 = vadd.f32 %v688, %v689
        %v691 = vmul.f32 %v690, 0.125
        %692 = vst [vmem:[%s309] sm:$0xff] %v681
        %693 = vst [vmem:[%s316] sm:$0xff] %v691
      $region36: #{patchgan_forward.13} parent=27 // pred_fallthru
        _
      %s694 = smul.u32 2, %s21
      %p695 = scmp.lt.s32.totalorder %s694, 3
      %s696 = scalar_select %p695, %s694, 3
      %p697 = scmp.lt.s32.totalorder %s22, 0
      %s698 = scalar_select %p697, %s22, 0
      %s699 = sadd.s32 %s698, %s696
      %s700 = smul.addr %s699, 4
      %s701 = scalar_lea.vmem %s2, %s700
      %p702 = scmp.lt.s32.totalorder %s21, 1
      %s703 = scalar_select %p702, %s21, 1
      %p704 = scmp.lt.s32.totalorder %s22, 0
      %s705 = scalar_select %p704, %s22, 0
      %s706 = sadd.s32 %s705, %s703
      %s707 = smul.addr %s706, 8
      %s708 = scalar_lea.vmem %s3, %s707
      %p709 = scmp.lt.s32.totalorder %s21, 1
      %s710 = scalar_select %p709, %s21, 1
      %p711 = scmp.lt.s32.totalorder %s22, 0
      %s712 = scalar_select %p711, %s22, 0
      %s713 = sadd.s32 %s712, %s710
      %s714 = smul.addr %s713, 8
      %s715 = scalar_lea.vmem %s4, %s714
      // Predicated region
      $region37: #{patchgan_forward.13} parent=27 // pred_check
        %p716 = pneg %p111
      $region38: #{patchgan_forward.13} parent=27 // pred_check_branch
        %718 = sbr.rel (%p716) target = $region40
      $region39: #{patchgan_forward.13} parent=27 // pred_region
        %s719 = smul.u32 2, %s21
      $region40: #{patchgan_forward.13} parent=27 // pred_fallthru
        _
      // Predicated region
      $region41: #{patchgan_forward.13} parent=27 // pred_check
        %p720 = pneg %p139
      $region42: #{patchgan_forward.13} parent=27 // pred_check_branch
        %722 = sbr.rel (%p720) target = $region44
      $region43: #{patchgan_forward.13} parent=27 // pred_region
        _
      $region44: #{patchgan_forward.13} parent=27 // pred_fallthru
        _
      // Predicated region
      $region45: #{patchgan_forward.13} parent=27 // pred_check
        %p723 = pneg %p167
      $region46: #{patchgan_forward.13} parent=27 // pred_check_branch
        %725 = sbr.rel (%p723) target = $region48
      $region47: #{patchgan_forward.13} parent=27 // pred_region
        _
      $region48: #{patchgan_forward.13} parent=27 // pred_fallthru
        _
    $region28: #{patchgan_forward.13} parent=5 // pred_fallthru
      _
    %p726 = scmp.le.s32.totalorder 2, %s11
    // Predicated region
    $region49: #{patchgan_forward.13} parent=5 // pred_check
      %p727 = pneg %p726
    $region50: #{patchgan_forward.13} parent=5 // pred_check_branch
      %729 = sbr.rel (%p727) target = $region52
    $region51: #{patchgan_forward.13} parent=5 // pred_region
      %s730 = ssub.s32 %s11, 2
      // Predicated region
      $region53: #{patchgan_forward.13} parent=51 // pred_check
        %p731 = pneg %p117
      $region54: #{patchgan_forward.13} parent=51 // pred_check_branch
        %733 = sbr.rel (%p731) target = $region56
      $region55: #{patchgan_forward.13} parent=51 // pred_region
        %s734 = smul.u32 2, %s24
        %p735 = scmp.lt.s32.totalorder %s734, 3
        %s736 = scalar_select %p735, %s734, 3
        %p737 = scmp.lt.s32.totalorder %s25, 0
        %s738 = scalar_select %p737, %s25, 0
        %s739 = sadd.s32 %s738, %s736
        %s740 = smul.addr %s739, 4
        %s741 = scalar_lea.vmem %s2, %s740
      $region56: #{patchgan_forward.13} parent=51 // pred_fallthru
        _
      // Predicated region
      $region57: #{patchgan_forward.13} parent=51 // pred_check
        %p742 = pneg %p145
      $region58: #{patchgan_forward.13} parent=51 // pred_check_branch
        %744 = sbr.rel (%p742) target = $region60
      $region59: #{patchgan_forward.13} parent=51 // pred_region
        %p745 = scmp.lt.s32.totalorder %s24, 1
        %s746 = scalar_select %p745, %s24, 1
        %p747 = scmp.lt.s32.totalorder %s25, 0
        %s748 = scalar_select %p747, %s25, 0
        %s749 = sadd.s32 %s748, %s746
        %s750 = smul.addr %s749, 8
        %s751 = scalar_lea.vmem %s3, %s750
      $region60: #{patchgan_forward.13} parent=51 // pred_fallthru
        _
      // Predicated region
      $region61: #{patchgan_forward.13} parent=51 // pred_check
        %p752 = pneg %p173
      $region62: #{patchgan_forward.13} parent=51 // pred_check_branch
        %754 = sbr.rel (%p752) target = $region64
      $region63: #{patchgan_forward.13} parent=51 // pred_region
        %p755 = scmp.lt.s32.totalorder %s24, 1
        %s756 = scalar_select %p755, %s24, 1
        %p757 = scmp.lt.s32.totalorder %s25, 0
        %s758 = scalar_select %p757, %s25, 0
        %s759 = sadd.s32 %s758, %s756
        %s760 = smul.addr %s759, 8
        %s761 = scalar_lea.vmem %s4, %s760
      $region64: #{patchgan_forward.13} parent=51 // pred_fallthru
        _
    $region52: #{patchgan_forward.13} parent=5 // pred_fallthru
      _
  $region6: #{patchgan_forward.13} parent=0 // loop_footer
    %s15 = sadd.s32 1, %s11
  $region7: #{patchgan_forward.13} parent=0 // loop_footer_branch
    %10 = sbr.rel target = $region3
  $region8: #{patchgan_forward.13} parent=0 // loop_exit
    _

// kernel: patchgan_forward.15
$region0: #{patchgan_forward.15}
  #allocation0 [shape = 'u32[]', space=smem, size = 0x4, offset = 0x4, fixed_abs, tag = 'smem constant byte address 0x4 - core index']
  #allocation1 [shape = 'u32[72,128]{1,0:T(1,128)}', space=vmem, size = 0x9000, scoped, tag = 'internal scratch']
  #allocation2 [shape = 'f32[16,128]{1,0:T(8,128)}', space=vmem, size = 0x2000, scoped, tag = 'scratch operand']
  %s0 = inlined_call_operand.vmem [shape: bf16[16,1024], index: 0, kind: input, shape index: {}]
  %s1 = inlined_call_operand.vmem [shape: bf16[1024,128], index: 1, kind: input, shape index: {}]
  %s2 = inlined_call_operand.vmem [shape: f32[1,128], index: 2, kind: input, shape index: {}]
  %s3 = inlined_call_operand.vmem [shape: f32[16,128], index: 3, kind: output, shape index: {}]
  %s4 = sld [smem:[#allocation0]]
  $region30: #{patchgan_forward.15} parent=0
    _
  %s6 = ssub.s32 1, %s4
  %s7 = scalar_select 0, %s6, %s4
  // Predicated region
  $region2: #{patchgan_forward.15} parent=0 // pred_check
    _
  $region3: #{patchgan_forward.15} parent=0 // pred_check_branch
    %9 = sbr.rel (0) target = $region5
  $region4: #{patchgan_forward.15} parent=0 // pred_region
    _
  $region5: #{patchgan_forward.15} parent=0 // pred_fallthru
    _
  // Predicated region
  $region6: #{patchgan_forward.15} parent=0 // pred_check
    _
  $region7: #{patchgan_forward.15} parent=0 // pred_check_branch
    %11 = sbr.rel (0) target = $region9
  $region8: #{patchgan_forward.15} parent=0 // pred_region
    _
  $region9: #{patchgan_forward.15} parent=0 // pred_fallthru
    _
  // Predicated region
  $region10: #{patchgan_forward.15} parent=0 // pred_check
    _
  $region11: #{patchgan_forward.15} parent=0 // pred_check_branch
    %13 = sbr.rel (0) target = $region13
  $region12: #{patchgan_forward.15} parent=0 // pred_region
    _
  $region13: #{patchgan_forward.15} parent=0 // pred_fallthru
    _
  %p14 = scmp.eq.s32.totalorder 0, 0
  // Predicated region
  $region14: #{patchgan_forward.15} parent=0 // pred_check
    %p15 = pneg %p14
  $region15: #{patchgan_forward.15} parent=0 // pred_check_branch
    %17 = sbr.rel (%p15) target = $region17
  $region16: #{patchgan_forward.15} parent=0 // pred_region
    %18 = vst [vmem:[#allocation2] sm:$0xff] 0.0
    %19 = vst [vmem:[#allocation2 + $0x8] sm:$0xff] 0.0
  $region17: #{patchgan_forward.15} parent=0 // pred_fallthru
    _
  %v20 = vld [vmem:[#allocation2] sm:$0xff]
  %v21 = vld [vmem:[#allocation2 + $0x8] sm:$0xff]
  %v22 = vld [vmem:[%s0] sm:$0xff]
  %v23 = vld [vmem:[%s0 + $0x8] sm:$0xff]
  %v24 = vld [vmem:[%s0 + $0x10] sm:$0xff]
  %v25 = vld [vmem:[%s0 + $0x18] sm:$0xff]
  %v26 = vld [vmem:[%s0 + $0x20] sm:$0xff]
  %v27 = vld [vmem:[%s0 + $0x28] sm:$0xff]
  %v28 = vld [vmem:[%s0 + $0x30] sm:$0xff]
  %v29 = vld [vmem:[%s0 + $0x38] sm:$0xff]
  %v30 = vld [vmem:[%s1] sm:$0xf]
  %v31 = vld [vmem:[%s1 + $0x4] sm:$0xf]
  %v32 = vld [vmem:[%s1 + $0x8] sm:$0xf]
  %v33 = vld [vmem:[%s1 + $0xc] sm:$0xf]
  %v34 = vld [vmem:[%s1 + $0x10] sm:$0xf]
  %v35 = vld [vmem:[%s1 + $0x14] sm:$0xf]
  %v36 = vld [vmem:[%s1 + $0x18] sm:$0xf]
  %v37 = vld [vmem:[%s1 + $0x1c] sm:$0xf]
  %v38 = vld [vmem:[%s1 + $0x20] sm:$0xf]
  %v39 = vld [vmem:[%s1 + $0x24] sm:$0xf]
  %v40 = vld [vmem:[%s1 + $0x28] sm:$0xf]
  %v41 = vld [vmem:[%s1 + $0x2c] sm:$0xf]
  %v42 = vld [vmem:[%s1 + $0x30] sm:$0xf]
  %v43 = vld [vmem:[%s1 + $0x34] sm:$0xf]
  %v44 = vld [vmem:[%s1 + $0x38] sm:$0xf]
  %v45 = vld [vmem:[%s1 + $0x3c] sm:$0xf]
  %v46 = vld [vmem:[%s1 + $0x40] sm:$0xf]
  %v47 = vld [vmem:[%s1 + $0x44] sm:$0xf]
  %v48 = vld [vmem:[%s1 + $0x48] sm:$0xf]
  %v49 = vld [vmem:[%s1 + $0x4c] sm:$0xf]
  %v50 = vld [vmem:[%s1 + $0x50] sm:$0xf]
  %v51 = vld [vmem:[%s1 + $0x54] sm:$0xf]
  %v52 = vld [vmem:[%s1 + $0x58] sm:$0xf]
  %v53 = vld [vmem:[%s1 + $0x5c] sm:$0xf]
  %v54 = vld [vmem:[%s1 + $0x60] sm:$0xf]
  %v55 = vld [vmem:[%s1 + $0x64] sm:$0xf]
  %v56 = vld [vmem:[%s1 + $0x68] sm:$0xf]
  %v57 = vld [vmem:[%s1 + $0x6c] sm:$0xf]
  %v58 = vld [vmem:[%s1 + $0x70] sm:$0xf]
  %v59 = vld [vmem:[%s1 + $0x74] sm:$0xf]
  %v60 = vld [vmem:[%s1 + $0x78] sm:$0xf]
  %v61 = vld [vmem:[%s1 + $0x7c] sm:$0xf]
  %v62 = vld [vmem:[%s1 + $0x80] sm:$0xf]
  %v63 = vld [vmem:[%s1 + $0x84] sm:$0xf]
  %v64 = vld [vmem:[%s1 + $0x88] sm:$0xf]
  %v65 = vld [vmem:[%s1 + $0x8c] sm:$0xf]
  %v66 = vld [vmem:[%s1 + $0x90] sm:$0xf]
  %v67 = vld [vmem:[%s1 + $0x94] sm:$0xf]
  %v68 = vld [vmem:[%s1 + $0x98] sm:$0xf]
  %v69 = vld [vmem:[%s1 + $0x9c] sm:$0xf]
  %v70 = vld [vmem:[%s1 + $0xa0] sm:$0xf]
  %v71 = vld [vmem:[%s1 + $0xa4] sm:$0xf]
  %v72 = vld [vmem:[%s1 + $0xa8] sm:$0xf]
  %v73 = vld [vmem:[%s1 + $0xac] sm:$0xf]
  %v74 = vld [vmem:[%s1 + $0xb0] sm:$0xf]
  %v75 = vld [vmem:[%s1 + $0xb4] sm:$0xf]
  %v76 = vld [vmem:[%s1 + $0xb8] sm:$0xf]
  %v77 = vld [vmem:[%s1 + $0xbc] sm:$0xf]
  %v78 = vld [vmem:[%s1 + $0xc0] sm:$0xf]
  %v79 = vld [vmem:[%s1 + $0xc4] sm:$0xf]
  %v80 = vld [vmem:[%s1 + $0xc8] sm:$0xf]
  %v81 = vld [vmem:[%s1 + $0xcc] sm:$0xf]
  %v82 = vld [vmem:[%s1 + $0xd0] sm:$0xf]
  %v83 = vld [vmem:[%s1 + $0xd4] sm:$0xf]
  %v84 = vld [vmem:[%s1 + $0xd8] sm:$0xf]
  %v85 = vld [vmem:[%s1 + $0xdc] sm:$0xf]
  %v86 = vld [vmem:[%s1 + $0xe0] sm:$0xf]
  %v87 = vld [vmem:[%s1 + $0xe4] sm:$0xf]
  %v88 = vld [vmem:[%s1 + $0xe8] sm:$0xf]
  %v89 = vld [vmem:[%s1 + $0xec] sm:$0xf]
  %v90 = vld [vmem:[%s1 + $0xf0] sm:$0xf]
  %v91 = vld [vmem:[%s1 + $0xf4] sm:$0xf]
  %v92 = vld [vmem:[%s1 + $0xf8] sm:$0xf]
  %v93 = vld [vmem:[%s1 + $0xfc] sm:$0xf]
  %v94 = vld [vmem:[%s1 + $0x100] sm:$0xf]
  %v95 = vld [vmem:[%s1 + $0x104] sm:$0xf]
  %v96 = vld [vmem:[%s1 + $0x108] sm:$0xf]
  %v97 = vld [vmem:[%s1 + $0x10c] sm:$0xf]
  %v98 = vld [vmem:[%s1 + $0x110] sm:$0xf]
  %v99 = vld [vmem:[%s1 + $0x114] sm:$0xf]
  %v100 = vld [vmem:[%s1 + $0x118] sm:$0xf]
  %v101 = vld [vmem:[%s1 + $0x11c] sm:$0xf]
  %v102 = vld [vmem:[%s1 + $0x120] sm:$0xf]
  %v103 = vld [vmem:[%s1 + $0x124] sm:$0xf]
  %v104 = vld [vmem:[%s1 + $0x128] sm:$0xf]
  %v105 = vld [vmem:[%s1 + $0x12c] sm:$0xf]
  %v106 = vld [vmem:[%s1 + $0x130] sm:$0xf]
  %v107 = vld [vmem:[%s1 + $0x134] sm:$0xf]
  %v108 = vld [vmem:[%s1 + $0x138] sm:$0xf]
  %v109 = vld [vmem:[%s1 + $0x13c] sm:$0xf]
  %v110 = vld [vmem:[%s1 + $0x140] sm:$0xf]
  %v111 = vld [vmem:[%s1 + $0x144] sm:$0xf]
  %v112 = vld [vmem:[%s1 + $0x148] sm:$0xf]
  %v113 = vld [vmem:[%s1 + $0x14c] sm:$0xf]
  %v114 = vld [vmem:[%s1 + $0x150] sm:$0xf]
  %v115 = vld [vmem:[%s1 + $0x154] sm:$0xf]
  %v116 = vld [vmem:[%s1 + $0x158] sm:$0xf]
  %v117 = vld [vmem:[%s1 + $0x15c] sm:$0xf]
  %v118 = vld [vmem:[%s1 + $0x160] sm:$0xf]
  %v119 = vld [vmem:[%s1 + $0x164] sm:$0xf]
  %v120 = vld [vmem:[%s1 + $0x168] sm:$0xf]
  %v121 = vld [vmem:[%s1 + $0x16c] sm:$0xf]
  %v122 = vld [vmem:[%s1 + $0x170] sm:$0xf]
  %v123 = vld [vmem:[%s1 + $0x174] sm:$0xf]
  %v124 = vld [vmem:[%s1 + $0x178] sm:$0xf]
  %v125 = vld [vmem:[%s1 + $0x17c] sm:$0xf]
  %v126 = vld [vmem:[%s1 + $0x180] sm:$0xf]
  %v127 = vld [vmem:[%s1 + $0x184] sm:$0xf]
  %v128 = vld [vmem:[%s1 + $0x188] sm:$0xf]
  %v129 = vld [vmem:[%s1 + $0x18c] sm:$0xf]
  %v130 = vld [vmem:[%s1 + $0x190] sm:$0xf]
  %v131 = vld [vmem:[%s1 + $0x194] sm:$0xf]
  %v132 = vld [vmem:[%s1 + $0x198] sm:$0xf]
  %v133 = vld [vmem:[%s1 + $0x19c] sm:$0xf]
  %v134 = vld [vmem:[%s1 + $0x1a0] sm:$0xf]
  %v135 = vld [vmem:[%s1 + $0x1a4] sm:$0xf]
  %v136 = vld [vmem:[%s1 + $0x1a8] sm:$0xf]
  %v137 = vld [vmem:[%s1 + $0x1ac] sm:$0xf]
  %v138 = vld [vmem:[%s1 + $0x1b0] sm:$0xf]
  %v139 = vld [vmem:[%s1 + $0x1b4] sm:$0xf]
  %v140 = vld [vmem:[%s1 + $0x1b8] sm:$0xf]
  %v141 = vld [vmem:[%s1 + $0x1bc] sm:$0xf]
  %v142 = vld [vmem:[%s1 + $0x1c0] sm:$0xf]
  %v143 = vld [vmem:[%s1 + $0x1c4] sm:$0xf]
  %v144 = vld [vmem:[%s1 + $0x1c8] sm:$0xf]
  %v145 = vld [vmem:[%s1 + $0x1cc] sm:$0xf]
  %v146 = vld [vmem:[%s1 + $0x1d0] sm:$0xf]
  %v147 = vld [vmem:[%s1 + $0x1d4] sm:$0xf]
  %v148 = vld [vmem:[%s1 + $0x1d8] sm:$0xf]
  %v149 = vld [vmem:[%s1 + $0x1dc] sm:$0xf]
  %v150 = vld [vmem:[%s1 + $0x1e0] sm:$0xf]
  %v151 = vld [vmem:[%s1 + $0x1e4] sm:$0xf]
  %v152 = vld [vmem:[%s1 + $0x1e8] sm:$0xf]
  %v153 = vld [vmem:[%s1 + $0x1ec] sm:$0xf]
  %v154 = vld [vmem:[%s1 + $0x1f0] sm:$0xf]
  %v155 = vld [vmem:[%s1 + $0x1f4] sm:$0xf]
  %v156 = vld [vmem:[%s1 + $0x1f8] sm:$0xf]
  %v157 = vld [vmem:[%s1 + $0x1fc] sm:$0xf]
  %v166 = vunpack.c.l.b16 %v22
  %v167 = vunpack.c.h.b16 %v22
  %v168 = vunpack.c.l.b16 %v23
  %v169 = vunpack.c.h.b16 %v23
  %v170 = vunpack.c.l.b16 %v24
  %v171 = vunpack.c.h.b16 %v24
  %v172 = vunpack.c.l.b16 %v25
  %v173 = vunpack.c.h.b16 %v25
  %v174 = vunpack.c.l.b16 %v26
  %v175 = vunpack.c.h.b16 %v26
  %v176 = vunpack.c.l.b16 %v27
  %v177 = vunpack.c.h.b16 %v27
  %v178 = vunpack.c.l.b16 %v28
  %v179 = vunpack.c.h.b16 %v28
  %v180 = vunpack.c.l.b16 %v29
  %v181 = vunpack.c.h.b16 %v29
  %v182 = vpack.c.b16 %v174, %v166
  %v183 = vpack.c.b16 %v175, %v167
  %v184 = vpack.c.b16 %v176, %v168
  %v185 = vpack.c.b16 %v177, %v169
  %v186 = vpack.c.b16 %v178, %v170
  %v187 = vpack.c.b16 %v179, %v171
  %v188 = vpack.c.b16 %v180, %v172
  %v189 = vpack.c.b16 %v181, %v173
  %v326 = vunpack.c.l.b16 %v30
  %v327 = vunpack.c.l.b16 %v31
  %v328 = vunpack.c.l.b16 %v32
  %v329 = vunpack.c.l.b16 %v33
  %v330 = vunpack.c.l.b16 %v34
  %v331 = vunpack.c.l.b16 %v35
  %v332 = vunpack.c.l.b16 %v36
  %v333 = vunpack.c.l.b16 %v37
  %v334 = vunpack.c.l.b16 %v38
  %v335 = vunpack.c.l.b16 %v39
  %v336 = vunpack.c.l.b16 %v40
  %v337 = vunpack.c.l.b16 %v41
  %v338 = vunpack.c.l.b16 %v42
  %v339 = vunpack.c.l.b16 %v43
  %v340 = vunpack.c.l.b16 %v44
  %v341 = vunpack.c.l.b16 %v45
  %v342 = vunpack.c.l.b16 %v46
  %v343 = vunpack.c.l.b16 %v47
  %v344 = vunpack.c.l.b16 %v48
  %v345 = vunpack.c.l.b16 %v49
  %v346 = vunpack.c.l.b16 %v50
  %v347 = vunpack.c.l.b16 %v51
  %v348 = vunpack.c.l.b16 %v52
  %v349 = vunpack.c.l.b16 %v53
  %v350 = vunpack.c.l.b16 %v54
  %v351 = vunpack.c.l.b16 %v55
  %v352 = vunpack.c.l.b16 %v56
  %v353 = vunpack.c.l.b16 %v57
  %v354 = vunpack.c.l.b16 %v58
  %v355 = vunpack.c.l.b16 %v59
  %v356 = vunpack.c.l.b16 %v60
  %v357 = vunpack.c.l.b16 %v61
  %v358 = vunpack.c.l.b16 %v62
  %v359 = vunpack.c.l.b16 %v63
  %v360 = vunpack.c.l.b16 %v64
  %v361 = vunpack.c.l.b16 %v65
  %v362 = vunpack.c.l.b16 %v66
  %v363 = vunpack.c.l.b16 %v67
  %v364 = vunpack.c.l.b16 %v68
  %v365 = vunpack.c.l.b16 %v69
  %v366 = vunpack.c.l.b16 %v70
  %v367 = vunpack.c.l.b16 %v71
  %v368 = vunpack.c.l.b16 %v72
  %v369 = vunpack.c.l.b16 %v73
  %v370 = vunpack.c.l.b16 %v74
  %v371 = vunpack.c.l.b16 %v75
  %v372 = vunpack.c.l.b16 %v76
  %v373 = vunpack.c.l.b16 %v77
  %v374 = vunpack.c.l.b16 %v78
  %v375 = vunpack.c.l.b16 %v79
  %v376 = vunpack.c.l.b16 %v80
  %v377 = vunpack.c.l.b16 %v81
  %v378 = vunpack.c.l.b16 %v82
  %v379 = vunpack.c.l.b16 %v83
  %v380 = vunpack.c.l.b16 %v84
  %v381 = vunpack.c.l.b16 %v85
  %v382 = vunpack.c.l.b16 %v86
  %v383 = vunpack.c.l.b16 %v87
  %v384 = vunpack.c.l.b16 %v88
  %v385 = vunpack.c.l.b16 %v89
  %v386 = vunpack.c.l.b16 %v90
  %v387 = vunpack.c.l.b16 %v91
  %v388 = vunpack.c.l.b16 %v92
  %v389 = vunpack.c.l.b16 %v93
  %v390 = vunpack.c.l.b16 %v94
  %v391 = vunpack.c.l.b16 %v95
  %v392 = vunpack.c.l.b16 %v96
  %v393 = vunpack.c.l.b16 %v97
  %v394 = vunpack.c.l.b16 %v98
  %v395 = vunpack.c.l.b16 %v99
  %v396 = vunpack.c.l.b16 %v100
  %v397 = vunpack.c.l.b16 %v101
  %v398 = vunpack.c.l.b16 %v102
  %v399 = vunpack.c.l.b16 %v103
  %v400 = vunpack.c.l.b16 %v104
  %v401 = vunpack.c.l.b16 %v105
  %v402 = vunpack.c.l.b16 %v106
  %v403 = vunpack.c.l.b16 %v107
  %v404 = vunpack.c.l.b16 %v108
  %v405 = vunpack.c.l.b16 %v109
  %v406 = vunpack.c.l.b16 %v110
  %v407 = vunpack.c.l.b16 %v111
  %v408 = vunpack.c.l.b16 %v112
  %v409 = vunpack.c.l.b16 %v113
  %v410 = vunpack.c.l.b16 %v114
  %v411 = vunpack.c.l.b16 %v115
  %v412 = vunpack.c.l.b16 %v116
  %v413 = vunpack.c.l.b16 %v117
  %v414 = vunpack.c.l.b16 %v118
  %v415 = vunpack.c.l.b16 %v119
  %v416 = vunpack.c.l.b16 %v120
  %v417 = vunpack.c.l.b16 %v121
  %v418 = vunpack.c.l.b16 %v122
  %v419 = vunpack.c.l.b16 %v123
  %v420 = vunpack.c.l.b16 %v124
  %v421 = vunpack.c.l.b16 %v125
  %v422 = vunpack.c.l.b16 %v126
  %v423 = vunpack.c.l.b16 %v127
  %v424 = vunpack.c.l.b16 %v128
  %v425 = vunpack.c.l.b16 %v129
  %v426 = vunpack.c.l.b16 %v130
  %v427 = vunpack.c.l.b16 %v131
  %v428 = vunpack.c.l.b16 %v132
  %v429 = vunpack.c.l.b16 %v133
  %v430 = vunpack.c.l.b16 %v134
  %v431 = vunpack.c.l.b16 %v135
  %v432 = vunpack.c.l.b16 %v136
  %v433 = vunpack.c.l.b16 %v137
  %v434 = vunpack.c.l.b16 %v138
  %v435 = vunpack.c.l.b16 %v139
  %v436 = vunpack.c.l.b16 %v140
  %v437 = vunpack.c.l.b16 %v141
  %v438 = vunpack.c.l.b16 %v142
  %v439 = vunpack.c.l.b16 %v143
  %v440 = vunpack.c.l.b16 %v144
  %v441 = vunpack.c.l.b16 %v145
  %v442 = vunpack.c.l.b16 %v146
  %v443 = vunpack.c.l.b16 %v147
  %v444 = vunpack.c.l.b16 %v148
  %v445 = vunpack.c.l.b16 %v149
  %v446 = vunpack.c.l.b16 %v150
  %v447 = vunpack.c.l.b16 %v151
  %v448 = vunpack.c.l.b16 %v152
  %v449 = vunpack.c.l.b16 %v153
  %v450 = vunpack.c.l.b16 %v154
  %v451 = vunpack.c.l.b16 %v155
  %v452 = vunpack.c.l.b16 %v156
  %v453 = vunpack.c.l.b16 %v157
  %v454 = vpack.c.b16 %v327, %v326
  %v455 = vpack.c.b16 %v329, %v328
  %v456 = vpack.c.b16 %v331, %v330
  %v457 = vpack.c.b16 %v333, %v332
  %v458 = vpack.c.b16 %v335, %v334
  %v459 = vpack.c.b16 %v337, %v336
  %v460 = vpack.c.b16 %v339, %v338
  %v461 = vpack.c.b16 %v341, %v340
  %v462 = vpack.c.b16 %v343, %v342
  %v463 = vpack.c.b16 %v345, %v344
  %v464 = vpack.c.b16 %v347, %v346
  %v465 = vpack.c.b16 %v349, %v348
  %v466 = vpack.c.b16 %v351, %v350
  %v467 = vpack.c.b16 %v353, %v352
  %v468 = vpack.c.b16 %v355, %v354
  %v469 = vpack.c.b16 %v357, %v356
  %v470 = vpack.c.b16 %v359, %v358
  %v471 = vpack.c.b16 %v361, %v360
  %v472 = vpack.c.b16 %v363, %v362
  %v473 = vpack.c.b16 %v365, %v364
  %v474 = vpack.c.b16 %v367, %v366
  %v475 = vpack.c.b16 %v369, %v368
  %v476 = vpack.c.b16 %v371, %v370
  %v477 = vpack.c.b16 %v373, %v372
  %v478 = vpack.c.b16 %v375, %v374
  %v479 = vpack.c.b16 %v377, %v376
  %v480 = vpack.c.b16 %v379, %v378
  %v481 = vpack.c.b16 %v381, %v380
  %v482 = vpack.c.b16 %v383, %v382
  %v483 = vpack.c.b16 %v385, %v384
  %v484 = vpack.c.b16 %v387, %v386
  %v485 = vpack.c.b16 %v389, %v388
  %v486 = vpack.c.b16 %v391, %v390
  %v487 = vpack.c.b16 %v393, %v392
  %v488 = vpack.c.b16 %v395, %v394
  %v489 = vpack.c.b16 %v397, %v396
  %v490 = vpack.c.b16 %v399, %v398
  %v491 = vpack.c.b16 %v401, %v400
  %v492 = vpack.c.b16 %v403, %v402
  %v493 = vpack.c.b16 %v405, %v404
  %v494 = vpack.c.b16 %v407, %v406
  %v495 = vpack.c.b16 %v409, %v408
  %v496 = vpack.c.b16 %v411, %v410
  %v497 = vpack.c.b16 %v413, %v412
  %v498 = vpack.c.b16 %v415, %v414
  %v499 = vpack.c.b16 %v417, %v416
  %v500 = vpack.c.b16 %v419, %v418
  %v501 = vpack.c.b16 %v421, %v420
  %v502 = vpack.c.b16 %v423, %v422
  %v503 = vpack.c.b16 %v425, %v424
  %v504 = vpack.c.b16 %v427, %v426
  %v505 = vpack.c.b16 %v429, %v428
  %v506 = vpack.c.b16 %v431, %v430
  %v507 = vpack.c.b16 %v433, %v432
  %v508 = vpack.c.b16 %v435, %v434
  %v509 = vpack.c.b16 %v437, %v436
  %v510 = vpack.c.b16 %v439, %v438
  %v511 = vpack.c.b16 %v441, %v440
  %v512 = vpack.c.b16 %v443, %v442
  %v513 = vpack.c.b16 %v445, %v444
  %v514 = vpack.c.b16 %v447, %v446
  %v515 = vpack.c.b16 %v449, %v448
  %v516 = vpack.c.b16 %v451, %v450
  %v517 = vpack.c.b16 %v453, %v452
  %582 = vmatpush.bf16.msra.mxu0 %v461
  %583 = vmatpush.bf16.msra.mxu0 %v460
  %584 = vmatpush.bf16.msra.mxu0 %v459
  %585 = vmatpush.bf16.msra.mxu0 %v458
  %586 = vmatpush.bf16.msra.mxu0 %v457
  %587 = vmatpush.bf16.msra.mxu0 %v456
  %588 = vmatpush.bf16.msra.mxu0 %v455
  %589 = vmatpush.bf16.msra.mxu0 %v454
  %590 = vmatmul.bf16.gmra.mxu0 %v182
  %v591 = vpop.f32.mrf.mxu0
  %v592 = vadd.f32 0.0, %v591
  %v593 = vpop.f32.mrf.mxu0
  %v594 = vadd.f32 0.0, %v593
  %595 = vdwg.mxu0
  %596 = vmatpush.bf16.msra.mxu0 %v469
  %597 = vmatpush.bf16.msra.mxu0 %v468
  %598 = vmatpush.bf16.msra.mxu0 %v467
  %599 = vmatpush.bf16.msra.mxu0 %v466
  %600 = vmatpush.bf16.msra.mxu0 %v465
  %601 = vmatpush.bf16.msra.mxu0 %v464
  %602 = vmatpush.bf16.msra.mxu0 %v463
  %603 = vmatpush.bf16.msra.mxu0 %v462
  %604 = vmatmul.bf16.gmra.mxu0 %v183
  %v605 = vpop.f32.mrf.mxu0
  %v606 = vadd.f32 %v592, %v605
  %v607 = vpop.f32.mrf.mxu0
  %v608 = vadd.f32 %v594, %v607
  %609 = vdwg.mxu0
  %610 = vmatpush.bf16.msra.mxu0 %v477
  %611 = vmatpush.bf16.msra.mxu0 %v476
  %612 = vmatpush.bf16.msra.mxu0 %v475
  %613 = vmatpush.bf16.msra.mxu0 %v474
  %614 = vmatpush.bf16.msra.mxu0 %v473
  %615 = vmatpush.bf16.msra.mxu0 %v472
  %616 = vmatpush.bf16.msra.mxu0 %v471
  %617 = vmatpush.bf16.msra.mxu0 %v470
  %618 = vmatmul.bf16.gmra.mxu0 %v184
  %v619 = vpop.f32.mrf.mxu0
  %v620 = vadd.f32 %v606, %v619
  %v621 = vpop.f32.mrf.mxu0
  %v622 = vadd.f32 %v608, %v621
  %623 = vdwg.mxu0
  %624 = vmatpush.bf16.msra.mxu0 %v485
  %625 = vmatpush.bf16.msra.mxu0 %v484
  %626 = vmatpush.bf16.msra.mxu0 %v483
  %627 = vmatpush.bf16.msra.mxu0 %v482
  %628 = vmatpush.bf16.msra.mxu0 %v481
  %629 = vmatpush.bf16.msra.mxu0 %v480
  %630 = vmatpush.bf16.msra.mxu0 %v479
  %631 = vmatpush.bf16.msra.mxu0 %v478
  %632 = vmatmul.bf16.gmra.mxu0 %v185
  %v633 = vpop.f32.mrf.mxu0
  %v634 = vadd.f32 %v620, %v633
  %v635 = vpop.f32.mrf.mxu0
  %v636 = vadd.f32 %v622, %v635
  %637 = vdwg.mxu0
  %638 = vmatpush.bf16.msra.mxu0 %v493
  %639 = vmatpush.bf16.msra.mxu0 %v492
  %640 = vmatpush.bf16.msra.mxu0 %v491
  %641 = vmatpush.bf16.msra.mxu0 %v490
  %642 = vmatpush.bf16.msra.mxu0 %v489
  %643 = vmatpush.bf16.msra.mxu0 %v488
  %644 = vmatpush.bf16.msra.mxu0 %v487
  %645 = vmatpush.bf16.msra.mxu0 %v486
  %646 = vmatmul.bf16.gmra.mxu0 %v186
  %v647 = vpop.f32.mrf.mxu0
  %v648 = vadd.f32 %v634, %v647
  %v649 = vpop.f32.mrf.mxu0
  %v650 = vadd.f32 %v636, %v649
  %651 = vdwg.mxu0
  %652 = vmatpush.bf16.msra.mxu0 %v501
  %653 = vmatpush.bf16.msra.mxu0 %v500
  %654 = vmatpush.bf16.msra.mxu0 %v499
  %655 = vmatpush.bf16.msra.mxu0 %v498
  %656 = vmatpush.bf16.msra.mxu0 %v497
  %657 = vmatpush.bf16.msra.mxu0 %v496
  %658 = vmatpush.bf16.msra.mxu0 %v495
  %659 = vmatpush.bf16.msra.mxu0 %v494
  %660 = vmatmul.bf16.gmra.mxu0 %v187
  %v661 = vpop.f32.mrf.mxu0
  %v662 = vadd.f32 %v648, %v661
  %v663 = vpop.f32.mrf.mxu0
  %v664 = vadd.f32 %v650, %v663
  %665 = vdwg.mxu0
  %666 = vmatpush.bf16.msra.mxu0 %v509
  %667 = vmatpush.bf16.msra.mxu0 %v508
  %668 = vmatpush.bf16.msra.mxu0 %v507
  %669 = vmatpush.bf16.msra.mxu0 %v506
  %670 = vmatpush.bf16.msra.mxu0 %v505
  %671 = vmatpush.bf16.msra.mxu0 %v504
  %672 = vmatpush.bf16.msra.mxu0 %v503
  %673 = vmatpush.bf16.msra.mxu0 %v502
  %674 = vmatmul.bf16.gmra.mxu0 %v188
  %v675 = vpop.f32.mrf.mxu0
  %v676 = vadd.f32 %v662, %v675
  %v677 = vpop.f32.mrf.mxu0
  %v678 = vadd.f32 %v664, %v677
  %679 = vdwg.mxu0
  %680 = vmatpush.bf16.msra.mxu0 %v517
  %681 = vmatpush.bf16.msra.mxu0 %v516
  %682 = vmatpush.bf16.msra.mxu0 %v515
  %683 = vmatpush.bf16.msra.mxu0 %v514
  %684 = vmatpush.bf16.msra.mxu0 %v513
  %685 = vmatpush.bf16.msra.mxu0 %v512
  %686 = vmatpush.bf16.msra.mxu0 %v511
  %687 = vmatpush.bf16.msra.mxu0 %v510
  %688 = vmatmul.bf16.gmra.mxu0 %v189
  %v689 = vpop.f32.mrf.mxu0
  %v690 = vadd.f32 %v676, %v689
  %v691 = vpop.f32.mrf.mxu0
  %v692 = vadd.f32 %v678, %v691
  %693 = vdwg.mxu0
  %v694 = vadd.f32 %v20, %v690
  %v695 = vadd.f32 %v21, %v692
  %696 = vst [vmem:[#allocation2] sm:$0xff] %v694
  %697 = vst [vmem:[#allocation2 + $0x8] sm:$0xff] %v695
  // Predicated region
  $region18: #{patchgan_forward.15} parent=0 // pred_check
    %p698 = pneg %p14
  $region19: #{patchgan_forward.15} parent=0 // pred_check_branch
    %700 = sbr.rel (%p698) target = $region21
  $region20: #{patchgan_forward.15} parent=0 // pred_region
    %v701 = vld [vmem:[#allocation2] sm:$0xff]
    %v702 = vld [vmem:[#allocation2 + $0x8] sm:$0xff]
    %v703 = vld [vmem:[%s2] sm:$0x1]
    %v705 = vperm.slane %v703, 0
    %v707 = vadd.f32 %v701, %v705
    %v708 = vadd.f32 %v702, %v705
    %709 = vst [vmem:[%s3] sm:$0xff] %v707
    %710 = vst [vmem:[%s3 + $0x8] sm:$0xff] %v708
  $region21: #{patchgan_forward.15} parent=0 // pred_fallthru
    _
  // Predicated region
  $region22: #{patchgan_forward.15} parent=0 // pred_check
    _
  $region23: #{patchgan_forward.15} parent=0 // pred_check_branch
    %712 = sbr.rel (0) target = $region25
  $region24: #{patchgan_forward.15} parent=0 // pred_region
    _
  $region25: #{patchgan_forward.15} parent=0 // pred_fallthru
    _
  // Predicated region
  $region26: #{patchgan_forward.15} parent=0 // pred_check
    _
  $region27: #{patchgan_forward.15} parent=0 // pred_check_branch
    %714 = sbr.rel (0) target = $region29
  $region28: #{patchgan_forward.15} parent=0 // pred_region
    _
  $region29: #{patchgan_forward.15} parent=0 // pred_fallthru
    _

</llo_original>
